<compile_context>
chip_gen: v7x
topology: tpu7x:2x2x1
jax: 0.10.0
libtpu: 0.0.40
codegen_flags: <defaults>
</compile_context>

<pallas_src>
import functools
import math

import jax
import jax.numpy as jnp
from jax import lax
from jax.experimental import pallas as pl
from jax.experimental.pallas import tpu as pltpu


# ----------------------------------------------------------------------------
# Fused kernel: one batch element per grid step.
# ----------------------------------------------------------------------------
def _cfsr_kernel(mask_ref, xp_ref, w_in_ref, w_res_ref, w_out_ref, out_ref,
                 act_a, act_b, *, num_layers, H, W, C):
    # mask_ref : (2, H*W) int32      column-wrap masks (row 0: kx=0, row 1: kx=2)
    # xp_ref   : (1, 9, H*W) f32     input im2col (centre row 4 == x itself)
    # w_in_ref : (C, 9) f32          input conv 1->C
    # w_res_ref: (L*9, C, C) bf16    residual convs, tap-major, [o, i] per tap
    # w_out_ref: (9, C) bf16         output conv C->1, tap-major
    # out_ref  : (1, 1, H*W) f32     lane-dense output
    # act_a/b  : (C, H*W + 2*(W+1)) bf16  ping-pong activation slabs with
    #                                     zero guard bands providing "same" pad
    HW = H * W
    PAD = W + 1
    taps = [(t, PAD + (t // 3 - 1) * W + (t % 3 - 1)) for t in range(9)]

    # Hoist + pre-broadcast the column masks once (JAX does not CSE
    # broadcast_in_dim inside the layer loop).
    mask_l = jnp.broadcast_to(mask_ref[0:1, :] != 0, (C, HW))   # kx == 0 taps
    mask_r = jnp.broadcast_to(mask_ref[1:2, :] != 0, (C, HW))   # kx == 2 taps

    # Guard bands are never written by the layers; zero them every step
    # (4 tiny stores) so the kernel stays correct even if a TensorCore starts
    # mid-grid (megacore split of the "parallel" batch axis).
    zpad = jnp.zeros((C, PAD), act_a.dtype)
    for buf in (act_a, act_b):
        buf[:, 0:PAD] = zpad
        buf[:, PAD + HW:PAD + HW + PAD] = zpad

    def masked_tap(src, t, off):
        tap = src[:, off:off + HW]                      # (C, HW) bf16
        kx = t % 3
        if kx == 0:
            return jnp.where(mask_l, tap, jnp.zeros_like(tap))
        if kx == 2:
            return jnp.where(mask_r, tap, jnp.zeros_like(tap))
        return tap

    # ---- input conv (Cin = 1) + ReLU: one (C,9)x(9,HW) f32 matmul.
    z0 = jnp.dot(w_in_ref[...], xp_ref[0],
                 preferred_element_type=jnp.float32)    # (C, HW)
    act_a[:, PAD:PAD + HW] = jnp.maximum(z0, 0.0).astype(act_a.dtype)

    # ---- one Conv_ReLU_Block: 9 accumulating (C,C)x(C,HW) bf16 MXU matmuls.
    def conv_relu_block(src, dst, layer_idx):
        acc = jnp.zeros((C, HW), jnp.float32)
        for t, off in taps:
            w_t = w_res_ref[layer_idx * 9 + t]          # (C, C) bf16, dyn idx
            acc = acc + jnp.dot(w_t, masked_tap(src, t, off),
                                preferred_element_type=jnp.float32)
        dst[:, PAD:PAD + HW] = jnp.maximum(acc, 0.0).astype(dst.dtype)

    # ---- 18 residual layers: fori over 9 iterations, 2 layers (a->b->a) each.
    def pair(i, carry):
        conv_relu_block(act_a, act_b, 2 * i)
        conv_relu_block(act_b, act_a, 2 * i + 1)
        return carry

    lax.fori_loop(0, num_layers // 2, pair, 0)

    # ---- output conv (C -> 1) + fused residual add; lane-dense (1,HW) store.
    acc = jnp.zeros((1, HW), jnp.float32)
    for t, off in taps:
        acc = acc + jnp.dot(w_out_ref[t:t + 1, :], masked_tap(act_a, t, off),
                            preferred_element_type=jnp.float32)
    out_ref[0] = acc + xp_ref[0, 4:5, :]        # centre row of input patch == x


# ----------------------------------------------------------------------------
# Wrapper: layout prep (pure data staging) + one pallas_call for the network.
# ----------------------------------------------------------------------------
def _build_input_patch(x_nchw):
    """9-row im2col of the 1-channel input; row t = ky*3+kx, row 4 == x."""
    B, _, H, W = x_nchw.shape
    xpad = jnp.pad(x_nchw.astype(jnp.float32), ((0, 0), (0, 0), (1, 1), (1, 1)))
    rows = [xpad[:, 0, ky:ky + H, kx:kx + W].reshape(B, H * W)
            for ky in range(3) for kx in range(3)]
    return jnp.stack(rows, axis=1)                                  # (B, 9, HW)


@jax.jit
def cfsr_forward(params, x_nchw):
    B, Cin, H, W = x_nchw.shape
    assert Cin == 1
    HW = H * W
    L, C = params["w_res"].shape[:2]
    assert L % 2 == 0

    # Kernel weight layouts: tap index folded into the leading dim, bf16 for
    # native-rate MXU (f32 accumulation happens inside the kernel).
    w_in = params["w_in"].reshape(C, 9).astype(jnp.float32)          # (C, 9)
    w_res = jnp.transpose(params["w_res"], (0, 3, 4, 1, 2))          # (L,3,3,O,I)
    w_res = w_res.reshape(L * 9, C, C).astype(jnp.bfloat16)          # (L*9, C, C)
    w_out = jnp.transpose(params["w_out"], (2, 3, 1, 0)).reshape(9, C)
    w_out = w_out.astype(jnp.bfloat16)                               # (9, C)

    x_patch = _build_input_patch(x_nchw)                             # (B, 9, HW)
    cols = jnp.arange(HW, dtype=jnp.int32) % W
    mask = jnp.stack([cols != 0, cols != W - 1]).astype(jnp.int32)   # (2, HW)

    nbuf = HW + 2 * (W + 1)
    kernel = functools.partial(_cfsr_kernel, num_layers=L, H=H, W=W, C=C)
    out = pl.pallas_call(
        kernel,
        out_shape=jax.ShapeDtypeStruct((B, 1, HW), jnp.float32),
        grid_spec=pltpu.PrefetchScalarGridSpec(
            num_scalar_prefetch=0,
            grid=(B,),
            in_specs=[
                pl.BlockSpec((2, HW), lambda b: (0, 0)),             # col masks
                pl.BlockSpec((1, 9, HW), lambda b: (b, 0, 0)),       # input patch
                pl.BlockSpec((C, 9), lambda b: (0, 0)),              # w_in
                pl.BlockSpec((L * 9, C, C), lambda b: (0, 0, 0)),    # w_res (resident)
                pl.BlockSpec((9, C), lambda b: (0, 0)),              # w_out
            ],
            out_specs=pl.BlockSpec((1, 1, HW), lambda b: (b, 0, 0)),
            scratch_shapes=[
                pltpu.VMEM((C, nbuf), jnp.bfloat16),                 # act ping
                pltpu.VMEM((C, nbuf), jnp.bfloat16),                 # act pong
            ],
        ),
        compiler_params=pltpu.CompilerParams(
            dimension_semantics=("parallel",),
        ),
    )(mask, x_patch, w_in, w_res, w_out)

    return out.reshape(B, 1, H, W).astype(x_nchw.dtype)


# ----------------------------------------------------------------------------
# Parameters (PyTorch init: normal(0, sqrt(2 / (kH*kW*out_channels))), no bias)
# kept in PyTorch (O, I, kH, kW) layout; kernel layouts are derived in-wrapper.
# ----------------------------------------------------------------------------
def make_conv_weight(key, cin, cout):
    std = math.sqrt(2.0 / (3 * 3 * cout))
    return std * jax.random.normal(key, (cout, cin, 3, 3), dtype=jnp.float32)


def init_cfsr_params(key, num_layers=18, hidden=64):
    keys = jax.random.split(key, num_layers + 2)
    return {
        "w_in": make_conv_weight(keys[0], 1, hidden),
        "w_res": jnp.stack([make_conv_weight(keys[1 + i], hidden, hidden)
                            for i in range(num_layers)]),
        "w_out": make_conv_weight(keys[-1], hidden, 1),
    }


def cfsr_reference(params, x):
    """Pure-JAX f32 reference (lax.conv), PyTorch-identical semantics."""
    dn = ("NCHW", "OIHW", "NCHW")
    conv = lambda v, w: lax.conv_general_dilated(
        v, w, (1, 1), ((1, 1), (1, 1)), dimension_numbers=dn)
    out = jax.nn.relu(conv(x, params["w_in"]))
    for l in range(params["w_res"].shape[0]):
        out = jax.nn.relu(conv(out, params["w_res"][l]))
    return conv(out, params["w_out"]) + x


if __name__ == "__main__":
    key = jax.random.PRNGKey(0)
    k_param, k_input = jax.random.split(key)

    # Module-consistent small shapes: batch=2, 1 input channel, 16x16 spatial.
    x = jax.random.normal(k_input, (2, 1, 16, 16), dtype=jnp.float32)
    params = init_cfsr_params(k_param, num_layers=18, hidden=64)

    y = cfsr_forward(params, x)
    jax.block_until_ready(y)
    assert y.shape == x.shape and y.dtype == x.dtype

    # Loose check vs an f32 XLA reference (kernel uses bf16 weights/activations
    # with f32 accumulation; expected max-abs error ~1e-2 at this scale).
    ref = cfsr_reference(params, x)
    err = float(jnp.max(jnp.abs(y - ref)))
    assert err < 1e-1, f"kernel vs reference max abs err {err}"
    print("KERNEL_OK")
</pallas_src>

<mosaic_0001>
module attributes {stable_mosaic.version = 11 : i64} {
  func.func @_cfsr_kernel(%arg0: i32, %arg1: memref<2x256xi32, #tpu.memory_space<vmem>>, %arg2: memref<1x9x256xf32, #tpu.memory_space<vmem>>, %arg3: memref<64x9xf32, #tpu.memory_space<vmem>>, %arg4: memref<162x64x64xbf16, #tpu.memory_space<vmem>>, %arg5: memref<9x64xbf16, #tpu.memory_space<vmem>>, %arg6: memref<1x1x256xf32, #tpu.memory_space<vmem>>, %arg7: memref<64x290xbf16, #tpu.memory_space<vmem>>, %arg8: memref<64x290xbf16, #tpu.memory_space<vmem>>) attributes {dimension_semantics = [#tpu.dimension_semantics<parallel>], iteration_bounds = array<i64: 2>, scalar_prefetch = 0 : i64, scratch_operands = 2 : i64, tpu.core_type = #tpu.core_type<tc>, window_params = [{pipeline_mode = #tpu.pipeline_mode<synchronous>, transform_indices = @transform_0, window_bounds = array<i64: 2, 256>}, {transform_indices = @transform_1, window_bounds = array<i64: 1, 9, 256>}, {pipeline_mode = #tpu.pipeline_mode<synchronous>, transform_indices = @transform_2, window_bounds = array<i64: 64, 9>}, {pipeline_mode = #tpu.pipeline_mode<synchronous>, transform_indices = @transform_3, window_bounds = array<i64: 162, 64, 64>}, {pipeline_mode = #tpu.pipeline_mode<synchronous>, transform_indices = @transform_4, window_bounds = array<i64: 9, 64>}, {transform_indices = @transform_5, window_bounds = array<i64: 1, 1, 256>}]} {
    %c0 = arith.constant 0 : index
    %c0_0 = arith.constant 0 : index
    %0 = vector.load %arg1[%c0, %c0_0] : memref<2x256xi32, #tpu.memory_space<vmem>>, vector<1x256xi32>
    %c0_i32 = arith.constant 0 : i32
    %1 = vector.broadcast %c0_i32 : i32 to vector<1x256xi32>
    %2 = arith.cmpi ne, %0, %1 : vector<1x256xi32>
    %3 = vector.shape_cast %2 : vector<1x256xi1> to vector<1x256xi1>
    %4 = vector.broadcast %3 : vector<1x256xi1> to vector<64x256xi1>
    %c1 = arith.constant 1 : index
    %c0_1 = arith.constant 0 : index
    %5 = vector.load %arg1[%c1, %c0_1] : memref<2x256xi32, #tpu.memory_space<vmem>>, vector<1x256xi32>
    %c0_i32_2 = arith.constant 0 : i32
    %6 = vector.broadcast %c0_i32_2 : i32 to vector<1x256xi32>
    %7 = arith.cmpi ne, %5, %6 : vector<1x256xi32>
    %8 = vector.shape_cast %7 : vector<1x256xi1> to vector<1x256xi1>
    %9 = vector.broadcast %8 : vector<1x256xi1> to vector<64x256xi1>
    %cst = arith.constant 0.000000e+00 : bf16
    %10 = vector.broadcast %cst : bf16 to vector<64x17xbf16>
    %c0_3 = arith.constant 0 : index
    %c0_4 = arith.constant 0 : index
    %11 = vector.load %arg7[%c0_3, %c0_4] : memref<64x290xbf16, #tpu.memory_space<vmem>>, vector<64x17xbf16>
    tpu.vector_store %arg7[%c0_3, %c0_4], %10 {strides = array<i32>} : memref<64x290xbf16, #tpu.memory_space<vmem>>, vector<64x17xbf16>,
    %c0_5 = arith.constant 0 : index
    %c273 = arith.constant 273 : index
    %12 = vector.load %arg7[%c0_5, %c273] : memref<64x290xbf16, #tpu.memory_space<vmem>>, vector<64x17xbf16>
    tpu.vector_store %arg7[%c0_5, %c273], %10 {strides = array<i32>} : memref<64x290xbf16, #tpu.memory_space<vmem>>, vector<64x17xbf16>,
    %c0_6 = arith.constant 0 : index
    %c0_7 = arith.constant 0 : index
    %13 = vector.load %arg8[%c0_6, %c0_7] : memref<64x290xbf16, #tpu.memory_space<vmem>>, vector<64x17xbf16>
    tpu.vector_store %arg8[%c0_6, %c0_7], %10 {strides = array<i32>} : memref<64x290xbf16, #tpu.memory_space<vmem>>, vector<64x17xbf16>,
    %c0_8 = arith.constant 0 : index
    %c273_9 = arith.constant 273 : index
    %14 = vector.load %arg8[%c0_8, %c273_9] : memref<64x290xbf16, #tpu.memory_space<vmem>>, vector<64x17xbf16>
    tpu.vector_store %arg8[%c0_8, %c273_9], %10 {strides = array<i32>} : memref<64x290xbf16, #tpu.memory_space<vmem>>, vector<64x17xbf16>,
    %c0_10 = arith.constant 0 : index
    %c0_11 = arith.constant 0 : index
    %15 = vector.load %arg3[%c0_10, %c0_11] : memref<64x9xf32, #tpu.memory_space<vmem>>, vector<64x9xf32>
    %c0_12 = arith.constant 0 : index
    %c0_13 = arith.constant 0 : index
    %c0_14 = arith.constant 0 : index
    %16 = vector.load %arg2[%c0_12, %c0_13, %c0_14] : memref<1x9x256xf32, #tpu.memory_space<vmem>>, vector<1x9x256xf32>
    %17 = vector.shape_cast %16 : vector<1x9x256xf32> to vector<9x256xf32>
    %cst_15 = arith.constant dense<0.000000e+00> : vector<64x256xf32>
    %18 = tpu.matmul %15, %17, %cst_15 {dimension_numbers = #tpu.dot_dimension_numbers<[1], [0], [0], [1], [0, 0, 1, 1], [], []>} : vector<64x9xf32>, vector<9x256xf32>, vector<64x256xf32> -> vector<64x256xf32>
    %cst_16 = arith.constant 0.000000e+00 : f32
    %19 = vector.broadcast %cst_16 : f32 to vector<64x256xf32>
    %20 = arith.maximumf %18, %19 : vector<64x256xf32>
    %21 = arith.truncf %20 : vector<64x256xf32> to vector<64x256xbf16>
    %c0_17 = arith.constant 0 : index
    %c17 = arith.constant 17 : index
    %22 = vector.load %arg7[%c0_17, %c17] : memref<64x290xbf16, #tpu.memory_space<vmem>>, vector<64x256xbf16>
    tpu.vector_store %arg7[%c0_17, %c17], %21 {strides = array<i32>} : memref<64x290xbf16, #tpu.memory_space<vmem>>, vector<64x256xbf16>,
    %c0_i32_18 = arith.constant 0 : i32
    %c9_i32 = arith.constant 9 : i32
    %23 = arith.addi %c0_i32_18, %c9_i32 : i32
    %c1_i32 = arith.constant 1 : i32
    scf.for %arg9 = %c0_i32_18 to %23 step %c1_i32  : i32 {
      %c2_i32 = arith.constant 2 : i32
      %79 = arith.muli %c2_i32, %arg9 : i32
      %cst_66 = arith.constant 0.000000e+00 : f32
      %80 = vector.broadcast %cst_66 : f32 to vector<64x256xf32>
      %c9_i32_67 = arith.constant 9 : i32
      %81 = arith.muli %79, %c9_i32_67 : i32
      %c0_i32_68 = arith.constant 0 : i32
      %82 = arith.addi %81, %c0_i32_68 : i32
      %83 = arith.index_cast %82 : i32 to index
      %c0_69 = arith.constant 0 : index
      %c0_70 = arith.constant 0 : index
      %84 = vector.load %arg4[%83, %c0_69, %c0_70] : memref<162x64x64xbf16, #tpu.memory_space<vmem>>, vector<1x64x64xbf16>
      %85 = vector.shape_cast %84 : vector<1x64x64xbf16> to vector<64x64xbf16>
      %c0_71 = arith.constant 0 : index
      %c0_72 = arith.constant 0 : index
      %86 = vector.load %arg7[%c0_71, %c0_72] : memref<64x290xbf16, #tpu.memory_space<vmem>>, vector<64x256xbf16>
      %cst_73 = arith.constant 0.000000e+00 : bf16
      %87 = vector.broadcast %cst_73 : bf16 to vector<64x256xbf16>
      %88 = arith.select %4, %86, %87 : vector<64x256xi1>, vector<64x256xbf16>
      %cst_74 = arith.constant dense<0.000000e+00> : vector<64x256xf32>
      %89 = tpu.matmul %85, %88, %cst_74 {dimension_numbers = #tpu.dot_dimension_numbers<[1], [0], [0], [1], [0, 0, 1, 1], [], []>} : vector<64x64xbf16>, vector<64x256xbf16>, vector<64x256xf32> -> vector<64x256xf32>
      %90 = arith.addf %80, %89 : vector<64x256xf32>
      %c9_i32_75 = arith.constant 9 : i32
      %91 = arith.muli %79, %c9_i32_75 : i32
      %c1_i32_76 = arith.constant 1 : i32
      %92 = arith.addi %91, %c1_i32_76 : i32
      %93 = arith.index_cast %92 : i32 to index
      %c0_77 = arith.constant 0 : index
      %c0_78 = arith.constant 0 : index
      %94 = vector.load %arg4[%93, %c0_77, %c0_78] : memref<162x64x64xbf16, #tpu.memory_space<vmem>>, vector<1x64x64xbf16>
      %95 = vector.shape_cast %94 : vector<1x64x64xbf16> to vector<64x64xbf16>
      %c0_79 = arith.constant 0 : index
      %c1_80 = arith.constant 1 : index
      %96 = vector.load %arg7[%c0_79, %c1_80] : memref<64x290xbf16, #tpu.memory_space<vmem>>, vector<64x256xbf16>
      %cst_81 = arith.constant dense<0.000000e+00> : vector<64x256xf32>
      %97 = tpu.matmul %95, %96, %cst_81 {dimension_numbers = #tpu.dot_dimension_numbers<[1], [0], [0], [1], [0, 0, 1, 1], [], []>} : vector<64x64xbf16>, vector<64x256xbf16>, vector<64x256xf32> -> vector<64x256xf32>
      %98 = arith.addf %90, %97 : vector<64x256xf32>
      %c9_i32_82 = arith.constant 9 : i32
      %99 = arith.muli %79, %c9_i32_82 : i32
      %c2_i32_83 = arith.constant 2 : i32
      %100 = arith.addi %99, %c2_i32_83 : i32
      %101 = arith.index_cast %100 : i32 to index
      %c0_84 = arith.constant 0 : index
      %c0_85 = arith.constant 0 : index
      %102 = vector.load %arg4[%101, %c0_84, %c0_85] : memref<162x64x64xbf16, #tpu.memory_space<vmem>>, vector<1x64x64xbf16>
      %103 = vector.shape_cast %102 : vector<1x64x64xbf16> to vector<64x64xbf16>
      %c0_86 = arith.constant 0 : index
      %c2_87 = arith.constant 2 : index
      %104 = vector.load %arg7[%c0_86, %c2_87] : memref<64x290xbf16, #tpu.memory_space<vmem>>, vector<64x256xbf16>
      %cst_88 = arith.constant 0.000000e+00 : bf16
      %105 = vector.broadcast %cst_88 : bf16 to vector<64x256xbf16>
      %106 = arith.select %9, %104, %105 : vector<64x256xi1>, vector<64x256xbf16>
      %cst_89 = arith.constant dense<0.000000e+00> : vector<64x256xf32>
      %107 = tpu.matmul %103, %106, %cst_89 {dimension_numbers = #tpu.dot_dimension_numbers<[1], [0], [0], [1], [0, 0, 1, 1], [], []>} : vector<64x64xbf16>, vector<64x256xbf16>, vector<64x256xf32> -> vector<64x256xf32>
      %108 = arith.addf %98, %107 : vector<64x256xf32>
      %c9_i32_90 = arith.constant 9 : i32
      %109 = arith.muli %79, %c9_i32_90 : i32
      %c3_i32 = arith.constant 3 : i32
      %110 = arith.addi %109, %c3_i32 : i32
      %111 = arith.index_cast %110 : i32 to index
      %c0_91 = arith.constant 0 : index
      %c0_92 = arith.constant 0 : index
      %112 = vector.load %arg4[%111, %c0_91, %c0_92] : memref<162x64x64xbf16, #tpu.memory_space<vmem>>, vector<1x64x64xbf16>
      %113 = vector.shape_cast %112 : vector<1x64x64xbf16> to vector<64x64xbf16>
      %c0_93 = arith.constant 0 : index
      %c16_94 = arith.constant 16 : index
      %114 = vector.load %arg7[%c0_93, %c16_94] : memref<64x290xbf16, #tpu.memory_space<vmem>>, vector<64x256xbf16>
      %cst_95 = arith.constant 0.000000e+00 : bf16
      %115 = vector.broadcast %cst_95 : bf16 to vector<64x256xbf16>
      %116 = arith.select %4, %114, %115 : vector<64x256xi1>, vector<64x256xbf16>
      %cst_96 = arith.constant dense<0.000000e+00> : vector<64x256xf32>
      %117 = tpu.matmul %113, %116, %cst_96 {dimension_numbers = #tpu.dot_dimension_numbers<[1], [0], [0], [1], [0, 0, 1, 1], [], []>} : vector<64x64xbf16>, vector<64x256xbf16>, vector<64x256xf32> -> vector<64x256xf32>
      %118 = arith.addf %108, %117 : vector<64x256xf32>
      %c9_i32_97 = arith.constant 9 : i32
      %119 = arith.muli %79, %c9_i32_97 : i32
      %c4_i32 = arith.constant 4 : i32
      %120 = arith.addi %119, %c4_i32 : i32
      %121 = arith.index_cast %120 : i32 to index
      %c0_98 = arith.constant 0 : index
      %c0_99 = arith.constant 0 : index
      %122 = vector.load %arg4[%121, %c0_98, %c0_99] : memref<162x64x64xbf16, #tpu.memory_space<vmem>>, vector<1x64x64xbf16>
      %123 = vector.shape_cast %122 : vector<1x64x64xbf16> to vector<64x64xbf16>
      %c0_100 = arith.constant 0 : index
      %c17_101 = arith.constant 17 : index
      %124 = vector.load %arg7[%c0_100, %c17_101] : memref<64x290xbf16, #tpu.memory_space<vmem>>, vector<64x256xbf16>
      %cst_102 = arith.constant dense<0.000000e+00> : vector<64x256xf32>
      %125 = tpu.matmul %123, %124, %cst_102 {dimension_numbers = #tpu.dot_dimension_numbers<[1], [0], [0], [1], [0, 0, 1, 1], [], []>} : vector<64x64xbf16>, vector<64x256xbf16>, vector<64x256xf32> -> vector<64x256xf32>
      %126 = arith.addf %118, %125 : vector<64x256xf32>
      %c9_i32_103 = arith.constant 9 : i32
      %127 = arith.muli %79, %c9_i32_103 : i32
      %c5_i32 = arith.constant 5 : i32
      %128 = arith.addi %127, %c5_i32 : i32
      %129 = arith.index_cast %128 : i32 to index
      %c0_104 = arith.constant 0 : index
      %c0_105 = arith.constant 0 : index
      %130 = vector.load %arg4[%129, %c0_104, %c0_105] : memref<162x64x64xbf16, #tpu.memory_space<vmem>>, vector<1x64x64xbf16>
      %131 = vector.shape_cast %130 : vector<1x64x64xbf16> to vector<64x64xbf16>
      %c0_106 = arith.constant 0 : index
      %c18_107 = arith.constant 18 : index
      %132 = vector.load %arg7[%c0_106, %c18_107] : memref<64x290xbf16, #tpu.memory_space<vmem>>, vector<64x256xbf16>
      %cst_108 = arith.constant 0.000000e+00 : bf16
      %133 = vector.broadcast %cst_108 : bf16 to vector<64x256xbf16>
      %134 = arith.select %9, %132, %133 : vector<64x256xi1>, vector<64x256xbf16>
      %cst_109 = arith.constant dense<0.000000e+00> : vector<64x256xf32>
      %135 = tpu.matmul %131, %134, %cst_109 {dimension_numbers = #tpu.dot_dimension_numbers<[1], [0], [0], [1], [0, 0, 1, 1], [], []>} : vector<64x64xbf16>, vector<64x256xbf16>, vector<64x256xf32> -> vector<64x256xf32>
      %136 = arith.addf %126, %135 : vector<64x256xf32>
      %c9_i32_110 = arith.constant 9 : i32
      %137 = arith.muli %79, %c9_i32_110 : i32
      %c6_i32 = arith.constant 6 : i32
      %138 = arith.addi %137, %c6_i32 : i32
      %139 = arith.index_cast %138 : i32 to index
      %c0_111 = arith.constant 0 : index
      %c0_112 = arith.constant 0 : index
      %140 = vector.load %arg4[%139, %c0_111, %c0_112] : memref<162x64x64xbf16, #tpu.memory_space<vmem>>, vector<1x64x64xbf16>
      %141 = vector.shape_cast %140 : vector<1x64x64xbf16> to vector<64x64xbf16>
      %c0_113 = arith.constant 0 : index
      %c32_114 = arith.constant 32 : index
      %142 = vector.load %arg7[%c0_113, %c32_114] : memref<64x290xbf16, #tpu.memory_space<vmem>>, vector<64x256xbf16>
      %cst_115 = arith.constant 0.000000e+00 : bf16
      %143 = vector.broadcast %cst_115 : bf16 to vector<64x256xbf16>
      %144 = arith.select %4, %142, %143 : vector<64x256xi1>, vector<64x256xbf16>
      %cst_116 = arith.constant dense<0.000000e+00> : vector<64x256xf32>
      %145 = tpu.matmul %141, %144, %cst_116 {dimension_numbers = #tpu.dot_dimension_numbers<[1], [0], [0], [1], [0, 0, 1, 1], [], []>} : vector<64x64xbf16>, vector<64x256xbf16>, vector<64x256xf32> -> vector<64x256xf32>
      %146 = arith.addf %136, %145 : vector<64x256xf32>
      %c9_i32_117 = arith.constant 9 : i32
      %147 = arith.muli %79, %c9_i32_117 : i32
      %c7_i32 = arith.constant 7 : i32
      %148 = arith.addi %147, %c7_i32 : i32
      %149 = arith.index_cast %148 : i32 to index
      %c0_118 = arith.constant 0 : index
      %c0_119 = arith.constant 0 : index
      %150 = vector.load %arg4[%149, %c0_118, %c0_119] : memref<162x64x64xbf16, #tpu.memory_space<vmem>>, vector<1x64x64xbf16>
      %151 = vector.shape_cast %150 : vector<1x64x64xbf16> to vector<64x64xbf16>
      %c0_120 = arith.constant 0 : index
      %c33_121 = arith.constant 33 : index
      %152 = vector.load %arg7[%c0_120, %c33_121] : memref<64x290xbf16, #tpu.memory_space<vmem>>, vector<64x256xbf16>
      %cst_122 = arith.constant dense<0.000000e+00> : vector<64x256xf32>
      %153 = tpu.matmul %151, %152, %cst_122 {dimension_numbers = #tpu.dot_dimension_numbers<[1], [0], [0], [1], [0, 0, 1, 1], [], []>} : vector<64x64xbf16>, vector<64x256xbf16>, vector<64x256xf32> -> vector<64x256xf32>
      %154 = arith.addf %146, %153 : vector<64x256xf32>
      %c9_i32_123 = arith.constant 9 : i32
      %155 = arith.muli %79, %c9_i32_123 : i32
      %c8_i32 = arith.constant 8 : i32
      %156 = arith.addi %155, %c8_i32 : i32
      %157 = arith.index_cast %156 : i32 to index
      %c0_124 = arith.constant 0 : index
      %c0_125 = arith.constant 0 : index
      %158 = vector.load %arg4[%157, %c0_124, %c0_125] : memref<162x64x64xbf16, #tpu.memory_space<vmem>>, vector<1x64x64xbf16>
      %159 = vector.shape_cast %158 : vector<1x64x64xbf16> to vector<64x64xbf16>
      %c0_126 = arith.constant 0 : index
      %c34_127 = arith.constant 34 : index
      %160 = vector.load %arg7[%c0_126, %c34_127] : memref<64x290xbf16, #tpu.memory_space<vmem>>, vector<64x256xbf16>
      %cst_128 = arith.constant 0.000000e+00 : bf16
      %161 = vector.broadcast %cst_128 : bf16 to vector<64x256xbf16>
      %162 = arith.select %9, %160, %161 : vector<64x256xi1>, vector<64x256xbf16>
      %cst_129 = arith.constant dense<0.000000e+00> : vector<64x256xf32>
      %163 = tpu.matmul %159, %162, %cst_129 {dimension_numbers = #tpu.dot_dimension_numbers<[1], [0], [0], [1], [0, 0, 1, 1], [], []>} : vector<64x64xbf16>, vector<64x256xbf16>, vector<64x256xf32> -> vector<64x256xf32>
      %164 = arith.addf %154, %163 : vector<64x256xf32>
      %cst_130 = arith.constant 0.000000e+00 : f32
      %165 = vector.broadcast %cst_130 : f32 to vector<64x256xf32>
      %166 = arith.maximumf %164, %165 : vector<64x256xf32>
      %167 = arith.truncf %166 : vector<64x256xf32> to vector<64x256xbf16>
      %c0_131 = arith.constant 0 : index
      %c17_132 = arith.constant 17 : index
      %168 = vector.load %arg8[%c0_131, %c17_132] : memref<64x290xbf16, #tpu.memory_space<vmem>>, vector<64x256xbf16>
      tpu.vector_store %arg8[%c0_131, %c17_132], %167 {strides = array<i32>} : memref<64x290xbf16, #tpu.memory_space<vmem>>, vector<64x256xbf16>,
      %c2_i32_133 = arith.constant 2 : i32
      %169 = arith.muli %c2_i32_133, %arg9 : i32
      %c1_i32_134 = arith.constant 1 : i32
      %170 = arith.addi %169, %c1_i32_134 : i32
      %cst_135 = arith.constant 0.000000e+00 : f32
      %171 = vector.broadcast %cst_135 : f32 to vector<64x256xf32>
      %c9_i32_136 = arith.constant 9 : i32
      %172 = arith.muli %170, %c9_i32_136 : i32
      %c0_i32_137 = arith.constant 0 : i32
      %173 = arith.addi %172, %c0_i32_137 : i32
      %174 = arith.index_cast %173 : i32 to index
      %c0_138 = arith.constant 0 : index
      %c0_139 = arith.constant 0 : index
      %175 = vector.load %arg4[%174, %c0_138, %c0_139] : memref<162x64x64xbf16, #tpu.memory_space<vmem>>, vector<1x64x64xbf16>
      %176 = vector.shape_cast %175 : vector<1x64x64xbf16> to vector<64x64xbf16>
      %c0_140 = arith.constant 0 : index
      %c0_141 = arith.constant 0 : index
      %177 = vector.load %arg8[%c0_140, %c0_141] : memref<64x290xbf16, #tpu.memory_space<vmem>>, vector<64x256xbf16>
      %cst_142 = arith.constant 0.000000e+00 : bf16
      %178 = vector.broadcast %cst_142 : bf16 to vector<64x256xbf16>
      %179 = arith.select %4, %177, %178 : vector<64x256xi1>, vector<64x256xbf16>
      %cst_143 = arith.constant dense<0.000000e+00> : vector<64x256xf32>
      %180 = tpu.matmul %176, %179, %cst_143 {dimension_numbers = #tpu.dot_dimension_numbers<[1], [0], [0], [1], [0, 0, 1, 1], [], []>} : vector<64x64xbf16>, vector<64x256xbf16>, vector<64x256xf32> -> vector<64x256xf32>
      %181 = arith.addf %171, %180 : vector<64x256xf32>
      %c9_i32_144 = arith.constant 9 : i32
      %182 = arith.muli %170, %c9_i32_144 : i32
      %c1_i32_145 = arith.constant 1 : i32
      %183 = arith.addi %182, %c1_i32_145 : i32
      %184 = arith.index_cast %183 : i32 to index
      %c0_146 = arith.constant 0 : index
      %c0_147 = arith.constant 0 : index
      %185 = vector.load %arg4[%184, %c0_146, %c0_147] : memref<162x64x64xbf16, #tpu.memory_space<vmem>>, vector<1x64x64xbf16>
      %186 = vector.shape_cast %185 : vector<1x64x64xbf16> to vector<64x64xbf16>
      %c0_148 = arith.constant 0 : index
      %c1_149 = arith.constant 1 : index
      %187 = vector.load %arg8[%c0_148, %c1_149] : memref<64x290xbf16, #tpu.memory_space<vmem>>, vector<64x256xbf16>
      %cst_150 = arith.constant dense<0.000000e+00> : vector<64x256xf32>
      %188 = tpu.matmul %186, %187, %cst_150 {dimension_numbers = #tpu.dot_dimension_numbers<[1], [0], [0], [1], [0, 0, 1, 1], [], []>} : vector<64x64xbf16>, vector<64x256xbf16>, vector<64x256xf32> -> vector<64x256xf32>
      %189 = arith.addf %181, %188 : vector<64x256xf32>
      %c9_i32_151 = arith.constant 9 : i32
      %190 = arith.muli %170, %c9_i32_151 : i32
      %c2_i32_152 = arith.constant 2 : i32
      %191 = arith.addi %190, %c2_i32_152 : i32
      %192 = arith.index_cast %191 : i32 to index
      %c0_153 = arith.constant 0 : index
      %c0_154 = arith.constant 0 : index
      %193 = vector.load %arg4[%192, %c0_153, %c0_154] : memref<162x64x64xbf16, #tpu.memory_space<vmem>>, vector<1x64x64xbf16>
      %194 = vector.shape_cast %193 : vector<1x64x64xbf16> to vector<64x64xbf16>
      %c0_155 = arith.constant 0 : index
      %c2_156 = arith.constant 2 : index
      %195 = vector.load %arg8[%c0_155, %c2_156] : memref<64x290xbf16, #tpu.memory_space<vmem>>, vector<64x256xbf16>
      %cst_157 = arith.constant 0.000000e+00 : bf16
      %196 = vector.broadcast %cst_157 : bf16 to vector<64x256xbf16>
      %197 = arith.select %9, %195, %196 : vector<64x256xi1>, vector<64x256xbf16>
      %cst_158 = arith.constant dense<0.000000e+00> : vector<64x256xf32>
      %198 = tpu.matmul %194, %197, %cst_158 {dimension_numbers = #tpu.dot_dimension_numbers<[1], [0], [0], [1], [0, 0, 1, 1], [], []>} : vector<64x64xbf16>, vector<64x256xbf16>, vector<64x256xf32> -> vector<64x256xf32>
      %199 = arith.addf %189, %198 : vector<64x256xf32>
      %c9_i32_159 = arith.constant 9 : i32
      %200 = arith.muli %170, %c9_i32_159 : i32
      %c3_i32_160 = arith.constant 3 : i32
      %201 = arith.addi %200, %c3_i32_160 : i32
      %202 = arith.index_cast %201 : i32 to index
      %c0_161 = arith.constant 0 : index
      %c0_162 = arith.constant 0 : index
      %203 = vector.load %arg4[%202, %c0_161, %c0_162] : memref<162x64x64xbf16, #tpu.memory_space<vmem>>, vector<1x64x64xbf16>
      %204 = vector.shape_cast %203 : vector<1x64x64xbf16> to vector<64x64xbf16>
      %c0_163 = arith.constant 0 : index
      %c16_164 = arith.constant 16 : index
      %205 = vector.load %arg8[%c0_163, %c16_164] : memref<64x290xbf16, #tpu.memory_space<vmem>>, vector<64x256xbf16>
      %cst_165 = arith.constant 0.000000e+00 : bf16
      %206 = vector.broadcast %cst_165 : bf16 to vector<64x256xbf16>
      %207 = arith.select %4, %205, %206 : vector<64x256xi1>, vector<64x256xbf16>
      %cst_166 = arith.constant dense<0.000000e+00> : vector<64x256xf32>
      %208 = tpu.matmul %204, %207, %cst_166 {dimension_numbers = #tpu.dot_dimension_numbers<[1], [0], [0], [1], [0, 0, 1, 1], [], []>} : vector<64x64xbf16>, vector<64x256xbf16>, vector<64x256xf32> -> vector<64x256xf32>
      %209 = arith.addf %199, %208 : vector<64x256xf32>
      %c9_i32_167 = arith.constant 9 : i32
      %210 = arith.muli %170, %c9_i32_167 : i32
      %c4_i32_168 = arith.constant 4 : i32
      %211 = arith.addi %210, %c4_i32_168 : i32
      %212 = arith.index_cast %211 : i32 to index
      %c0_169 = arith.constant 0 : index
      %c0_170 = arith.constant 0 : index
      %213 = vector.load %arg4[%212, %c0_169, %c0_170] : memref<162x64x64xbf16, #tpu.memory_space<vmem>>, vector<1x64x64xbf16>
      %214 = vector.shape_cast %213 : vector<1x64x64xbf16> to vector<64x64xbf16>
      %c0_171 = arith.constant 0 : index
      %c17_172 = arith.constant 17 : index
      %215 = vector.load %arg8[%c0_171, %c17_172] : memref<64x290xbf16, #tpu.memory_space<vmem>>, vector<64x256xbf16>
      %cst_173 = arith.constant dense<0.000000e+00> : vector<64x256xf32>
      %216 = tpu.matmul %214, %215, %cst_173 {dimension_numbers = #tpu.dot_dimension_numbers<[1], [0], [0], [1], [0, 0, 1, 1], [], []>} : vector<64x64xbf16>, vector<64x256xbf16>, vector<64x256xf32> -> vector<64x256xf32>
      %217 = arith.addf %209, %216 : vector<64x256xf32>
      %c9_i32_174 = arith.constant 9 : i32
      %218 = arith.muli %170, %c9_i32_174 : i32
      %c5_i32_175 = arith.constant 5 : i32
      %219 = arith.addi %218, %c5_i32_175 : i32
      %220 = arith.index_cast %219 : i32 to index
      %c0_176 = arith.constant 0 : index
      %c0_177 = arith.constant 0 : index
      %221 = vector.load %arg4[%220, %c0_176, %c0_177] : memref<162x64x64xbf16, #tpu.memory_space<vmem>>, vector<1x64x64xbf16>
      %222 = vector.shape_cast %221 : vector<1x64x64xbf16> to vector<64x64xbf16>
      %c0_178 = arith.constant 0 : index
      %c18_179 = arith.constant 18 : index
      %223 = vector.load %arg8[%c0_178, %c18_179] : memref<64x290xbf16, #tpu.memory_space<vmem>>, vector<64x256xbf16>
      %cst_180 = arith.constant 0.000000e+00 : bf16
      %224 = vector.broadcast %cst_180 : bf16 to vector<64x256xbf16>
      %225 = arith.select %9, %223, %224 : vector<64x256xi1>, vector<64x256xbf16>
      %cst_181 = arith.constant dense<0.000000e+00> : vector<64x256xf32>
      %226 = tpu.matmul %222, %225, %cst_181 {dimension_numbers = #tpu.dot_dimension_numbers<[1], [0], [0], [1], [0, 0, 1, 1], [], []>} : vector<64x64xbf16>, vector<64x256xbf16>, vector<64x256xf32> -> vector<64x256xf32>
      %227 = arith.addf %217, %226 : vector<64x256xf32>
      %c9_i32_182 = arith.constant 9 : i32
      %228 = arith.muli %170, %c9_i32_182 : i32
      %c6_i32_183 = arith.constant 6 : i32
      %229 = arith.addi %228, %c6_i32_183 : i32
      %230 = arith.index_cast %229 : i32 to index
      %c0_184 = arith.constant 0 : index
      %c0_185 = arith.constant 0 : index
      %231 = vector.load %arg4[%230, %c0_184, %c0_185] : memref<162x64x64xbf16, #tpu.memory_space<vmem>>, vector<1x64x64xbf16>
      %232 = vector.shape_cast %231 : vector<1x64x64xbf16> to vector<64x64xbf16>
      %c0_186 = arith.constant 0 : index
      %c32_187 = arith.constant 32 : index
      %233 = vector.load %arg8[%c0_186, %c32_187] : memref<64x290xbf16, #tpu.memory_space<vmem>>, vector<64x256xbf16>
      %cst_188 = arith.constant 0.000000e+00 : bf16
      %234 = vector.broadcast %cst_188 : bf16 to vector<64x256xbf16>
      %235 = arith.select %4, %233, %234 : vector<64x256xi1>, vector<64x256xbf16>
      %cst_189 = arith.constant dense<0.000000e+00> : vector<64x256xf32>
      %236 = tpu.matmul %232, %235, %cst_189 {dimension_numbers = #tpu.dot_dimension_numbers<[1], [0], [0], [1], [0, 0, 1, 1], [], []>} : vector<64x64xbf16>, vector<64x256xbf16>, vector<64x256xf32> -> vector<64x256xf32>
      %237 = arith.addf %227, %236 : vector<64x256xf32>
      %c9_i32_190 = arith.constant 9 : i32
      %238 = arith.muli %170, %c9_i32_190 : i32
      %c7_i32_191 = arith.constant 7 : i32
      %239 = arith.addi %238, %c7_i32_191 : i32
      %240 = arith.index_cast %239 : i32 to index
      %c0_192 = arith.constant 0 : index
      %c0_193 = arith.constant 0 : index
      %241 = vector.load %arg4[%240, %c0_192, %c0_193] : memref<162x64x64xbf16, #tpu.memory_space<vmem>>, vector<1x64x64xbf16>
      %242 = vector.shape_cast %241 : vector<1x64x64xbf16> to vector<64x64xbf16>
      %c0_194 = arith.constant 0 : index
      %c33_195 = arith.constant 33 : index
      %243 = vector.load %arg8[%c0_194, %c33_195] : memref<64x290xbf16, #tpu.memory_space<vmem>>, vector<64x256xbf16>
      %cst_196 = arith.constant dense<0.000000e+00> : vector<64x256xf32>
      %244 = tpu.matmul %242, %243, %cst_196 {dimension_numbers = #tpu.dot_dimension_numbers<[1], [0], [0], [1], [0, 0, 1, 1], [], []>} : vector<64x64xbf16>, vector<64x256xbf16>, vector<64x256xf32> -> vector<64x256xf32>
      %245 = arith.addf %237, %244 : vector<64x256xf32>
      %c9_i32_197 = arith.constant 9 : i32
      %246 = arith.muli %170, %c9_i32_197 : i32
      %c8_i32_198 = arith.constant 8 : i32
      %247 = arith.addi %246, %c8_i32_198 : i32
      %248 = arith.index_cast %247 : i32 to index
      %c0_199 = arith.constant 0 : index
      %c0_200 = arith.constant 0 : index
      %249 = vector.load %arg4[%248, %c0_199, %c0_200] : memref<162x64x64xbf16, #tpu.memory_space<vmem>>, vector<1x64x64xbf16>
      %250 = vector.shape_cast %249 : vector<1x64x64xbf16> to vector<64x64xbf16>
      %c0_201 = arith.constant 0 : index
      %c34_202 = arith.constant 34 : index
      %251 = vector.load %arg8[%c0_201, %c34_202] : memref<64x290xbf16, #tpu.memory_space<vmem>>, vector<64x256xbf16>
      %cst_203 = arith.constant 0.000000e+00 : bf16
      %252 = vector.broadcast %cst_203 : bf16 to vector<64x256xbf16>
      %253 = arith.select %9, %251, %252 : vector<64x256xi1>, vector<64x256xbf16>
      %cst_204 = arith.constant dense<0.000000e+00> : vector<64x256xf32>
      %254 = tpu.matmul %250, %253, %cst_204 {dimension_numbers = #tpu.dot_dimension_numbers<[1], [0], [0], [1], [0, 0, 1, 1], [], []>} : vector<64x64xbf16>, vector<64x256xbf16>, vector<64x256xf32> -> vector<64x256xf32>
      %255 = arith.addf %245, %254 : vector<64x256xf32>
      %cst_205 = arith.constant 0.000000e+00 : f32
      %256 = vector.broadcast %cst_205 : f32 to vector<64x256xf32>
      %257 = arith.maximumf %255, %256 : vector<64x256xf32>
      %258 = arith.truncf %257 : vector<64x256xf32> to vector<64x256xbf16>
      %c0_206 = arith.constant 0 : index
      %c17_207 = arith.constant 17 : index
      %259 = vector.load %arg7[%c0_206, %c17_207] : memref<64x290xbf16, #tpu.memory_space<vmem>>, vector<64x256xbf16>
      tpu.vector_store %arg7[%c0_206, %c17_207], %258 {strides = array<i32>} : memref<64x290xbf16, #tpu.memory_space<vmem>>, vector<64x256xbf16>,
    }
    %c9_i32_19 = arith.constant 9 : i32
    %cst_20 = arith.constant 0.000000e+00 : f32
    %24 = vector.broadcast %cst_20 : f32 to vector<1x256xf32>
    %c0_21 = arith.constant 0 : index
    %c0_22 = arith.constant 0 : index
    %25 = vector.load %arg5[%c0_21, %c0_22] : memref<9x64xbf16, #tpu.memory_space<vmem>>, vector<1x64xbf16>
    %c0_23 = arith.constant 0 : index
    %c0_24 = arith.constant 0 : index
    %26 = vector.load %arg7[%c0_23, %c0_24] : memref<64x290xbf16, #tpu.memory_space<vmem>>, vector<64x256xbf16>
    %cst_25 = arith.constant 0.000000e+00 : bf16
    %27 = vector.broadcast %cst_25 : bf16 to vector<64x256xbf16>
    %28 = arith.select %4, %26, %27 : vector<64x256xi1>, vector<64x256xbf16>
    %cst_26 = arith.constant dense<0.000000e+00> : vector<1x256xf32>
    %29 = tpu.matmul %25, %28, %cst_26 {dimension_numbers = #tpu.dot_dimension_numbers<[1], [0], [0], [1], [0, 0, 1, 1], [], []>} : vector<1x64xbf16>, vector<64x256xbf16>, vector<1x256xf32> -> vector<1x256xf32>
    %30 = arith.addf %24, %29 : vector<1x256xf32>
    %c1_27 = arith.constant 1 : index
    %c0_28 = arith.constant 0 : index
    %31 = vector.load %arg5[%c1_27, %c0_28] : memref<9x64xbf16, #tpu.memory_space<vmem>>, vector<1x64xbf16>
    %c0_29 = arith.constant 0 : index
    %c1_30 = arith.constant 1 : index
    %32 = vector.load %arg7[%c0_29, %c1_30] : memref<64x290xbf16, #tpu.memory_space<vmem>>, vector<64x256xbf16>
    %cst_31 = arith.constant dense<0.000000e+00> : vector<1x256xf32>
    %33 = tpu.matmul %31, %32, %cst_31 {dimension_numbers = #tpu.dot_dimension_numbers<[1], [0], [0], [1], [0, 0, 1, 1], [], []>} : vector<1x64xbf16>, vector<64x256xbf16>, vector<1x256xf32> -> vector<1x256xf32>
    %34 = arith.addf %30, %33 : vector<1x256xf32>
    %c2 = arith.constant 2 : index
    %c0_32 = arith.constant 0 : index
    %35 = vector.load %arg5[%c2, %c0_32] : memref<9x64xbf16, #tpu.memory_space<vmem>>, vector<1x64xbf16>
    %c0_33 = arith.constant 0 : index
    %c2_34 = arith.constant 2 : index
    %36 = vector.load %arg7[%c0_33, %c2_34] : memref<64x290xbf16, #tpu.memory_space<vmem>>, vector<64x256xbf16>
    %cst_35 = arith.constant 0.000000e+00 : bf16
    %37 = vector.broadcast %cst_35 : bf16 to vector<64x256xbf16>
    %38 = arith.select %9, %36, %37 : vector<64x256xi1>, vector<64x256xbf16>
    %cst_36 = arith.constant dense<0.000000e+00> : vector<1x256xf32>
    %39 = tpu.matmul %35, %38, %cst_36 {dimension_numbers = #tpu.dot_dimension_numbers<[1], [0], [0], [1], [0, 0, 1, 1], [], []>} : vector<1x64xbf16>, vector<64x256xbf16>, vector<1x256xf32> -> vector<1x256xf32>
    %40 = arith.addf %34, %39 : vector<1x256xf32>
    %c3 = arith.constant 3 : index
    %c0_37 = arith.constant 0 : index
    %41 = vector.load %arg5[%c3, %c0_37] : memref<9x64xbf16, #tpu.memory_space<vmem>>, vector<1x64xbf16>
    %c0_38 = arith.constant 0 : index
    %c16 = arith.constant 16 : index
    %42 = vector.load %arg7[%c0_38, %c16] : memref<64x290xbf16, #tpu.memory_space<vmem>>, vector<64x256xbf16>
    %cst_39 = arith.constant 0.000000e+00 : bf16
    %43 = vector.broadcast %cst_39 : bf16 to vector<64x256xbf16>
    %44 = arith.select %4, %42, %43 : vector<64x256xi1>, vector<64x256xbf16>
    %cst_40 = arith.constant dense<0.000000e+00> : vector<1x256xf32>
    %45 = tpu.matmul %41, %44, %cst_40 {dimension_numbers = #tpu.dot_dimension_numbers<[1], [0], [0], [1], [0, 0, 1, 1], [], []>} : vector<1x64xbf16>, vector<64x256xbf16>, vector<1x256xf32> -> vector<1x256xf32>
    %46 = arith.addf %40, %45 : vector<1x256xf32>
    %c4 = arith.constant 4 : index
    %c0_41 = arith.constant 0 : index
    %47 = vector.load %arg5[%c4, %c0_41] : memref<9x64xbf16, #tpu.memory_space<vmem>>, vector<1x64xbf16>
    %c0_42 = arith.constant 0 : index
    %c17_43 = arith.constant 17 : index
    %48 = vector.load %arg7[%c0_42, %c17_43] : memref<64x290xbf16, #tpu.memory_space<vmem>>, vector<64x256xbf16>
    %cst_44 = arith.constant dense<0.000000e+00> : vector<1x256xf32>
    %49 = tpu.matmul %47, %48, %cst_44 {dimension_numbers = #tpu.dot_dimension_numbers<[1], [0], [0], [1], [0, 0, 1, 1], [], []>} : vector<1x64xbf16>, vector<64x256xbf16>, vector<1x256xf32> -> vector<1x256xf32>
    %50 = arith.addf %46, %49 : vector<1x256xf32>
    %c5 = arith.constant 5 : index
    %c0_45 = arith.constant 0 : index
    %51 = vector.load %arg5[%c5, %c0_45] : memref<9x64xbf16, #tpu.memory_space<vmem>>, vector<1x64xbf16>
    %c0_46 = arith.constant 0 : index
    %c18 = arith.constant 18 : index
    %52 = vector.load %arg7[%c0_46, %c18] : memref<64x290xbf16, #tpu.memory_space<vmem>>, vector<64x256xbf16>
    %cst_47 = arith.constant 0.000000e+00 : bf16
    %53 = vector.broadcast %cst_47 : bf16 to vector<64x256xbf16>
    %54 = arith.select %9, %52, %53 : vector<64x256xi1>, vector<64x256xbf16>
    %cst_48 = arith.constant dense<0.000000e+00> : vector<1x256xf32>
    %55 = tpu.matmul %51, %54, %cst_48 {dimension_numbers = #tpu.dot_dimension_numbers<[1], [0], [0], [1], [0, 0, 1, 1], [], []>} : vector<1x64xbf16>, vector<64x256xbf16>, vector<1x256xf32> -> vector<1x256xf32>
    %56 = arith.addf %50, %55 : vector<1x256xf32>
    %c6 = arith.constant 6 : index
    %c0_49 = arith.constant 0 : index
    %57 = vector.load %arg5[%c6, %c0_49] : memref<9x64xbf16, #tpu.memory_space<vmem>>, vector<1x64xbf16>
    %c0_50 = arith.constant 0 : index
    %c32 = arith.constant 32 : index
    %58 = vector.load %arg7[%c0_50, %c32] : memref<64x290xbf16, #tpu.memory_space<vmem>>, vector<64x256xbf16>
    %cst_51 = arith.constant 0.000000e+00 : bf16
    %59 = vector.broadcast %cst_51 : bf16 to vector<64x256xbf16>
    %60 = arith.select %4, %58, %59 : vector<64x256xi1>, vector<64x256xbf16>
    %cst_52 = arith.constant dense<0.000000e+00> : vector<1x256xf32>
    %61 = tpu.matmul %57, %60, %cst_52 {dimension_numbers = #tpu.dot_dimension_numbers<[1], [0], [0], [1], [0, 0, 1, 1], [], []>} : vector<1x64xbf16>, vector<64x256xbf16>, vector<1x256xf32> -> vector<1x256xf32>
    %62 = arith.addf %56, %61 : vector<1x256xf32>
    %c7 = arith.constant 7 : index
    %c0_53 = arith.constant 0 : index
    %63 = vector.load %arg5[%c7, %c0_53] : memref<9x64xbf16, #tpu.memory_space<vmem>>, vector<1x64xbf16>
    %c0_54 = arith.constant 0 : index
    %c33 = arith.constant 33 : index
    %64 = vector.load %arg7[%c0_54, %c33] : memref<64x290xbf16, #tpu.memory_space<vmem>>, vector<64x256xbf16>
    %cst_55 = arith.constant dense<0.000000e+00> : vector<1x256xf32>
    %65 = tpu.matmul %63, %64, %cst_55 {dimension_numbers = #tpu.dot_dimension_numbers<[1], [0], [0], [1], [0, 0, 1, 1], [], []>} : vector<1x64xbf16>, vector<64x256xbf16>, vector<1x256xf32> -> vector<1x256xf32>
    %66 = arith.addf %62, %65 : vector<1x256xf32>
    %c8 = arith.constant 8 : index
    %c0_56 = arith.constant 0 : index
    %67 = vector.load %arg5[%c8, %c0_56] : memref<9x64xbf16, #tpu.memory_space<vmem>>, vector<1x64xbf16>
    %c0_57 = arith.constant 0 : index
    %c34 = arith.constant 34 : index
    %68 = vector.load %arg7[%c0_57, %c34] : memref<64x290xbf16, #tpu.memory_space<vmem>>, vector<64x256xbf16>
    %cst_58 = arith.constant 0.000000e+00 : bf16
    %69 = vector.broadcast %cst_58 : bf16 to vector<64x256xbf16>
    %70 = arith.select %9, %68, %69 : vector<64x256xi1>, vector<64x256xbf16>
    %cst_59 = arith.constant dense<0.000000e+00> : vector<1x256xf32>
    %71 = tpu.matmul %67, %70, %cst_59 {dimension_numbers = #tpu.dot_dimension_numbers<[1], [0], [0], [1], [0, 0, 1, 1], [], []>} : vector<1x64xbf16>, vector<64x256xbf16>, vector<1x256xf32> -> vector<1x256xf32>
    %72 = arith.addf %66, %71 : vector<1x256xf32>
    %c0_60 = arith.constant 0 : index
    %c4_61 = arith.constant 4 : index
    %c0_62 = arith.constant 0 : index
    %73 = vector.load %arg2[%c0_60, %c4_61, %c0_62] : memref<1x9x256xf32, #tpu.memory_space<vmem>>, vector<1x1x256xf32>
    %74 = vector.shape_cast %73 : vector<1x1x256xf32> to vector<1x256xf32>
    %75 = arith.addf %72, %74 : vector<1x256xf32>
    %c0_63 = arith.constant 0 : index
    %c0_64 = arith.constant 0 : index
    %c0_65 = arith.constant 0 : index
    %76 = vector.load %arg6[%c0_63, %c0_64, %c0_65] : memref<1x1x256xf32, #tpu.memory_space<vmem>>, vector<1x1x256xf32>
    %77 = vector.shape_cast %76 : vector<1x1x256xf32> to vector<1x256xf32>
    %78 = vector.shape_cast %75 : vector<1x256xf32> to vector<1x1x256xf32>
    tpu.vector_store %arg6[%c0_63, %c0_64, %c0_65], %78 {strides = array<i32>} : memref<1x1x256xf32, #tpu.memory_space<vmem>>, vector<1x1x256xf32>,
    return
  }
  func.func @transform_0(%arg0: i32) -> (i32, i32) {
    %c0_i32 = arith.constant 0 : i32
    %c0_i32_0 = arith.constant 0 : i32
    %c0_i32_1 = arith.constant 0 : i32
    return %c0_i32, %c0_i32_0 : i32, i32
  }
  func.func @transform_1(%arg0: i32) -> (i32, i32, i32) {
    %c0_i32 = arith.constant 0 : i32
    %c0_i32_0 = arith.constant 0 : i32
    %c0_i32_1 = arith.constant 0 : i32
    return %arg0, %c0_i32, %c0_i32_0 : i32, i32, i32
  }
  func.func @transform_2(%arg0: i32) -> (i32, i32) {
    %c0_i32 = arith.constant 0 : i32
    %c0_i32_0 = arith.constant 0 : i32
    %c0_i32_1 = arith.constant 0 : i32
    return %c0_i32, %c0_i32_0 : i32, i32
  }
  func.func @transform_3(%arg0: i32) -> (i32, i32, i32) {
    %c0_i32 = arith.constant 0 : i32
    %c0_i32_0 = arith.constant 0 : i32
    %c0_i32_1 = arith.constant 0 : i32
    %c0_i32_2 = arith.constant 0 : i32
    return %c0_i32, %c0_i32_0, %c0_i32_1 : i32, i32, i32
  }
  func.func @transform_4(%arg0: i32) -> (i32, i32) {
    %c0_i32 = arith.constant 0 : i32
    %c0_i32_0 = arith.constant 0 : i32
    %c0_i32_1 = arith.constant 0 : i32
    return %c0_i32, %c0_i32_0 : i32, i32
  }
  func.func @transform_5(%arg0: i32) -> (i32, i32, i32) {
    %c0_i32 = arith.constant 0 : i32
    %c0_i32_0 = arith.constant 0 : i32
    %c0_i32_1 = arith.constant 0 : i32
    return %arg0, %c0_i32, %c0_i32_0 : i32, i32, i32
  }
}

</mosaic_0001>

<llo_original>
// kernel: squeeze.13
$region0: #{squeeze.13}
  %s0 = inlined_call_operand.hbm [shape: f32[2,1,16,16], index: 0, kind: input, shape index: {}]
  %s1 = inlined_call_operand.vmem [shape: f32[2,1,256], index: 1, kind: output, shape index: {}]
  $region1: #{squeeze.13} parent=0
    #allocation0 [shape = 'u8[16384]{0}', space=vmem, size = 0x4000, scoped, tag = 'operand span for operand 0']
    #allocation1 [shape = 's32[1]{0}', space=sflag, size = 0x4, scoped, tag = 'scoped memory for squeeze.13']
    #allocation2 [shape = 'u8[16384]{0}', space=vmem, size = 0x4000, scoped, tag = 'scoped mem for output reshape']
    %2 = vsyncpa [#allocation1], 0
    %s4 = ssub.s32 512, 512
    %5 = vsyncadd [#allocation1], %s4
    %s7 = sshll.u32 [#allocation0], 4
    %s8 = int_to_ptr.vmem [resolvable:$true] %s7
    %10 = dma.hbm_to_vmem [thread:$0]  %s0, 512, %s8, [#allocation1]
    %11 = dma.done [#allocation1], 512
    %v12 = vld [vmem:[#allocation0] ss:$8 sm:$0xf]
    %vm13 = vcmask 130048
    %14 = vst.msk [vmem:[#allocation2] ss:$8 sm:$0xf] %vm13, %v12
    %s15 = scalar_lea.vmem [#allocation0], 7
    %v16 = vld [vmem:[%s15] ss:$8 sm:$0xf]
    %17 = vrot.lane.b32.xlu0 %v16, 112
    %v18 = vpop.permute.xlu0 %17
    %vm19 = vcmask 1048448
    %20 = vst.msk [vmem:[#allocation2] ss:$8 sm:$0xf] %vm19, %v18
    %s21 = scalar_lea.vmem [#allocation0], 6
    %v22 = vld [vmem:[%s21] ss:$8 sm:$0xf]
    %23 = vrot.lane.b32.xlu0 %v22, 96
    %v24 = vpop.permute.xlu0 %23
    %vm25 = vcmask 917248
    %26 = vst.msk [vmem:[#allocation2] ss:$8 sm:$0xf] %vm25, %v24
    %s27 = scalar_lea.vmem [#allocation0], 5
    %v28 = vld [vmem:[%s27] ss:$8 sm:$0xf]
    %29 = vrot.lane.b32.xlu0 %v28, 80
    %v30 = vpop.permute.xlu0 %29
    %vm31 = vcmask 786048
    %32 = vst.msk [vmem:[#allocation2] ss:$8 sm:$0xf] %vm31, %v30
    %s33 = scalar_lea.vmem [#allocation0], 4
    %v34 = vld [vmem:[%s33] ss:$8 sm:$0xf]
    %35 = vrot.lane.b32.xlu0 %v34, 64
    %v36 = vpop.permute.xlu0 %35
    %vm37 = vcmask 654848
    %38 = vst.msk [vmem:[#allocation2] ss:$8 sm:$0xf] %vm37, %v36
    %s39 = scalar_lea.vmem [#allocation0], 3
    %v40 = vld [vmem:[%s39] ss:$8 sm:$0xf]
    %41 = vrot.lane.b32.xlu0 %v40, 48
    %v42 = vpop.permute.xlu0 %41
    %vm43 = vcmask 523648
    %44 = vst.msk [vmem:[#allocation2] ss:$8 sm:$0xf] %vm43, %v42
    %s45 = scalar_lea.vmem [#allocation0], 2
    %v46 = vld [vmem:[%s45] ss:$8 sm:$0xf]
    %47 = vrot.lane.b32.xlu0 %v46, 32
    %v48 = vpop.permute.xlu0 %47
    %vm49 = vcmask 392448
    %50 = vst.msk [vmem:[#allocation2] ss:$8 sm:$0xf] %vm49, %v48
    %s51 = scalar_lea.vmem [#allocation0], 1
    %v52 = vld [vmem:[%s51] ss:$8 sm:$0xf]
    %53 = vrot.lane.b32.xlu0 %v52, 16
    %v54 = vpop.permute.xlu0 %53
    %vm55 = vcmask 261248
    %56 = vst.msk [vmem:[#allocation2] ss:$8 sm:$0xf] %vm55, %v54
    %s58 = sshllo.u32 0, 1
    %v60 = vld [vmem:[#allocation2] sm:%s58]
    %s61 = sshllo.u32 0, 1
    %62 = vst [vmem:[%s1] sm:%s61] %v60
    %s63 = scalar_lea.vmem [#allocation2], 8
    %v64 = vld [vmem:[%s63] sm:%s58]
    %s65 = sshllo.u32 0, 1
    %s66 = scalar_lea.vmem %s1, 1
    %67 = vst [vmem:[%s66] sm:%s65] %v64
    %s68 = scalar_lea.vmem [#allocation2], 16
    %v69 = vld [vmem:[%s68] sm:%s58]
    %s70 = sshllo.u32 0, 1
    %s71 = smul.addr 1, 2
    %s72 = scalar_lea.vmem %s1, %s71
    %73 = vst [vmem:[%s72] sm:%s70] %v69
    %s74 = scalar_lea.vmem [#allocation2], 24
    %v75 = vld [vmem:[%s74] sm:%s58]
    %s76 = sshllo.u32 0, 1
    %s77 = smul.addr 1, 3
    %s78 = scalar_lea.vmem %s1, %s77
    %79 = vst [vmem:[%s78] sm:%s76] %v75
    %80 = vsyncpa [#allocation1], 1

// kernel: squeeze.17
$region0: #{squeeze.17}
  %s0 = inlined_call_operand.vmem [shape: f32[2,1,16,16], index: 0, kind: input, shape index: {}]
  %s1 = inlined_call_operand.vmem [shape: f32[2,1,256], index: 1, kind: output, shape index: {}]
  $region1: #{squeeze.17} parent=0
    #allocation0 [shape = 'u8[16384]{0}', space=vmem, size = 0x4000, scoped, tag = 'scoped mem for output reshape']
    %v2 = vld [vmem:[%s0] ss:$8 sm:$0xf]
    %vm3 = vcmask 130048
    %4 = vst.msk [vmem:[#allocation0] ss:$8 sm:$0xf] %vm3, %v2
    %s5 = scalar_lea.vmem %s0, 7
    %v6 = vld [vmem:[%s5] ss:$8 sm:$0xf]
    %7 = vrot.lane.b32.xlu0 %v6, 112
    %v8 = vpop.permute.xlu0 %7
    %vm9 = vcmask 1048448
    %10 = vst.msk [vmem:[#allocation0] ss:$8 sm:$0xf] %vm9, %v8
    %s11 = scalar_lea.vmem %s0, 6
    %v12 = vld [vmem:[%s11] ss:$8 sm:$0xf]
    %13 = vrot.lane.b32.xlu0 %v12, 96
    %v14 = vpop.permute.xlu0 %13
    %vm15 = vcmask 917248
    %16 = vst.msk [vmem:[#allocation0] ss:$8 sm:$0xf] %vm15, %v14
    %s17 = scalar_lea.vmem %s0, 5
    %v18 = vld [vmem:[%s17] ss:$8 sm:$0xf]
    %19 = vrot.lane.b32.xlu0 %v18, 80
    %v20 = vpop.permute.xlu0 %19
    %vm21 = vcmask 786048
    %22 = vst.msk [vmem:[#allocation0] ss:$8 sm:$0xf] %vm21, %v20
    %s23 = scalar_lea.vmem %s0, 4
    %v24 = vld [vmem:[%s23] ss:$8 sm:$0xf]
    %25 = vrot.lane.b32.xlu0 %v24, 64
    %v26 = vpop.permute.xlu0 %25
    %vm27 = vcmask 654848
    %28 = vst.msk [vmem:[#allocation0] ss:$8 sm:$0xf] %vm27, %v26
    %s29 = scalar_lea.vmem %s0, 3
    %v30 = vld [vmem:[%s29] ss:$8 sm:$0xf]
    %31 = vrot.lane.b32.xlu0 %v30, 48
    %v32 = vpop.permute.xlu0 %31
    %vm33 = vcmask 523648
    %34 = vst.msk [vmem:[#allocation0] ss:$8 sm:$0xf] %vm33, %v32
    %s35 = scalar_lea.vmem %s0, 2
    %v36 = vld [vmem:[%s35] ss:$8 sm:$0xf]
    %37 = vrot.lane.b32.xlu0 %v36, 32
    %v38 = vpop.permute.xlu0 %37
    %vm39 = vcmask 392448
    %40 = vst.msk [vmem:[#allocation0] ss:$8 sm:$0xf] %vm39, %v38
    %s41 = scalar_lea.vmem %s0, 1
    %v42 = vld [vmem:[%s41] ss:$8 sm:$0xf]
    %43 = vrot.lane.b32.xlu0 %v42, 16
    %v44 = vpop.permute.xlu0 %43
    %vm45 = vcmask 261248
    %46 = vst.msk [vmem:[#allocation0] ss:$8 sm:$0xf] %vm45, %v44
    %s48 = sshllo.u32 0, 1
    %v50 = vld [vmem:[#allocation0] sm:%s48]
    %s51 = sshllo.u32 0, 1
    %52 = vst [vmem:[%s1] sm:%s51] %v50
    %s53 = scalar_lea.vmem [#allocation0], 8
    %v54 = vld [vmem:[%s53] sm:%s48]
    %s55 = sshllo.u32 0, 1
    %s56 = scalar_lea.vmem %s1, 1
    %57 = vst [vmem:[%s56] sm:%s55] %v54
    %s58 = scalar_lea.vmem [#allocation0], 16
    %v59 = vld [vmem:[%s58] sm:%s48]
    %s60 = sshllo.u32 0, 1
    %s61 = smul.addr 1, 2
    %s62 = scalar_lea.vmem %s1, %s61
    %63 = vst [vmem:[%s62] sm:%s60] %v59
    %s64 = scalar_lea.vmem [#allocation0], 24
    %v65 = vld [vmem:[%s64] sm:%s48]
    %s66 = sshllo.u32 0, 1
    %s67 = smul.addr 1, 3
    %s68 = scalar_lea.vmem %s1, %s67
    %69 = vst [vmem:[%s68] sm:%s66] %v65

// kernel: cfsr_forward.1
$region0: #{cfsr_forward.1}
  #allocation0 [shape = 'u32[]', space=smem, size = 0x4, offset = 0x4, fixed_abs, tag = 'smem constant byte address 0x4 - core index']
  #allocation1 [shape = 'u32[144,128]{1,0:T(1,128)}', space=vmem, size = 0x12000, scoped, tag = 'internal scratch']
  #allocation2 [shape = 'bf16[64,290]{1,0:T(16,128)(2,1)}', space=vmem, size = 0xc000, scoped, tag = 'scratch operand']
  #allocation3 [shape = 'bf16[64,290]{1,0:T(16,128)(2,1)}', space=vmem, size = 0xc000, scoped, tag = 'scratch operand']
  %s0 = inlined_call_operand.vmem [shape: s32[2,256], index: 0, kind: input, shape index: {}]
  %s1 = inlined_call_operand.vmem [shape: f32[2,9,256], index: 1, kind: input, shape index: {}]
  %s2 = inlined_call_operand.vmem [shape: f32[64,9], index: 2, kind: input, shape index: {}]
  %s3 = inlined_call_operand.vmem [shape: bf16[162,64,64], index: 3, kind: input, shape index: {}]
  %s4 = inlined_call_operand.vmem [shape: bf16[9,64], index: 4, kind: input, shape index: {}]
  %s5 = inlined_call_operand.vmem [shape: f32[2,1,256], index: 5, kind: output, shape index: {}]
  %s6 = sld [smem:[#allocation0]]
  $region60: #{cfsr_forward.1} parent=0
    _
  %s8 = ssub.s32 1, %s6
  %s9 = scalar_select 0, %s8, %s6
  loop: start=0, step=1, limit=4
  $region2: #{cfsr_forward.1} parent=0 // loop_pre_header
    _
  $region3: #{cfsr_forward.1} parent=0 // loop_header
    %s11 = sphi 0, %s15
    %p12 = scmp.ge.s32.totalorder %s11, 4
    %s19 = sphi 0, %s19
    %s21 = sphi 0, %s19
    %s22 = sphi 0, %s21
    %s36 = sphi 0, %s22
    %s42 = sphi 0, %s44
    %s45 = sphi 0, %s42
    %s46 = sphi 0, %s45
    %s62 = sphi 0, %s46
    %s66 = sphi 0, %s66
    %s68 = sphi 0, %s66
    %s69 = sphi 0, %s68
    %s83 = sphi 0, %s69
    %s87 = sphi 0, %s87
    %s89 = sphi 0, %s87
    %s90 = sphi 0, %s89
    %s104 = sphi 0, %s90
    %s108 = sphi 0, %s108
    %s110 = sphi 0, %s108
    %s111 = sphi 0, %s110
    %s125 = sphi 0, %s111
    %s131 = sphi 0, %s133
    %s134 = sphi 0, %s131
    %s135 = sphi 0, %s134
    %s151 = sphi 0, %s135
  $region4: #{cfsr_forward.1} parent=0 // loop_header_branch
    %14 = sbr.rel (%p12) target = $region8
  $region5: #{cfsr_forward.1} parent=0 // loop_body
    %s16 = ssub.s32 %s11, 1
    %s17 = ssub.s32 %s11, 2
    %s18 = sadd.s32 %s11, 1
    %s20 = sadd.s32 %s19, 1
    %p23 = scmp.eq.s32.totalorder %s11, 1
    %p24 = scmp.ne.s32.totalorder %s19, %s21
    %p25 = scmp.eq.s32.totalorder %s11, 0
    %p26 = por %p24, %p25
    %p27 = scmp.ne.s32.totalorder %s19, %s21
    %p28 = scmp.eq.s32.totalorder %s16, 1
    %p29 = por %p27, %p28
    %p30 = scmp.ne.s32.totalorder %s21, %s22
    %p31 = scmp.eq.s32.totalorder %s16, 0
    %p32 = por %p30, %p31
    %p33 = scmp.ne.s32.totalorder %s21, %s22
    %p34 = scmp.eq.s32.totalorder %s17, 1
    %p35 = por %p33, %p34
    %p37 = scmp.ne.s32.totalorder %s22, %s36
    %p38 = scmp.eq.s32.totalorder %s17, 0
    %p39 = por %p37, %p38
    %s40 = ssub.s32 %s11, %s18
    %p41 = scmp.eq.s32.totalorder %s40, 0
    %s43 = sadd.s32 %s42, 1
    %s44 = scalar_select %p41, %s42, %s43
    %p47 = pneg %p41
    %p48 = scmp.eq.s32.totalorder %s11, 1
    %p49 = por %p47, %p48
    %p50 = scmp.ne.s32.totalorder %s42, %s45
    %p51 = scmp.eq.s32.totalorder %s11, 0
    %p52 = por %p50, %p51
    %p53 = scmp.ne.s32.totalorder %s42, %s45
    %p54 = scmp.eq.s32.totalorder %s16, 1
    %p55 = por %p53, %p54
    %p56 = scmp.ne.s32.totalorder %s45, %s46
    %p57 = scmp.eq.s32.totalorder %s16, 0
    %p58 = por %p56, %p57
    %p59 = scmp.ne.s32.totalorder %s45, %s46
    %p60 = scmp.eq.s32.totalorder %s17, 1
    %p61 = por %p59, %p60
    %p63 = scmp.ne.s32.totalorder %s46, %s62
    %p64 = scmp.eq.s32.totalorder %s17, 0
    %p65 = por %p63, %p64
    %s67 = sadd.s32 %s66, 1
    %p70 = scmp.eq.s32.totalorder %s11, 1
    %p71 = scmp.ne.s32.totalorder %s66, %s68
    %p72 = scmp.eq.s32.totalorder %s11, 0
    %p73 = por %p71, %p72
    %p74 = scmp.ne.s32.totalorder %s66, %s68
    %p75 = scmp.eq.s32.totalorder %s16, 1
    %p76 = por %p74, %p75
    %p77 = scmp.ne.s32.totalorder %s68, %s69
    %p78 = scmp.eq.s32.totalorder %s16, 0
    %p79 = por %p77, %p78
    %p80 = scmp.ne.s32.totalorder %s68, %s69
    %p81 = scmp.eq.s32.totalorder %s17, 1
    %p82 = por %p80, %p81
    %p84 = scmp.ne.s32.totalorder %s69, %s83
    %p85 = scmp.eq.s32.totalorder %s17, 0
    %p86 = por %p84, %p85
    %s88 = sadd.s32 %s87, 1
    %p91 = scmp.eq.s32.totalorder %s11, 1
    %p92 = scmp.ne.s32.totalorder %s87, %s89
    %p93 = scmp.eq.s32.totalorder %s11, 0
    %p94 = por %p92, %p93
    %p95 = scmp.ne.s32.totalorder %s87, %s89
    %p96 = scmp.eq.s32.totalorder %s16, 1
    %p97 = por %p95, %p96
    %p98 = scmp.ne.s32.totalorder %s89, %s90
    %p99 = scmp.eq.s32.totalorder %s16, 0
    %p100 = por %p98, %p99
    %p101 = scmp.ne.s32.totalorder %s89, %s90
    %p102 = scmp.eq.s32.totalorder %s17, 1
    %p103 = por %p101, %p102
    %p105 = scmp.ne.s32.totalorder %s90, %s104
    %p106 = scmp.eq.s32.totalorder %s17, 0
    %p107 = por %p105, %p106
    %s109 = sadd.s32 %s108, 1
    %p112 = scmp.eq.s32.totalorder %s11, 1
    %p113 = scmp.ne.s32.totalorder %s108, %s110
    %p114 = scmp.eq.s32.totalorder %s11, 0
    %p115 = por %p113, %p114
    %p116 = scmp.ne.s32.totalorder %s108, %s110
    %p117 = scmp.eq.s32.totalorder %s16, 1
    %p118 = por %p116, %p117
    %p119 = scmp.ne.s32.totalorder %s110, %s111
    %p120 = scmp.eq.s32.totalorder %s16, 0
    %p121 = por %p119, %p120
    %p122 = scmp.ne.s32.totalorder %s110, %s111
    %p123 = scmp.eq.s32.totalorder %s17, 1
    %p124 = por %p122, %p123
    %p126 = scmp.ne.s32.totalorder %s111, %s125
    %p127 = scmp.eq.s32.totalorder %s17, 0
    %p128 = por %p126, %p127
    %s129 = ssub.s32 %s11, %s18
    %p130 = scmp.eq.s32.totalorder %s129, 0
    %s132 = sadd.s32 %s131, 1
    %s133 = scalar_select %p130, %s131, %s132
    %p136 = pneg %p130
    %p137 = scmp.eq.s32.totalorder %s11, 1
    %p138 = por %p136, %p137
    %p139 = scmp.ne.s32.totalorder %s131, %s134
    %p140 = scmp.eq.s32.totalorder %s11, 0
    %p141 = por %p139, %p140
    %p142 = scmp.ne.s32.totalorder %s131, %s134
    %p143 = scmp.eq.s32.totalorder %s16, 1
    %p144 = por %p142, %p143
    %p145 = scmp.ne.s32.totalorder %s134, %s135
    %p146 = scmp.eq.s32.totalorder %s16, 0
    %p147 = por %p145, %p146
    %p148 = scmp.ne.s32.totalorder %s134, %s135
    %p149 = scmp.eq.s32.totalorder %s17, 1
    %p150 = por %p148, %p149
    %p152 = scmp.ne.s32.totalorder %s135, %s151
    %p153 = scmp.eq.s32.totalorder %s17, 0
    %p154 = por %p152, %p153
    %p155 = scmp.le.s32.totalorder 1, %s11
    %p156 = scmp.lt.s32.totalorder %s11, 3
    %p157 = pnand %p155, %p156
    %p158 = pneg %p157
    // Predicated region
    $region9: #{cfsr_forward.1} parent=5 // pred_check
      _
    $region10: #{cfsr_forward.1} parent=5 // pred_check_branch
      %160 = sbr.rel (%p157) target = $region12
    $region11: #{cfsr_forward.1} parent=5 // pred_region
      %s161 = ssub.s32 %s11, 1
      // Predicated region
      $region13: #{cfsr_forward.1} parent=11 // pred_check
        %p162 = pneg %p32
      $region14: #{cfsr_forward.1} parent=11 // pred_check_branch
        %164 = sbr.rel (%p162) target = $region16
      $region15: #{cfsr_forward.1} parent=11 // pred_region
        _
      $region16: #{cfsr_forward.1} parent=11 // pred_fallthru
        _
      // Predicated region
      $region17: #{cfsr_forward.1} parent=11 // pred_check
        %p165 = pneg %p79
      $region18: #{cfsr_forward.1} parent=11 // pred_check_branch
        %167 = sbr.rel (%p165) target = $region20
      $region19: #{cfsr_forward.1} parent=11 // pred_region
        _
      $region20: #{cfsr_forward.1} parent=11 // pred_fallthru
        _
      // Predicated region
      $region21: #{cfsr_forward.1} parent=11 // pred_check
        %p168 = pneg %p100
      $region22: #{cfsr_forward.1} parent=11 // pred_check_branch
        %170 = sbr.rel (%p168) target = $region24
      $region23: #{cfsr_forward.1} parent=11 // pred_region
        _
      $region24: #{cfsr_forward.1} parent=11 // pred_fallthru
        _
      // Predicated region
      $region25: #{cfsr_forward.1} parent=11 // pred_check
        %p171 = pneg %p121
      $region26: #{cfsr_forward.1} parent=11 // pred_check_branch
        %173 = sbr.rel (%p171) target = $region28
      $region27: #{cfsr_forward.1} parent=11 // pred_region
        _
      $region28: #{cfsr_forward.1} parent=11 // pred_fallthru
        _
    $region12: #{cfsr_forward.1} parent=5 // pred_fallthru
      _
    %p174 = scmp.lt.s32.totalorder %s11, 2
    // Predicated region
    $region29: #{cfsr_forward.1} parent=5 // pred_check
      %p175 = pneg %p174
    $region30: #{cfsr_forward.1} parent=5 // pred_check_branch
      %177 = sbr.rel (%p175) target = $region32
    $region31: #{cfsr_forward.1} parent=5 // pred_region
      // Predicated region
      $region33: #{cfsr_forward.1} parent=31 // pred_check
        %p178 = pneg %p52
      $region34: #{cfsr_forward.1} parent=31 // pred_check_branch
        %180 = sbr.rel (%p178) target = $region36
      $region35: #{cfsr_forward.1} parent=31 // pred_region
        %p181 = scmp.lt.s32.totalorder %s11, 1
        %s182 = scalar_select %p181, %s11, 1
        %s183 = smul.addr %s182, 4
        %s184 = smul.addr %s183, 8
        %s185 = scalar_lea.vmem %s1, %s184
      $region36: #{cfsr_forward.1} parent=31 // pred_fallthru
        _
    $region32: #{cfsr_forward.1} parent=5 // pred_fallthru
      _
    %p186 = scmp.le.s32.totalorder 1, %s11
    %p187 = scmp.lt.s32.totalorder %s11, 3
    %p188 = pnand %p186, %p187
    %p189 = pneg %p188
    // Predicated region
    $region37: #{cfsr_forward.1} parent=5 // pred_check
      _
    $region38: #{cfsr_forward.1} parent=5 // pred_check_branch
      %191 = sbr.rel (%p188) target = $region40
    $region39: #{cfsr_forward.1} parent=5 // pred_region
      %s192 = ssub.s32 %s11, 1
      %p193 = pneg %p32
      %p194 = pneg %p29
      %p195 = scmp.lt.s32.totalorder %s16, 1
      %s196 = scalar_select %p195, %s16, 1
      %s197 = smul.addr %s196, 4
      %s198 = smul.addr %s197, 8
      %s199 = scalar_lea.vmem %s1, %s198
      %p200 = pneg %p58
      %p201 = pneg %p55
      %p202 = pneg %p79
      %p203 = pneg %p76
      %p204 = pneg %p100
      %p205 = pneg %p97
      %p206 = pneg %p121
      %p207 = pneg %p118
      %p208 = pneg %p147
      %p209 = pneg %p144
      %p210 = scmp.lt.s32.totalorder %s16, 1
      %s211 = scalar_select %p210, %s16, 1
      %s212 = smul.addr %s211, 2
      %s213 = scalar_lea.vmem %s5, %s212
      %p214 = scmp.lt.s32.totalorder %s16, 1
      %s215 = scalar_select %p214, %s16, 1
      %s216 = smul.addr %s215, 4
      %s217 = smul.addr %s216, 8
      %s218 = scalar_lea.vmem %s1, %s217
      %p219 = scmp.lt.s32.totalorder %s16, 1
      %s220 = scalar_select %p219, %s16, 1
      %s221 = smul.addr %s220, 2
      %s222 = scalar_lea.vmem %s5, %s221
      %v226 = vld [vmem:[%s0] ss:$2 sm:$0x3]
      %vm227 = vcmp.ne.s32.totalorder %v226, 0
      %v228 = vsel %vm227, 1, 0
      %v229 = vlaneseq
      %v230 = vshrl.u32 %v229, 7
      %v231 = vsub.s32 0, %v230
      %v232 = vrot.slane %v228, %v231
      %v233 = vlaneseq
      %v234 = vshrl.u32 %v233, 7
      %v235 = vsub.s32 1, %v234
      %v236 = vrot.slane %v228, %v235
      %vm237 = vcmp.eq.s32.totalorder %v232, 1
      %vm238 = vcmp.eq.s32.totalorder %v236, 1
      %s239 = scalar_lea.vmem %s0, 1
      %v240 = vld [vmem:[%s239] ss:$2 sm:$0x3]
      %vm241 = vcmp.ne.s32.totalorder %v240, 0
      %v242 = vsel %vm241, 1, 0
      %v243 = vlaneseq
      %v244 = vshrl.u32 %v243, 7
      %v245 = vsub.s32 0, %v244
      %v246 = vrot.slane %v242, %v245
      %v247 = vlaneseq
      %v248 = vshrl.u32 %v247, 7
      %v249 = vsub.s32 1, %v248
      %v250 = vrot.slane %v242, %v249
      %vm251 = vcmp.eq.s32.totalorder %v246, 1
      %vm252 = vcmp.eq.s32.totalorder %v250, 1
      %vm253 = vcmask 138240
      %254 = vst.msk [vmem:[#allocation2] sm:$0xff] %vm253, 0
      %255 = vst.msk [vmem:[#allocation2 + $0x18] sm:$0xff] %vm253, 0
      %256 = vst.msk [vmem:[#allocation2 + $0x30] sm:$0xff] %vm253, 0
      %257 = vst.msk [vmem:[#allocation2 + $0x48] sm:$0xff] %vm253, 0
      %vm258 = vcmask 277640
      %259 = vst.msk [vmem:[#allocation2 + $0x10] sm:$0xff] %vm258, 0
      %260 = vst.msk [vmem:[#allocation2 + $0x28] sm:$0xff] %vm258, 0
      %261 = vst.msk [vmem:[#allocation2 + $0x40] sm:$0xff] %vm258, 0
      %262 = vst.msk [vmem:[#allocation2 + $0x58] sm:$0xff] %vm258, 0
      %263 = vst.msk [vmem:[#allocation3] sm:$0xff] %vm253, 0
      %264 = vst.msk [vmem:[#allocation3 + $0x18] sm:$0xff] %vm253, 0
      %265 = vst.msk [vmem:[#allocation3 + $0x30] sm:$0xff] %vm253, 0
      %266 = vst.msk [vmem:[#allocation3 + $0x48] sm:$0xff] %vm253, 0
      %267 = vst.msk [vmem:[#allocation3 + $0x10] sm:$0xff] %vm258, 0
      %268 = vst.msk [vmem:[#allocation3 + $0x28] sm:$0xff] %vm258, 0
      %269 = vst.msk [vmem:[#allocation3 + $0x40] sm:$0xff] %vm258, 0
      %270 = vst.msk [vmem:[#allocation3 + $0x58] sm:$0xff] %vm258, 0
      %v271 = vld [vmem:[%s2] sm:$0xff]
      %v272 = vld [vmem:[%s2 + $0x8] sm:$0xff]
      %v273 = vld [vmem:[%s2 + $0x10] sm:$0xff]
      %v274 = vld [vmem:[%s2 + $0x18] sm:$0xff]
      %v275 = vld [vmem:[%s2 + $0x20] sm:$0xff]
      %v276 = vld [vmem:[%s2 + $0x28] sm:$0xff]
      %v277 = vld [vmem:[%s2 + $0x30] sm:$0xff]
      %v278 = vld [vmem:[%s2 + $0x38] sm:$0xff]
      %v279 = vld [vmem:[%s218] sm:$0xff]
      %v280 = vld [vmem:[%s218 + $0x8] sm:$0xff]
      %v281 = vld [vmem:[%s218 + $0x10] sm:$0x1]
      %v282 = vld [vmem:[%s218 + $0x18] sm:$0x1]
      %vm283 = vcmask 72704
      %v285 = vsel %vm283, %v271, 0
      %v288 = vsel %vm283, %v272, 0
      %v291 = vsel %vm283, %v273, 0
      %v294 = vsel %vm283, %v274, 0
      %v297 = vsel %vm283, %v275, 0
      %v300 = vsel %vm283, %v276, 0
      %v303 = vsel %vm283, %v277, 0
      %v306 = vsel %vm283, %v278, 0
      %vm308 = vcmask 1040384
      %v310 = vsel %vm308, %v281, 0
      %v313 = vsel %vm308, %v282, 0
      %315 = vmatprep.subr.mxu0 %v280
      %316 = vmatpush1.msra.mxu0 %v279
      %317 = vmatprep.subr.mxu0 %v313
      %318 = vmatpush1.msra.mxu0 %v310
      %319 = vmatprep.subr.mxu0 0.0
      %320 = vmatpush1.msra.mxu0 0.0
      %321 = vmatprep.subr.mxu0 0.0
      %322 = vmatpush1.msra.mxu0 0.0
      %323 = vmatprep.subr.mxu0 0.0
      %324 = vmatpush1.msra.mxu0 0.0
      %325 = vmatprep.subr.mxu0 0.0
      %326 = vmatpush1.msra.mxu0 0.0
      %327 = vmatprep.subr.mxu0 0.0
      %328 = vmatpush1.msra.mxu0 0.0
      %329 = vmatprep.subr.mxu0 0.0
      %330 = vmatpush1.msra.mxu0 0.0
      %331 = vmatprep.subr.mxu0 0.0
      %332 = vmatpush1.msra.mxu0 0.0
      %333 = vmatprep.subr.mxu0 0.0
      %334 = vmatpush1.msra.mxu0 0.0
      %335 = vmatprep.subr.mxu0 0.0
      %336 = vmatpush1.msra.mxu0 0.0
      %337 = vmatprep.subr.mxu0 0.0
      %338 = vmatpush1.msra.mxu0 0.0
      %339 = vmatprep.subr.mxu0 0.0
      %340 = vmatpush1.msra.mxu0 0.0
      %341 = vmatprep.subr.mxu0 0.0
      %342 = vmatpush1.msra.mxu0 0.0
      %343 = vmatprep.subr.mxu0 0.0
      %344 = vmatpush1.msra.mxu0 0.0
      %345 = vmatprep.subr.mxu0 0.0
      %346 = vmatpush1.msra.mxu0 0.0
      %347 = vmatprep.subr.mxu0 0.0
      %348 = vmatpush1.msra.mxu0 0.0
      %349 = vmatprep.subr.mxu0 0.0
      %350 = vmatpush1.msra.mxu0 0.0
      %351 = vmatprep.subr.mxu0 0.0
      %352 = vmatpush1.msra.mxu0 0.0
      %353 = vmatprep.subr.mxu0 0.0
      %354 = vmatpush1.msra.mxu0 0.0
      %355 = vmatprep.subr.mxu0 0.0
      %356 = vmatpush1.msra.mxu0 0.0
      %357 = vmatprep.subr.mxu0 0.0
      %358 = vmatpush1.msra.mxu0 0.0
      %359 = vmatprep.subr.mxu0 0.0
      %360 = vmatpush1.msra.mxu0 0.0
      %361 = vmatprep.subr.mxu0 0.0
      %362 = vmatpush1.msra.mxu0 0.0
      %363 = vmatprep.subr.mxu0 0.0
      %364 = vmatpush1.msra.mxu0 0.0
      %365 = vmatprep.subr.mxu0 0.0
      %366 = vmatpush1.msra.mxu0 0.0
      %367 = vmatprep.subr.mxu0 0.0
      %368 = vmatpush1.msra.mxu0 0.0
      %369 = vmatprep.subr.mxu0 0.0
      %370 = vmatpush1.msra.mxu0 0.0
      %371 = vmatprep.subr.mxu0 0.0
      %372 = vmatpush1.msra.mxu0 0.0
      %373 = vmatprep.subr.mxu0 0.0
      %374 = vmatpush1.msra.mxu0 0.0
      %375 = vmatprep.subr.mxu0 0.0
      %376 = vmatpush1.msra.mxu0 0.0
      %377 = vmatprep.subr.mxu0 0.0
      %378 = vmatpush1.msra.mxu0 0.0
      %379 = vmatprep.mubr.f32.mxu0 0.0
      %380 = vmatmul.mubr.f32.gmra.mrb[0].mxu0 %v285
      %v381 = vpop.f32.mrb[0].mxu0
      %v382 = vadd.f32 0.0, %v381
      %v383 = vpop.f32.mrb[0].mxu0
      %v384 = vadd.f32 0.0, %v383
      %385 = vmatprep.mubr.f32.mxu0 0.0
      %386 = vmatmul.mubr.f32.gmra.mrb[0].mxu0 %v288
      %v387 = vpop.f32.mrb[0].mxu0
      %v388 = vadd.f32 0.0, %v387
      %v389 = vpop.f32.mrb[0].mxu0
      %v390 = vadd.f32 0.0, %v389
      %391 = vmatprep.mubr.f32.mxu0 0.0
      %392 = vmatmul.mubr.f32.gmra.mrb[0].mxu0 %v291
      %v393 = vpop.f32.mrb[0].mxu0
      %v394 = vadd.f32 0.0, %v393
      %v395 = vpop.f32.mrb[0].mxu0
      %v396 = vadd.f32 0.0, %v395
      %397 = vmatprep.mubr.f32.mxu0 0.0
      %398 = vmatmul.mubr.f32.gmra.mrb[0].mxu0 %v294
      %v399 = vpop.f32.mrb[0].mxu0
      %v400 = vadd.f32 0.0, %v399
      %v401 = vpop.f32.mrb[0].mxu0
      %v402 = vadd.f32 0.0, %v401
      %403 = vmatprep.mubr.f32.mxu0 0.0
      %404 = vmatmul.mubr.f32.gmra.mrb[0].mxu0 %v297
      %v405 = vpop.f32.mrb[0].mxu0
      %v406 = vadd.f32 0.0, %v405
      %v407 = vpop.f32.mrb[0].mxu0
      %v408 = vadd.f32 0.0, %v407
      %409 = vmatprep.mubr.f32.mxu0 0.0
      %410 = vmatmul.mubr.f32.gmra.mrb[0].mxu0 %v300
      %v411 = vpop.f32.mrb[0].mxu0
      %v412 = vadd.f32 0.0, %v411
      %v413 = vpop.f32.mrb[0].mxu0
      %v414 = vadd.f32 0.0, %v413
      %415 = vmatprep.mubr.f32.mxu0 0.0
      %416 = vmatmul.mubr.f32.gmra.mrb[0].mxu0 %v303
      %v417 = vpop.f32.mrb[0].mxu0
      %v418 = vadd.f32 0.0, %v417
      %v419 = vpop.f32.mrb[0].mxu0
      %v420 = vadd.f32 0.0, %v419
      %421 = vmatprep.mubr.f32.mxu0 0.0
      %422 = vmatmul.mubr.f32.gmra.mrb[0].mxu0 %v306
      %v423 = vpop.f32.mrb[0].mxu0
      %v424 = vadd.f32 0.0, %v423
      %v425 = vpop.f32.mrb[0].mxu0
      %v426 = vadd.f32 0.0, %v425
      %427 = vdwg.mxu0
      %v428 = vmax.f32 %v382, 0.0
      %v429 = vmax.f32 %v384, 0.0
      %v430 = vmax.f32 %v388, 0.0
      %v431 = vmax.f32 %v390, 0.0
      %v432 = vmax.f32 %v394, 0.0
      %v433 = vmax.f32 %v396, 0.0
      %v434 = vmax.f32 %v400, 0.0
      %v435 = vmax.f32 %v402, 0.0
      %v436 = vmax.f32 %v406, 0.0
      %v437 = vmax.f32 %v408, 0.0
      %v438 = vmax.f32 %v412, 0.0
      %v439 = vmax.f32 %v414, 0.0
      %v440 = vmax.f32 %v418, 0.0
      %v441 = vmax.f32 %v420, 0.0
      %v442 = vmax.f32 %v424, 0.0
      %v443 = vmax.f32 %v426, 0.0
      %v444 = vpack.c.bf16 %v430, %v428
      %v445 = vpack.c.bf16 %v431, %v429
      %v446 = vpack.c.bf16 %v434, %v432
      %v447 = vpack.c.bf16 %v435, %v433
      %v448 = vpack.c.bf16 %v438, %v436
      %v449 = vpack.c.bf16 %v439, %v437
      %v450 = vpack.c.bf16 %v442, %v440
      %v451 = vpack.c.bf16 %v443, %v441
      %460 = vrot.lane.b32.xlu0 %v444, 17
      %v461 = vpop.permute.xlu0 %460
      %462 = vrot.lane.b32.xlu0 %v445, 17
      %v463 = vpop.permute.xlu0 %462
      %464 = vrot.lane.b32.xlu0 %v446, 17
      %v465 = vpop.permute.xlu0 %464
      %466 = vrot.lane.b32.xlu0 %v447, 17
      %v467 = vpop.permute.xlu0 %466
      %468 = vrot.lane.b32.xlu0 %v448, 17
      %v469 = vpop.permute.xlu0 %468
      %470 = vrot.lane.b32.xlu0 %v449, 17
      %v471 = vpop.permute.xlu0 %470
      %472 = vrot.lane.b32.xlu0 %v450, 17
      %v473 = vpop.permute.xlu0 %472
      %474 = vrot.lane.b32.xlu0 %v451, 17
      %v475 = vpop.permute.xlu0 %474
      %vm476 = vcmask 138240
      %v477 = vsel %vm476, %v461, %v463
      %v478 = vsel %vm476, %v465, %v467
      %v479 = vsel %vm476, %v469, %v471
      %v480 = vsel %vm476, %v473, %v475
      %vm493 = vcmask 1047688
      %494 = vst.msk [vmem:[#allocation2] sm:$0xff] %vm493, %v461
      %495 = vst [vmem:[#allocation2 + $0x8] sm:$0xff] %v477
      %496 = vst.msk [vmem:[#allocation2 + $0x10] sm:$0xff] %vm253, %v463
      %497 = vst.msk [vmem:[#allocation2 + $0x18] sm:$0xff] %vm493, %v465
      %498 = vst [vmem:[#allocation2 + $0x20] sm:$0xff] %v478
      %499 = vst.msk [vmem:[#allocation2 + $0x28] sm:$0xff] %vm253, %v467
      %500 = vst.msk [vmem:[#allocation2 + $0x30] sm:$0xff] %vm493, %v469
      %501 = vst [vmem:[#allocation2 + $0x38] sm:$0xff] %v479
      %502 = vst.msk [vmem:[#allocation2 + $0x40] sm:$0xff] %vm253, %v471
      %503 = vst.msk [vmem:[#allocation2 + $0x48] sm:$0xff] %vm493, %v473
      %504 = vst [vmem:[#allocation2 + $0x50] sm:$0xff] %v480
      %505 = vst.msk [vmem:[#allocation2 + $0x58] sm:$0xff] %vm253, %v475
      loop: start=0, step=1, limit=9
      $region41: #{cfsr_forward.1} parent=39 // loop_pre_header
        _
      $region42: #{cfsr_forward.1} parent=39 // loop_header
        %s507 = sphi 0, %s511
        %p508 = scmp.ge.s32.totalorder %s507, 9
      $region43: #{cfsr_forward.1} parent=39 // loop_header_branch
        %510 = sbr.rel (%p508) target = $region47
      $region44: #{cfsr_forward.1} parent=39 // loop_body
        %s512 = smul.u32 %s507, 18
        %s513 = smul.u32 %s512, 8
        %s514 = smul.addr %s513, 4
        %s515 = scalar_lea.vmem %s3, %s514
        %v516 = vld [vmem:[%s515] sm:$0xf]
        %v517 = vld [vmem:[%s515 + $0x4] sm:$0xf]
        %v518 = vld [vmem:[%s515 + $0x8] sm:$0xf]
        %v519 = vld [vmem:[%s515 + $0xc] sm:$0xf]
        %v520 = vld [vmem:[%s515 + $0x10] sm:$0xf]
        %v521 = vld [vmem:[%s515 + $0x14] sm:$0xf]
        %v522 = vld [vmem:[%s515 + $0x18] sm:$0xf]
        %v523 = vld [vmem:[%s515 + $0x1c] sm:$0xf]
        %v524 = vld [vmem:[#allocation2] sm:$0xff]
        %v525 = vld [vmem:[#allocation2 + $0x8] sm:$0xff]
        %v526 = vld [vmem:[#allocation2 + $0x18] sm:$0xff]
        %v527 = vld [vmem:[#allocation2 + $0x20] sm:$0xff]
        %v528 = vld [vmem:[#allocation2 + $0x30] sm:$0xff]
        %v529 = vld [vmem:[#allocation2 + $0x38] sm:$0xff]
        %v530 = vld [vmem:[#allocation2 + $0x48] sm:$0xff]
        %v531 = vld [vmem:[#allocation2 + $0x50] sm:$0xff]
        %vm532 = vmpackc.low %vm238, %vm237
        %v533 = vsel %vm532, 65537, 0
        %v534 = vlaneseq
        %v535 = vshrl.u32 %v534, 7
        %v536 = vsub.s32 0, %v535
        %v537 = vrot.slane %v533, %v536
        %v538 = vlaneseq
        %v539 = vshrl.u32 %v538, 7
        %v540 = vsub.s32 4, %v539
        %v541 = vrot.slane %v533, %v540
        %vm542 = vcmp.ne.s16.totalorder %v537, 0
        %vm543 = vcmp.ne.s16.totalorder %v541, 0
        %v544 = vsel %vm542, %v524, 0
        %v545 = vsel %vm543, %v525, 0
        %v546 = vsel %vm542, %v526, 0
        %v547 = vsel %vm543, %v527, 0
        %v548 = vsel %vm542, %v528, 0
        %v549 = vsel %vm543, %v529, 0
        %v550 = vsel %vm542, %v530, 0
        %v551 = vsel %vm543, %v531, 0
        %s552 = sadd.s32 %s512, 1
        %s553 = smul.u32 %s552, 8
        %s554 = smul.addr %s553, 4
        %s555 = scalar_lea.vmem %s3, %s554
        %v556 = vld [vmem:[%s555] sm:$0xf]
        %v557 = vld [vmem:[%s555 + $0x4] sm:$0xf]
        %v558 = vld [vmem:[%s555 + $0x8] sm:$0xf]
        %v559 = vld [vmem:[%s555 + $0xc] sm:$0xf]
        %v560 = vld [vmem:[%s555 + $0x10] sm:$0xf]
        %v561 = vld [vmem:[%s555 + $0x14] sm:$0xf]
        %v562 = vld [vmem:[%s555 + $0x18] sm:$0xf]
        %v563 = vld [vmem:[%s555 + $0x1c] sm:$0xf]
        %v564 = vld [vmem:[#allocation2 + $0x10] sm:$0xff]
        %v565 = vld [vmem:[#allocation2 + $0x28] sm:$0xff]
        %v566 = vld [vmem:[#allocation2 + $0x40] sm:$0xff]
        %v567 = vld [vmem:[#allocation2 + $0x58] sm:$0xff]
        %v576 = vunpack.c.l.b16 %v556
        %v577 = vunpack.c.l.b16 %v557
        %v578 = vunpack.c.l.b16 %v558
        %v579 = vunpack.c.l.b16 %v559
        %v580 = vunpack.c.l.b16 %v560
        %v581 = vunpack.c.l.b16 %v561
        %v582 = vunpack.c.l.b16 %v562
        %v583 = vunpack.c.l.b16 %v563
        %v584 = vpack.c.b16 %v577, %v576
        %v585 = vpack.c.b16 %v579, %v578
        %v586 = vpack.c.b16 %v581, %v580
        %v587 = vpack.c.b16 %v583, %v582
        %600 = vrot.lane.b32.xlu0 %v524, 127
        %v601 = vpop.permute.xlu0 %600
        %602 = vrot.lane.b32.xlu0 %v525, 127
        %v603 = vpop.permute.xlu0 %602
        %604 = vrot.lane.b32.xlu0 %v564, 127
        %v605 = vpop.permute.xlu0 %604
        %606 = vrot.lane.b32.xlu0 %v526, 127
        %v607 = vpop.permute.xlu0 %606
        %608 = vrot.lane.b32.xlu0 %v527, 127
        %v609 = vpop.permute.xlu0 %608
        %610 = vrot.lane.b32.xlu0 %v565, 127
        %v611 = vpop.permute.xlu0 %610
        %612 = vrot.lane.b32.xlu0 %v528, 127
        %v613 = vpop.permute.xlu0 %612
        %614 = vrot.lane.b32.xlu0 %v529, 127
        %v615 = vpop.permute.xlu0 %614
        %616 = vrot.lane.b32.xlu0 %v566, 127
        %v617 = vpop.permute.xlu0 %616
        %618 = vrot.lane.b32.xlu0 %v530, 127
        %v619 = vpop.permute.xlu0 %618
        %620 = vrot.lane.b32.xlu0 %v531, 127
        %v621 = vpop.permute.xlu0 %620
        %622 = vrot.lane.b32.xlu0 %v567, 127
        %v623 = vpop.permute.xlu0 %622
        %vm624 = vcmask 1039360
        %v625 = vsel %vm624, %v601, %v603
        %v626 = vsel %vm624, %v603, %v605
        %v627 = vsel %vm624, %v607, %v609
        %v628 = vsel %vm624, %v609, %v611
        %v629 = vsel %vm624, %v613, %v615
        %v630 = vsel %vm624, %v615, %v617
        %v631 = vsel %vm624, %v619, %v621
        %v632 = vsel %vm624, %v621, %v623
        %vm641 = vcmask 523264
        %v643 = vsel %vm641, %v584, 0
        %v646 = vsel %vm641, %v585, 0
        %v649 = vsel %vm641, %v586, 0
        %v652 = vsel %vm641, %v587, 0
        %654 = vmatprep.subr.bf16.mxu0 %v626
        %655 = vmatpush1.bf16.msra.mxu0 %v625
        %656 = vmatprep.subr.bf16.mxu0 %v628
        %657 = vmatpush1.bf16.msra.mxu0 %v627
        %658 = vmatprep.subr.bf16.mxu0 %v630
        %659 = vmatpush1.bf16.msra.mxu0 %v629
        %660 = vmatprep.subr.bf16.mxu0 %v632
        %661 = vmatpush1.bf16.msra.mxu0 %v631
        %662 = vmatprep.subr.bf16.mxu0 0
        %663 = vmatpush1.bf16.msra.mxu0 0
        %664 = vmatprep.subr.bf16.mxu0 0
        %665 = vmatpush1.bf16.msra.mxu0 0
        %666 = vmatprep.subr.bf16.mxu0 0
        %667 = vmatpush1.bf16.msra.mxu0 0
        %668 = vmatprep.subr.bf16.mxu0 0
        %669 = vmatpush1.bf16.msra.mxu0 0
        %670 = vmatprep.subr.bf16.mxu0 0
        %671 = vmatpush1.bf16.msra.mxu0 0
        %672 = vmatprep.subr.bf16.mxu0 0
        %673 = vmatpush1.bf16.msra.mxu0 0
        %674 = vmatprep.subr.bf16.mxu0 0
        %675 = vmatpush1.bf16.msra.mxu0 0
        %676 = vmatprep.subr.bf16.mxu0 0
        %677 = vmatpush1.bf16.msra.mxu0 0
        %678 = vmatprep.subr.bf16.mxu0 0
        %679 = vmatpush1.bf16.msra.mxu0 0
        %680 = vmatprep.subr.bf16.mxu0 0
        %681 = vmatpush1.bf16.msra.mxu0 0
        %682 = vmatprep.subr.bf16.mxu0 0
        %683 = vmatpush1.bf16.msra.mxu0 0
        %684 = vmatprep.subr.bf16.mxu0 0
        %685 = vmatpush1.bf16.msra.mxu0 0
        %686 = vmatprep.mubr.bf16.mxu0 0
        %687 = vmatmul.mubr.bf16.gmra.mrb[0].mxu0 %v643
        %v688 = vpop.f32.mrb[0].mxu0
        %v689 = vadd.f32 0.0, %v688
        %v690 = vpop.f32.mrb[0].mxu0
        %v691 = vadd.f32 0.0, %v690
        %v692 = vpop.f32.mrb[0].mxu0
        %v693 = vadd.f32 0.0, %v692
        %v694 = vpop.f32.mrb[0].mxu0
        %v695 = vadd.f32 0.0, %v694
        %696 = vmatprep.mubr.bf16.mxu0 0
        %697 = vmatmul.mubr.bf16.gmra.mrb[0].mxu0 %v646
        %v698 = vpop.f32.mrb[0].mxu0
        %v699 = vadd.f32 0.0, %v698
        %v700 = vpop.f32.mrb[0].mxu0
        %v701 = vadd.f32 0.0, %v700
        %v702 = vpop.f32.mrb[0].mxu0
        %v703 = vadd.f32 0.0, %v702
        %v704 = vpop.f32.mrb[0].mxu0
        %v705 = vadd.f32 0.0, %v704
        %706 = vmatprep.mubr.bf16.mxu0 0
        %707 = vmatmul.mubr.bf16.gmra.mrb[0].mxu0 %v649
        %v708 = vpop.f32.mrb[0].mxu0
        %v709 = vadd.f32 0.0, %v708
        %v710 = vpop.f32.mrb[0].mxu0
        %v711 = vadd.f32 0.0, %v710
        %v712 = vpop.f32.mrb[0].mxu0
        %v713 = vadd.f32 0.0, %v712
        %v714 = vpop.f32.mrb[0].mxu0
        %v715 = vadd.f32 0.0, %v714
        %716 = vmatprep.mubr.bf16.mxu0 0
        %717 = vmatmul.mubr.bf16.gmra.mrb[0].mxu0 %v652
        %v718 = vpop.f32.mrb[0].mxu0
        %v719 = vadd.f32 0.0, %v718
        %v720 = vpop.f32.mrb[0].mxu0
        %v721 = vadd.f32 0.0, %v720
        %v722 = vpop.f32.mrb[0].mxu0
        %v723 = vadd.f32 0.0, %v722
        %v724 = vpop.f32.mrb[0].mxu0
        %v725 = vadd.f32 0.0, %v724
        %726 = vdwg.mxu0
        %v735 = vunpack.c.l.b16 %v516
        %v736 = vunpack.c.l.b16 %v517
        %v737 = vunpack.c.l.b16 %v518
        %v738 = vunpack.c.l.b16 %v519
        %v739 = vunpack.c.l.b16 %v520
        %v740 = vunpack.c.l.b16 %v521
        %v741 = vunpack.c.l.b16 %v522
        %v742 = vunpack.c.l.b16 %v523
        %v743 = vpack.c.b16 %v736, %v735
        %v744 = vpack.c.b16 %v738, %v737
        %v745 = vpack.c.b16 %v740, %v739
        %v746 = vpack.c.b16 %v742, %v741
        %v748 = vsel %vm641, %v743, 0
        %v751 = vsel %vm641, %v744, 0
        %v754 = vsel %vm641, %v745, 0
        %v757 = vsel %vm641, %v746, 0
        %759 = vmatprep.subr.bf16.mxu0 %v545
        %760 = vmatpush1.bf16.msra.mxu0 %v544
        %761 = vmatprep.subr.bf16.mxu0 %v547
        %762 = vmatpush1.bf16.msra.mxu0 %v546
        %763 = vmatprep.subr.bf16.mxu0 %v549
        %764 = vmatpush1.bf16.msra.mxu0 %v548
        %765 = vmatprep.subr.bf16.mxu0 %v551
        %766 = vmatpush1.bf16.msra.mxu0 %v550
        %767 = vmatprep.subr.bf16.mxu0 0
        %768 = vmatpush1.bf16.msra.mxu0 0
        %769 = vmatprep.subr.bf16.mxu0 0
        %770 = vmatpush1.bf16.msra.mxu0 0
        %771 = vmatprep.subr.bf16.mxu0 0
        %772 = vmatpush1.bf16.msra.mxu0 0
        %773 = vmatprep.subr.bf16.mxu0 0
        %774 = vmatpush1.bf16.msra.mxu0 0
        %775 = vmatprep.subr.bf16.mxu0 0
        %776 = vmatpush1.bf16.msra.mxu0 0
        %777 = vmatprep.subr.bf16.mxu0 0
        %778 = vmatpush1.bf16.msra.mxu0 0
        %779 = vmatprep.subr.bf16.mxu0 0
        %780 = vmatpush1.bf16.msra.mxu0 0
        %781 = vmatprep.subr.bf16.mxu0 0
        %782 = vmatpush1.bf16.msra.mxu0 0
        %783 = vmatprep.subr.bf16.mxu0 0
        %784 = vmatpush1.bf16.msra.mxu0 0
        %785 = vmatprep.subr.bf16.mxu0 0
        %786 = vmatpush1.bf16.msra.mxu0 0
        %787 = vmatprep.subr.bf16.mxu0 0
        %788 = vmatpush1.bf16.msra.mxu0 0
        %789 = vmatprep.subr.bf16.mxu0 0
        %790 = vmatpush1.bf16.msra.mxu0 0
        %791 = vmatprep.mubr.bf16.mxu0 0
        %792 = vmatmul.mubr.bf16.gmra.mrb[0].mxu0 %v748
        %v793 = vpop.f32.mrb[0].mxu0
        %v794 = vadd.f32 %v689, %v793
        %v795 = vpop.f32.mrb[0].mxu0
        %v796 = vadd.f32 %v691, %v795
        %v797 = vpop.f32.mrb[0].mxu0
        %v798 = vadd.f32 %v693, %v797
        %v799 = vpop.f32.mrb[0].mxu0
        %v800 = vadd.f32 %v695, %v799
        %801 = vmatprep.mubr.bf16.mxu0 0
        %802 = vmatmul.mubr.bf16.gmra.mrb[0].mxu0 %v751
        %v803 = vpop.f32.mrb[0].mxu0
        %v804 = vadd.f32 %v699, %v803
        %v805 = vpop.f32.mrb[0].mxu0
        %v806 = vadd.f32 %v701, %v805
        %v807 = vpop.f32.mrb[0].mxu0
        %v808 = vadd.f32 %v703, %v807
        %v809 = vpop.f32.mrb[0].mxu0
        %v810 = vadd.f32 %v705, %v809
        %811 = vmatprep.mubr.bf16.mxu0 0
        %812 = vmatmul.mubr.bf16.gmra.mrb[0].mxu0 %v754
        %v813 = vpop.f32.mrb[0].mxu0
        %v814 = vadd.f32 %v709, %v813
        %v815 = vpop.f32.mrb[0].mxu0
        %v816 = vadd.f32 %v711, %v815
        %v817 = vpop.f32.mrb[0].mxu0
        %v818 = vadd.f32 %v713, %v817
        %v819 = vpop.f32.mrb[0].mxu0
        %v820 = vadd.f32 %v715, %v819
        %821 = vmatprep.mubr.bf16.mxu0 0
        %822 = vmatmul.mubr.bf16.gmra.mrb[0].mxu0 %v757
        %v823 = vpop.f32.mrb[0].mxu0
        %v824 = vadd.f32 %v719, %v823
        %v825 = vpop.f32.mrb[0].mxu0
        %v826 = vadd.f32 %v721, %v825
        %v827 = vpop.f32.mrb[0].mxu0
        %v828 = vadd.f32 %v723, %v827
        %v829 = vpop.f32.mrb[0].mxu0
        %v830 = vadd.f32 %v725, %v829
        %831 = vdwg.mxu0
        %s832 = sadd.s32 %s512, 2
        %s833 = smul.u32 %s832, 8
        %s834 = smul.addr %s833, 4
        %s835 = scalar_lea.vmem %s3, %s834
        %v836 = vld [vmem:[%s835] sm:$0xf]
        %v837 = vld [vmem:[%s835 + $0x4] sm:$0xf]
        %v838 = vld [vmem:[%s835 + $0x8] sm:$0xf]
        %v839 = vld [vmem:[%s835 + $0xc] sm:$0xf]
        %v840 = vld [vmem:[%s835 + $0x10] sm:$0xf]
        %v841 = vld [vmem:[%s835 + $0x14] sm:$0xf]
        %v842 = vld [vmem:[%s835 + $0x18] sm:$0xf]
        %v843 = vld [vmem:[%s835 + $0x1c] sm:$0xf]
        %vm844 = vmpackc.low %vm252, %vm251
        %v845 = vsel %vm844, 65537, 0
        %v846 = vlaneseq
        %v847 = vshrl.u32 %v846, 7
        %v848 = vsub.s32 0, %v847
        %v849 = vrot.slane %v845, %v848
        %v850 = vlaneseq
        %v851 = vshrl.u32 %v850, 7
        %v852 = vsub.s32 4, %v851
        %v853 = vrot.slane %v845, %v852
        %854 = vrot.lane.b32.xlu0 %v849, 2
        %v855 = vpop.permute.xlu0 %854
        %856 = vrot.lane.b32.xlu0 %v853, 2
        %v857 = vpop.permute.xlu0 %856
        %vm858 = vcmask 15360
        %v859 = vsel %vm858, %v855, %v857
        %vm860 = vcmp.ne.s16.totalorder %v855, 0
        %vm861 = vcmp.ne.s16.totalorder %v859, 0
        %vm862 = vcmp.ne.s16.totalorder %v857, 0
        %v863 = vsel %vm860, %v524, 0
        %v864 = vsel %vm861, %v525, 0
        %v865 = vsel %vm862, %v564, 0
        %v866 = vsel %vm860, %v526, 0
        %v867 = vsel %vm861, %v527, 0
        %v868 = vsel %vm862, %v565, 0
        %v869 = vsel %vm860, %v528, 0
        %v870 = vsel %vm861, %v529, 0
        %v871 = vsel %vm862, %v566, 0
        %v872 = vsel %vm860, %v530, 0
        %v873 = vsel %vm861, %v531, 0
        %v874 = vsel %vm862, %v567, 0
        %v883 = vunpack.c.l.b16 %v836
        %v884 = vunpack.c.l.b16 %v837
        %v885 = vunpack.c.l.b16 %v838
        %v886 = vunpack.c.l.b16 %v839
        %v887 = vunpack.c.l.b16 %v840
        %v888 = vunpack.c.l.b16 %v841
        %v889 = vunpack.c.l.b16 %v842
        %v890 = vunpack.c.l.b16 %v843
        %v891 = vpack.c.b16 %v884, %v883
        %v892 = vpack.c.b16 %v886, %v885
        %v893 = vpack.c.b16 %v888, %v887
        %v894 = vpack.c.b16 %v890, %v889
        %907 = vrot.lane.b32.xlu0 %v863, 126
        %v908 = vpop.permute.xlu0 %907
        %909 = vrot.lane.b32.xlu0 %v864, 126
        %v910 = vpop.permute.xlu0 %909
        %911 = vrot.lane.b32.xlu0 %v865, 126
        %v912 = vpop.permute.xlu0 %911
        %913 = vrot.lane.b32.xlu0 %v866, 126
        %v914 = vpop.permute.xlu0 %913
        %915 = vrot.lane.b32.xlu0 %v867, 126
        %v916 = vpop.permute.xlu0 %915
        %917 = vrot.lane.b32.xlu0 %v868, 126
        %v918 = vpop.permute.xlu0 %917
        %919 = vrot.lane.b32.xlu0 %v869, 126
        %v920 = vpop.permute.xlu0 %919
        %921 = vrot.lane.b32.xlu0 %v870, 126
        %v922 = vpop.permute.xlu0 %921
        %923 = vrot.lane.b32.xlu0 %v871, 126
        %v924 = vpop.permute.xlu0 %923
        %925 = vrot.lane.b32.xlu0 %v872, 126
        %v926 = vpop.permute.xlu0 %925
        %927 = vrot.lane.b32.xlu0 %v873, 126
        %v928 = vpop.permute.xlu0 %927
        %929 = vrot.lane.b32.xlu0 %v874, 126
        %v930 = vpop.permute.xlu0 %929
        %vm931 = vcmask 1031168
        %v932 = vsel %vm931, %v908, %v910
        %v933 = vsel %vm931, %v910, %v912
        %v934 = vsel %vm931, %v914, %v916
        %v935 = vsel %vm931, %v916, %v918
        %v936 = vsel %vm931, %v920, %v922
        %v937 = vsel %vm931, %v922, %v924
        %v938 = vsel %vm931, %v926, %v928
        %v939 = vsel %vm931, %v928, %v930
        %v949 = vsel %vm641, %v891, 0
        %v952 = vsel %vm641, %v892, 0
        %v955 = vsel %vm641, %v893, 0
        %v958 = vsel %vm641, %v894, 0
        %960 = vmatprep.subr.bf16.mxu0 %v933
        %961 = vmatpush1.bf16.msra.mxu0 %v932
        %962 = vmatprep.subr.bf16.mxu0 %v935
        %963 = vmatpush1.bf16.msra.mxu0 %v934
        %964 = vmatprep.subr.bf16.mxu0 %v937
        %965 = vmatpush1.bf16.msra.mxu0 %v936
        %966 = vmatprep.subr.bf16.mxu0 %v939
        %967 = vmatpush1.bf16.msra.mxu0 %v938
        %968 = vmatprep.subr.bf16.mxu0 0
        %969 = vmatpush1.bf16.msra.mxu0 0
        %970 = vmatprep.subr.bf16.mxu0 0
        %971 = vmatpush1.bf16.msra.mxu0 0
        %972 = vmatprep.subr.bf16.mxu0 0
        %973 = vmatpush1.bf16.msra.mxu0 0
        %974 = vmatprep.subr.bf16.mxu0 0
        %975 = vmatpush1.bf16.msra.mxu0 0
        %976 = vmatprep.subr.bf16.mxu0 0
        %977 = vmatpush1.bf16.msra.mxu0 0
        %978 = vmatprep.subr.bf16.mxu0 0
        %979 = vmatpush1.bf16.msra.mxu0 0
        %980 = vmatprep.subr.bf16.mxu0 0
        %981 = vmatpush1.bf16.msra.mxu0 0
        %982 = vmatprep.subr.bf16.mxu0 0
        %983 = vmatpush1.bf16.msra.mxu0 0
        %984 = vmatprep.subr.bf16.mxu0 0
        %985 = vmatpush1.bf16.msra.mxu0 0
        %986 = vmatprep.subr.bf16.mxu0 0
        %987 = vmatpush1.bf16.msra.mxu0 0
        %988 = vmatprep.subr.bf16.mxu0 0
        %989 = vmatpush1.bf16.msra.mxu0 0
        %990 = vmatprep.subr.bf16.mxu0 0
        %991 = vmatpush1.bf16.msra.mxu0 0
        %992 = vmatprep.mubr.bf16.mxu0 0
        %993 = vmatmul.mubr.bf16.gmra.mrb[0].mxu0 %v949
        %v994 = vpop.f32.mrb[0].mxu0
        %v995 = vadd.f32 0.0, %v994
        %v996 = vpop.f32.mrb[0].mxu0
        %v997 = vadd.f32 0.0, %v996
        %v998 = vpop.f32.mrb[0].mxu0
        %v999 = vadd.f32 0.0, %v998
        %v1000 = vpop.f32.mrb[0].mxu0
        %v1001 = vadd.f32 0.0, %v1000
        %1002 = vmatprep.mubr.bf16.mxu0 0
        %1003 = vmatmul.mubr.bf16.gmra.mrb[0].mxu0 %v952
        %v1004 = vpop.f32.mrb[0].mxu0
        %v1005 = vadd.f32 0.0, %v1004
        %v1006 = vpop.f32.mrb[0].mxu0
        %v1007 = vadd.f32 0.0, %v1006
        %v1008 = vpop.f32.mrb[0].mxu0
        %v1009 = vadd.f32 0.0, %v1008
        %v1010 = vpop.f32.mrb[0].mxu0
        %v1011 = vadd.f32 0.0, %v1010
        %1012 = vmatprep.mubr.bf16.mxu0 0
        %1013 = vmatmul.mubr.bf16.gmra.mrb[0].mxu0 %v955
        %v1014 = vpop.f32.mrb[0].mxu0
        %v1015 = vadd.f32 0.0, %v1014
        %v1016 = vpop.f32.mrb[0].mxu0
        %v1017 = vadd.f32 0.0, %v1016
        %v1018 = vpop.f32.mrb[0].mxu0
        %v1019 = vadd.f32 0.0, %v1018
        %v1020 = vpop.f32.mrb[0].mxu0
        %v1021 = vadd.f32 0.0, %v1020
        %1022 = vmatprep.mubr.bf16.mxu0 0
        %1023 = vmatmul.mubr.bf16.gmra.mrb[0].mxu0 %v958
        %v1024 = vpop.f32.mrb[0].mxu0
        %v1025 = vadd.f32 0.0, %v1024
        %v1026 = vpop.f32.mrb[0].mxu0
        %v1027 = vadd.f32 0.0, %v1026
        %v1028 = vpop.f32.mrb[0].mxu0
        %v1029 = vadd.f32 0.0, %v1028
        %v1030 = vpop.f32.mrb[0].mxu0
        %v1031 = vadd.f32 0.0, %v1030
        %1032 = vdwg.mxu0
        %v1033 = vadd.f32 %v794, %v995
        %v1034 = vadd.f32 %v796, %v997
        %v1035 = vadd.f32 %v798, %v999
        %v1036 = vadd.f32 %v800, %v1001
        %v1037 = vadd.f32 %v804, %v1005
        %v1038 = vadd.f32 %v806, %v1007
        %v1039 = vadd.f32 %v808, %v1009
        %v1040 = vadd.f32 %v810, %v1011
        %v1041 = vadd.f32 %v814, %v1015
        %v1042 = vadd.f32 %v816, %v1017
        %v1043 = vadd.f32 %v818, %v1019
        %v1044 = vadd.f32 %v820, %v1021
        %v1045 = vadd.f32 %v824, %v1025
        %v1046 = vadd.f32 %v826, %v1027
        %v1047 = vadd.f32 %v828, %v1029
        %v1048 = vadd.f32 %v830, %v1031
        %s1049 = sadd.s32 %s512, 3
        %s1050 = smul.u32 %s1049, 8
        %s1051 = smul.addr %s1050, 4
        %s1052 = scalar_lea.vmem %s3, %s1051
        %v1053 = vld [vmem:[%s1052] sm:$0xf]
        %v1054 = vld [vmem:[%s1052 + $0x4] sm:$0xf]
        %v1055 = vld [vmem:[%s1052 + $0x8] sm:$0xf]
        %v1056 = vld [vmem:[%s1052 + $0xc] sm:$0xf]
        %v1057 = vld [vmem:[%s1052 + $0x10] sm:$0xf]
        %v1058 = vld [vmem:[%s1052 + $0x14] sm:$0xf]
        %v1059 = vld [vmem:[%s1052 + $0x18] sm:$0xf]
        %v1060 = vld [vmem:[%s1052 + $0x1c] sm:$0xf]
        %1061 = vrot.lane.b32.xlu0 %v537, 16
        %v1062 = vpop.permute.xlu0 %1061
        %1063 = vrot.lane.b32.xlu0 %v541, 16
        %v1064 = vpop.permute.xlu0 %1063
        %vm1065 = vcmask 130048
        %v1066 = vsel %vm1065, %v1062, %v1064
        %vm1067 = vcmp.ne.s16.totalorder %v1062, 0
        %vm1068 = vcmp.ne.s16.totalorder %v1066, 0
        %vm1069 = vcmp.ne.s16.totalorder %v1064, 0
        %v1070 = vsel %vm1067, %v524, 0
        %v1071 = vsel %vm1068, %v525, 0
        %v1072 = vsel %vm1069, %v564, 0
        %v1073 = vsel %vm1067, %v526, 0
        %v1074 = vsel %vm1068, %v527, 0
        %v1075 = vsel %vm1069, %v565, 0
        %v1076 = vsel %vm1067, %v528, 0
        %v1077 = vsel %vm1068, %v529, 0
        %v1078 = vsel %vm1069, %v566, 0
        %v1079 = vsel %vm1067, %v530, 0
        %v1080 = vsel %vm1068, %v531, 0
        %v1081 = vsel %vm1069, %v567, 0
        %v1090 = vunpack.c.l.b16 %v1053
        %v1091 = vunpack.c.l.b16 %v1054
        %v1092 = vunpack.c.l.b16 %v1055
        %v1093 = vunpack.c.l.b16 %v1056
        %v1094 = vunpack.c.l.b16 %v1057
        %v1095 = vunpack.c.l.b16 %v1058
        %v1096 = vunpack.c.l.b16 %v1059
        %v1097 = vunpack.c.l.b16 %v1060
        %v1098 = vpack.c.b16 %v1091, %v1090
        %v1099 = vpack.c.b16 %v1093, %v1092
        %v1100 = vpack.c.b16 %v1095, %v1094
        %v1101 = vpack.c.b16 %v1097, %v1096
        %1114 = vrot.lane.b32.xlu0 %v1070, 112
        %v1115 = vpop.permute.xlu0 %1114
        %1116 = vrot.lane.b32.xlu0 %v1071, 112
        %v1117 = vpop.permute.xlu0 %1116
        %1118 = vrot.lane.b32.xlu0 %v1072, 112
        %v1119 = vpop.permute.xlu0 %1118
        %1120 = vrot.lane.b32.xlu0 %v1073, 112
        %v1121 = vpop.permute.xlu0 %1120
        %1122 = vrot.lane.b32.xlu0 %v1074, 112
        %v1123 = vpop.permute.xlu0 %1122
        %1124 = vrot.lane.b32.xlu0 %v1075, 112
        %v1125 = vpop.permute.xlu0 %1124
        %1126 = vrot.lane.b32.xlu0 %v1076, 112
        %v1127 = vpop.permute.xlu0 %1126
        %1128 = vrot.lane.b32.xlu0 %v1077, 112
        %v1129 = vpop.permute.xlu0 %1128
        %1130 = vrot.lane.b32.xlu0 %v1078, 112
        %v1131 = vpop.permute.xlu0 %1130
        %1132 = vrot.lane.b32.xlu0 %v1079, 112
        %v1133 = vpop.permute.xlu0 %1132
        %1134 = vrot.lane.b32.xlu0 %v1080, 112
        %v1135 = vpop.permute.xlu0 %1134
        %1136 = vrot.lane.b32.xlu0 %v1081, 112
        %v1137 = vpop.permute.xlu0 %1136
        %vm1138 = vcmask 916480
        %v1139 = vsel %vm1138, %v1115, %v1117
        %v1140 = vsel %vm1138, %v1117, %v1119
        %v1141 = vsel %vm1138, %v1121, %v1123
        %v1142 = vsel %vm1138, %v1123, %v1125
        %v1143 = vsel %vm1138, %v1127, %v1129
        %v1144 = vsel %vm1138, %v1129, %v1131
        %v1145 = vsel %vm1138, %v1133, %v1135
        %v1146 = vsel %vm1138, %v1135, %v1137
        %v1156 = vsel %vm641, %v1098, 0
        %v1159 = vsel %vm641, %v1099, 0
        %v1162 = vsel %vm641, %v1100, 0
        %v1165 = vsel %vm641, %v1101, 0
        %1167 = vmatprep.subr.bf16.mxu0 %v1140
        %1168 = vmatpush1.bf16.msra.mxu0 %v1139
        %1169 = vmatprep.subr.bf16.mxu0 %v1142
        %1170 = vmatpush1.bf16.msra.mxu0 %v1141
        %1171 = vmatprep.subr.bf16.mxu0 %v1144
        %1172 = vmatpush1.bf16.msra.mxu0 %v1143
        %1173 = vmatprep.subr.bf16.mxu0 %v1146
        %1174 = vmatpush1.bf16.msra.mxu0 %v1145
        %1175 = vmatprep.subr.bf16.mxu0 0
        %1176 = vmatpush1.bf16.msra.mxu0 0
        %1177 = vmatprep.subr.bf16.mxu0 0
        %1178 = vmatpush1.bf16.msra.mxu0 0
        %1179 = vmatprep.subr.bf16.mxu0 0
        %1180 = vmatpush1.bf16.msra.mxu0 0
        %1181 = vmatprep.subr.bf16.mxu0 0
        %1182 = vmatpush1.bf16.msra.mxu0 0
        %1183 = vmatprep.subr.bf16.mxu0 0
        %1184 = vmatpush1.bf16.msra.mxu0 0
        %1185 = vmatprep.subr.bf16.mxu0 0
        %1186 = vmatpush1.bf16.msra.mxu0 0
        %1187 = vmatprep.subr.bf16.mxu0 0
        %1188 = vmatpush1.bf16.msra.mxu0 0
        %1189 = vmatprep.subr.bf16.mxu0 0
        %1190 = vmatpush1.bf16.msra.mxu0 0
        %1191 = vmatprep.subr.bf16.mxu0 0
        %1192 = vmatpush1.bf16.msra.mxu0 0
        %1193 = vmatprep.subr.bf16.mxu0 0
        %1194 = vmatpush1.bf16.msra.mxu0 0
        %1195 = vmatprep.subr.bf16.mxu0 0
        %1196 = vmatpush1.bf16.msra.mxu0 0
        %1197 = vmatprep.subr.bf16.mxu0 0
        %1198 = vmatpush1.bf16.msra.mxu0 0
        %1199 = vmatprep.mubr.bf16.mxu0 0
        %1200 = vmatmul.mubr.bf16.gmra.mrb[0].mxu0 %v1156
        %v1201 = vpop.f32.mrb[0].mxu0
        %v1202 = vadd.f32 0.0, %v1201
        %v1203 = vpop.f32.mrb[0].mxu0
        %v1204 = vadd.f32 0.0, %v1203
        %v1205 = vpop.f32.mrb[0].mxu0
        %v1206 = vadd.f32 0.0, %v1205
        %v1207 = vpop.f32.mrb[0].mxu0
        %v1208 = vadd.f32 0.0, %v1207
        %1209 = vmatprep.mubr.bf16.mxu0 0
        %1210 = vmatmul.mubr.bf16.gmra.mrb[0].mxu0 %v1159
        %v1211 = vpop.f32.mrb[0].mxu0
        %v1212 = vadd.f32 0.0, %v1211
        %v1213 = vpop.f32.mrb[0].mxu0
        %v1214 = vadd.f32 0.0, %v1213
        %v1215 = vpop.f32.mrb[0].mxu0
        %v1216 = vadd.f32 0.0, %v1215
        %v1217 = vpop.f32.mrb[0].mxu0
        %v1218 = vadd.f32 0.0, %v1217
        %1219 = vmatprep.mubr.bf16.mxu0 0
        %1220 = vmatmul.mubr.bf16.gmra.mrb[0].mxu0 %v1162
        %v1221 = vpop.f32.mrb[0].mxu0
        %v1222 = vadd.f32 0.0, %v1221
        %v1223 = vpop.f32.mrb[0].mxu0
        %v1224 = vadd.f32 0.0, %v1223
        %v1225 = vpop.f32.mrb[0].mxu0
        %v1226 = vadd.f32 0.0, %v1225
        %v1227 = vpop.f32.mrb[0].mxu0
        %v1228 = vadd.f32 0.0, %v1227
        %1229 = vmatprep.mubr.bf16.mxu0 0
        %1230 = vmatmul.mubr.bf16.gmra.mrb[0].mxu0 %v1165
        %v1231 = vpop.f32.mrb[0].mxu0
        %v1232 = vadd.f32 0.0, %v1231
        %v1233 = vpop.f32.mrb[0].mxu0
        %v1234 = vadd.f32 0.0, %v1233
        %v1235 = vpop.f32.mrb[0].mxu0
        %v1236 = vadd.f32 0.0, %v1235
        %v1237 = vpop.f32.mrb[0].mxu0
        %v1238 = vadd.f32 0.0, %v1237
        %1239 = vdwg.mxu0
        %v1240 = vadd.f32 %v1033, %v1202
        %v1241 = vadd.f32 %v1034, %v1204
        %v1242 = vadd.f32 %v1035, %v1206
        %v1243 = vadd.f32 %v1036, %v1208
        %v1244 = vadd.f32 %v1037, %v1212
        %v1245 = vadd.f32 %v1038, %v1214
        %v1246 = vadd.f32 %v1039, %v1216
        %v1247 = vadd.f32 %v1040, %v1218
        %v1248 = vadd.f32 %v1041, %v1222
        %v1249 = vadd.f32 %v1042, %v1224
        %v1250 = vadd.f32 %v1043, %v1226
        %v1251 = vadd.f32 %v1044, %v1228
        %v1252 = vadd.f32 %v1045, %v1232
        %v1253 = vadd.f32 %v1046, %v1234
        %v1254 = vadd.f32 %v1047, %v1236
        %v1255 = vadd.f32 %v1048, %v1238
        %s1256 = sadd.s32 %s512, 4
        %s1257 = smul.u32 %s1256, 8
        %s1258 = smul.addr %s1257, 4
        %s1259 = scalar_lea.vmem %s3, %s1258
        %v1260 = vld [vmem:[%s1259] sm:$0xf]
        %v1261 = vld [vmem:[%s1259 + $0x4] sm:$0xf]
        %v1262 = vld [vmem:[%s1259 + $0x8] sm:$0xf]
        %v1263 = vld [vmem:[%s1259 + $0xc] sm:$0xf]
        %v1264 = vld [vmem:[%s1259 + $0x10] sm:$0xf]
        %v1265 = vld [vmem:[%s1259 + $0x14] sm:$0xf]
        %v1266 = vld [vmem:[%s1259 + $0x18] sm:$0xf]
        %v1267 = vld [vmem:[%s1259 + $0x1c] sm:$0xf]
        %v1276 = vunpack.c.l.b16 %v1260
        %v1277 = vunpack.c.l.b16 %v1261
        %v1278 = vunpack.c.l.b16 %v1262
        %v1279 = vunpack.c.l.b16 %v1263
        %v1280 = vunpack.c.l.b16 %v1264
        %v1281 = vunpack.c.l.b16 %v1265
        %v1282 = vunpack.c.l.b16 %v1266
        %v1283 = vunpack.c.l.b16 %v1267
        %v1284 = vpack.c.b16 %v1277, %v1276
        %v1285 = vpack.c.b16 %v1279, %v1278
        %v1286 = vpack.c.b16 %v1281, %v1280
        %v1287 = vpack.c.b16 %v1283, %v1282
        %1288 = vrot.lane.b32.xlu0 %v524, 111
        %v1289 = vpop.permute.xlu0 %1288
        %1290 = vrot.lane.b32.xlu0 %v525, 111
        %v1291 = vpop.permute.xlu0 %1290
        %1292 = vrot.lane.b32.xlu0 %v564, 111
        %v1293 = vpop.permute.xlu0 %1292
        %1294 = vrot.lane.b32.xlu0 %v526, 111
        %v1295 = vpop.permute.xlu0 %1294
        %1296 = vrot.lane.b32.xlu0 %v527, 111
        %v1297 = vpop.permute.xlu0 %1296
        %1298 = vrot.lane.b32.xlu0 %v565, 111
        %v1299 = vpop.permute.xlu0 %1298
        %1300 = vrot.lane.b32.xlu0 %v528, 111
        %v1301 = vpop.permute.xlu0 %1300
        %1302 = vrot.lane.b32.xlu0 %v529, 111
        %v1303 = vpop.permute.xlu0 %1302
        %1304 = vrot.lane.b32.xlu0 %v566, 111
        %v1305 = vpop.permute.xlu0 %1304
        %1306 = vrot.lane.b32.xlu0 %v530, 111
        %v1307 = vpop.permute.xlu0 %1306
        %1308 = vrot.lane.b32.xlu0 %v531, 111
        %v1309 = vpop.permute.xlu0 %1308
        %1310 = vrot.lane.b32.xlu0 %v567, 111
        %v1311 = vpop.permute.xlu0 %1310
        %vm1312 = vcmask 908288
        %v1313 = vsel %vm1312, %v1289, %v1291
        %v1314 = vsel %vm1312, %v1291, %v1293
        %v1315 = vsel %vm1312, %v1295, %v1297
        %v1316 = vsel %vm1312, %v1297, %v1299
        %v1317 = vsel %vm1312, %v1301, %v1303
        %v1318 = vsel %vm1312, %v1303, %v1305
        %v1319 = vsel %vm1312, %v1307, %v1309
        %v1320 = vsel %vm1312, %v1309, %v1311
        %v1330 = vsel %vm641, %v1284, 0
        %v1333 = vsel %vm641, %v1285, 0
        %v1336 = vsel %vm641, %v1286, 0
        %v1339 = vsel %vm641, %v1287, 0
        %1341 = vmatprep.subr.bf16.mxu0 %v1314
        %1342 = vmatpush1.bf16.msra.mxu0 %v1313
        %1343 = vmatprep.subr.bf16.mxu0 %v1316
        %1344 = vmatpush1.bf16.msra.mxu0 %v1315
        %1345 = vmatprep.subr.bf16.mxu0 %v1318
        %1346 = vmatpush1.bf16.msra.mxu0 %v1317
        %1347 = vmatprep.subr.bf16.mxu0 %v1320
        %1348 = vmatpush1.bf16.msra.mxu0 %v1319
        %1349 = vmatprep.subr.bf16.mxu0 0
        %1350 = vmatpush1.bf16.msra.mxu0 0
        %1351 = vmatprep.subr.bf16.mxu0 0
        %1352 = vmatpush1.bf16.msra.mxu0 0
        %1353 = vmatprep.subr.bf16.mxu0 0
        %1354 = vmatpush1.bf16.msra.mxu0 0
        %1355 = vmatprep.subr.bf16.mxu0 0
        %1356 = vmatpush1.bf16.msra.mxu0 0
        %1357 = vmatprep.subr.bf16.mxu0 0
        %1358 = vmatpush1.bf16.msra.mxu0 0
        %1359 = vmatprep.subr.bf16.mxu0 0
        %1360 = vmatpush1.bf16.msra.mxu0 0
        %1361 = vmatprep.subr.bf16.mxu0 0
        %1362 = vmatpush1.bf16.msra.mxu0 0
        %1363 = vmatprep.subr.bf16.mxu0 0
        %1364 = vmatpush1.bf16.msra.mxu0 0
        %1365 = vmatprep.subr.bf16.mxu0 0
        %1366 = vmatpush1.bf16.msra.mxu0 0
        %1367 = vmatprep.subr.bf16.mxu0 0
        %1368 = vmatpush1.bf16.msra.mxu0 0
        %1369 = vmatprep.subr.bf16.mxu0 0
        %1370 = vmatpush1.bf16.msra.mxu0 0
        %1371 = vmatprep.subr.bf16.mxu0 0
        %1372 = vmatpush1.bf16.msra.mxu0 0
        %1373 = vmatprep.mubr.bf16.mxu0 0
        %1374 = vmatmul.mubr.bf16.gmra.mrb[0].mxu0 %v1330
        %v1375 = vpop.f32.mrb[0].mxu0
        %v1376 = vadd.f32 0.0, %v1375
        %v1377 = vpop.f32.mrb[0].mxu0
        %v1378 = vadd.f32 0.0, %v1377
        %v1379 = vpop.f32.mrb[0].mxu0
        %v1380 = vadd.f32 0.0, %v1379
        %v1381 = vpop.f32.mrb[0].mxu0
        %v1382 = vadd.f32 0.0, %v1381
        %1383 = vmatprep.mubr.bf16.mxu0 0
        %1384 = vmatmul.mubr.bf16.gmra.mrb[0].mxu0 %v1333
        %v1385 = vpop.f32.mrb[0].mxu0
        %v1386 = vadd.f32 0.0, %v1385
        %v1387 = vpop.f32.mrb[0].mxu0
        %v1388 = vadd.f32 0.0, %v1387
        %v1389 = vpop.f32.mrb[0].mxu0
        %v1390 = vadd.f32 0.0, %v1389
        %v1391 = vpop.f32.mrb[0].mxu0
        %v1392 = vadd.f32 0.0, %v1391
        %1393 = vmatprep.mubr.bf16.mxu0 0
        %1394 = vmatmul.mubr.bf16.gmra.mrb[0].mxu0 %v1336
        %v1395 = vpop.f32.mrb[0].mxu0
        %v1396 = vadd.f32 0.0, %v1395
        %v1397 = vpop.f32.mrb[0].mxu0
        %v1398 = vadd.f32 0.0, %v1397
        %v1399 = vpop.f32.mrb[0].mxu0
        %v1400 = vadd.f32 0.0, %v1399
        %v1401 = vpop.f32.mrb[0].mxu0
        %v1402 = vadd.f32 0.0, %v1401
        %1403 = vmatprep.mubr.bf16.mxu0 0
        %1404 = vmatmul.mubr.bf16.gmra.mrb[0].mxu0 %v1339
        %v1405 = vpop.f32.mrb[0].mxu0
        %v1406 = vadd.f32 0.0, %v1405
        %v1407 = vpop.f32.mrb[0].mxu0
        %v1408 = vadd.f32 0.0, %v1407
        %v1409 = vpop.f32.mrb[0].mxu0
        %v1410 = vadd.f32 0.0, %v1409
        %v1411 = vpop.f32.mrb[0].mxu0
        %v1412 = vadd.f32 0.0, %v1411
        %1413 = vdwg.mxu0
        %v1414 = vadd.f32 %v1240, %v1376
        %v1415 = vadd.f32 %v1241, %v1378
        %v1416 = vadd.f32 %v1242, %v1380
        %v1417 = vadd.f32 %v1243, %v1382
        %v1418 = vadd.f32 %v1244, %v1386
        %v1419 = vadd.f32 %v1245, %v1388
        %v1420 = vadd.f32 %v1246, %v1390
        %v1421 = vadd.f32 %v1247, %v1392
        %v1422 = vadd.f32 %v1248, %v1396
        %v1423 = vadd.f32 %v1249, %v1398
        %v1424 = vadd.f32 %v1250, %v1400
        %v1425 = vadd.f32 %v1251, %v1402
        %v1426 = vadd.f32 %v1252, %v1406
        %v1427 = vadd.f32 %v1253, %v1408
        %v1428 = vadd.f32 %v1254, %v1410
        %v1429 = vadd.f32 %v1255, %v1412
        %s1430 = sadd.s32 %s512, 5
        %s1431 = smul.u32 %s1430, 8
        %s1432 = smul.addr %s1431, 4
        %s1433 = scalar_lea.vmem %s3, %s1432
        %v1434 = vld [vmem:[%s1433] sm:$0xf]
        %v1435 = vld [vmem:[%s1433 + $0x4] sm:$0xf]
        %v1436 = vld [vmem:[%s1433 + $0x8] sm:$0xf]
        %v1437 = vld [vmem:[%s1433 + $0xc] sm:$0xf]
        %v1438 = vld [vmem:[%s1433 + $0x10] sm:$0xf]
        %v1439 = vld [vmem:[%s1433 + $0x14] sm:$0xf]
        %v1440 = vld [vmem:[%s1433 + $0x18] sm:$0xf]
        %v1441 = vld [vmem:[%s1433 + $0x1c] sm:$0xf]
        %1442 = vrot.lane.b32.xlu0 %v849, 18
        %v1443 = vpop.permute.xlu0 %1442
        %1444 = vrot.lane.b32.xlu0 %v853, 18
        %v1445 = vpop.permute.xlu0 %1444
        %vm1446 = vcmask 146432
        %v1447 = vsel %vm1446, %v1443, %v1445
        %vm1448 = vcmp.ne.s16.totalorder %v1443, 0
        %vm1449 = vcmp.ne.s16.totalorder %v1447, 0
        %vm1450 = vcmp.ne.s16.totalorder %v1445, 0
        %v1451 = vsel %vm1448, %v524, 0
        %v1452 = vsel %vm1449, %v525, 0
        %v1453 = vsel %vm1450, %v564, 0
        %v1454 = vsel %vm1448, %v526, 0
        %v1455 = vsel %vm1449, %v527, 0
        %v1456 = vsel %vm1450, %v565, 0
        %v1457 = vsel %vm1448, %v528, 0
        %v1458 = vsel %vm1449, %v529, 0
        %v1459 = vsel %vm1450, %v566, 0
        %v1460 = vsel %vm1448, %v530, 0
        %v1461 = vsel %vm1449, %v531, 0
        %v1462 = vsel %vm1450, %v567, 0
        %v1471 = vunpack.c.l.b16 %v1434
        %v1472 = vunpack.c.l.b16 %v1435
        %v1473 = vunpack.c.l.b16 %v1436
        %v1474 = vunpack.c.l.b16 %v1437
        %v1475 = vunpack.c.l.b16 %v1438
        %v1476 = vunpack.c.l.b16 %v1439
        %v1477 = vunpack.c.l.b16 %v1440
        %v1478 = vunpack.c.l.b16 %v1441
        %v1479 = vpack.c.b16 %v1472, %v1471
        %v1480 = vpack.c.b16 %v1474, %v1473
        %v1481 = vpack.c.b16 %v1476, %v1475
        %v1482 = vpack.c.b16 %v1478, %v1477
        %1495 = vrot.lane.b32.xlu0 %v1451, 110
        %v1496 = vpop.permute.xlu0 %1495
        %1497 = vrot.lane.b32.xlu0 %v1452, 110
        %v1498 = vpop.permute.xlu0 %1497
        %1499 = vrot.lane.b32.xlu0 %v1453, 110
        %v1500 = vpop.permute.xlu0 %1499
        %1501 = vrot.lane.b32.xlu0 %v1454, 110
        %v1502 = vpop.permute.xlu0 %1501
        %1503 = vrot.lane.b32.xlu0 %v1455, 110
        %v1504 = vpop.permute.xlu0 %1503
        %1505 = vrot.lane.b32.xlu0 %v1456, 110
        %v1506 = vpop.permute.xlu0 %1505
        %1507 = vrot.lane.b32.xlu0 %v1457, 110
        %v1508 = vpop.permute.xlu0 %1507
        %1509 = vrot.lane.b32.xlu0 %v1458, 110
        %v1510 = vpop.permute.xlu0 %1509
        %1511 = vrot.lane.b32.xlu0 %v1459, 110
        %v1512 = vpop.permute.xlu0 %1511
        %1513 = vrot.lane.b32.xlu0 %v1460, 110
        %v1514 = vpop.permute.xlu0 %1513
        %1515 = vrot.lane.b32.xlu0 %v1461, 110
        %v1516 = vpop.permute.xlu0 %1515
        %1517 = vrot.lane.b32.xlu0 %v1462, 110
        %v1518 = vpop.permute.xlu0 %1517
        %vm1519 = vcmask 900096
        %v1520 = vsel %vm1519, %v1496, %v1498
        %v1521 = vsel %vm1519, %v1498, %v1500
        %v1522 = vsel %vm1519, %v1502, %v1504
        %v1523 = vsel %vm1519, %v1504, %v1506
        %v1524 = vsel %vm1519, %v1508, %v1510
        %v1525 = vsel %vm1519, %v1510, %v1512
        %v1526 = vsel %vm1519, %v1514, %v1516
        %v1527 = vsel %vm1519, %v1516, %v1518
        %v1537 = vsel %vm641, %v1479, 0
        %v1540 = vsel %vm641, %v1480, 0
        %v1543 = vsel %vm641, %v1481, 0
        %v1546 = vsel %vm641, %v1482, 0
        %1548 = vmatprep.subr.bf16.mxu0 %v1521
        %1549 = vmatpush1.bf16.msra.mxu0 %v1520
        %1550 = vmatprep.subr.bf16.mxu0 %v1523
        %1551 = vmatpush1.bf16.msra.mxu0 %v1522
        %1552 = vmatprep.subr.bf16.mxu0 %v1525
        %1553 = vmatpush1.bf16.msra.mxu0 %v1524
        %1554 = vmatprep.subr.bf16.mxu0 %v1527
        %1555 = vmatpush1.bf16.msra.mxu0 %v1526
        %1556 = vmatprep.subr.bf16.mxu0 0
        %1557 = vmatpush1.bf16.msra.mxu0 0
        %1558 = vmatprep.subr.bf16.mxu0 0
        %1559 = vmatpush1.bf16.msra.mxu0 0
        %1560 = vmatprep.subr.bf16.mxu0 0
        %1561 = vmatpush1.bf16.msra.mxu0 0
        %1562 = vmatprep.subr.bf16.mxu0 0
        %1563 = vmatpush1.bf16.msra.mxu0 0
        %1564 = vmatprep.subr.bf16.mxu0 0
        %1565 = vmatpush1.bf16.msra.mxu0 0
        %1566 = vmatprep.subr.bf16.mxu0 0
        %1567 = vmatpush1.bf16.msra.mxu0 0
        %1568 = vmatprep.subr.bf16.mxu0 0
        %1569 = vmatpush1.bf16.msra.mxu0 0
        %1570 = vmatprep.subr.bf16.mxu0 0
        %1571 = vmatpush1.bf16.msra.mxu0 0
        %1572 = vmatprep.subr.bf16.mxu0 0
        %1573 = vmatpush1.bf16.msra.mxu0 0
        %1574 = vmatprep.subr.bf16.mxu0 0
        %1575 = vmatpush1.bf16.msra.mxu0 0
        %1576 = vmatprep.subr.bf16.mxu0 0
        %1577 = vmatpush1.bf16.msra.mxu0 0
        %1578 = vmatprep.subr.bf16.mxu0 0
        %1579 = vmatpush1.bf16.msra.mxu0 0
        %1580 = vmatprep.mubr.bf16.mxu0 0
        %1581 = vmatmul.mubr.bf16.gmra.mrb[0].mxu0 %v1537
        %v1582 = vpop.f32.mrb[0].mxu0
        %v1583 = vadd.f32 0.0, %v1582
        %v1584 = vpop.f32.mrb[0].mxu0
        %v1585 = vadd.f32 0.0, %v1584
        %v1586 = vpop.f32.mrb[0].mxu0
        %v1587 = vadd.f32 0.0, %v1586
        %v1588 = vpop.f32.mrb[0].mxu0
        %v1589 = vadd.f32 0.0, %v1588
        %1590 = vmatprep.mubr.bf16.mxu0 0
        %1591 = vmatmul.mubr.bf16.gmra.mrb[0].mxu0 %v1540
        %v1592 = vpop.f32.mrb[0].mxu0
        %v1593 = vadd.f32 0.0, %v1592
        %v1594 = vpop.f32.mrb[0].mxu0
        %v1595 = vadd.f32 0.0, %v1594
        %v1596 = vpop.f32.mrb[0].mxu0
        %v1597 = vadd.f32 0.0, %v1596
        %v1598 = vpop.f32.mrb[0].mxu0
        %v1599 = vadd.f32 0.0, %v1598
        %1600 = vmatprep.mubr.bf16.mxu0 0
        %1601 = vmatmul.mubr.bf16.gmra.mrb[0].mxu0 %v1543
        %v1602 = vpop.f32.mrb[0].mxu0
        %v1603 = vadd.f32 0.0, %v1602
        %v1604 = vpop.f32.mrb[0].mxu0
        %v1605 = vadd.f32 0.0, %v1604
        %v1606 = vpop.f32.mrb[0].mxu0
        %v1607 = vadd.f32 0.0, %v1606
        %v1608 = vpop.f32.mrb[0].mxu0
        %v1609 = vadd.f32 0.0, %v1608
        %1610 = vmatprep.mubr.bf16.mxu0 0
        %1611 = vmatmul.mubr.bf16.gmra.mrb[0].mxu0 %v1546
        %v1612 = vpop.f32.mrb[0].mxu0
        %v1613 = vadd.f32 0.0, %v1612
        %v1614 = vpop.f32.mrb[0].mxu0
        %v1615 = vadd.f32 0.0, %v1614
        %v1616 = vpop.f32.mrb[0].mxu0
        %v1617 = vadd.f32 0.0, %v1616
        %v1618 = vpop.f32.mrb[0].mxu0
        %v1619 = vadd.f32 0.0, %v1618
        %1620 = vdwg.mxu0
        %v1621 = vadd.f32 %v1414, %v1583
        %v1622 = vadd.f32 %v1415, %v1585
        %v1623 = vadd.f32 %v1416, %v1587
        %v1624 = vadd.f32 %v1417, %v1589
        %v1625 = vadd.f32 %v1418, %v1593
        %v1626 = vadd.f32 %v1419, %v1595
        %v1627 = vadd.f32 %v1420, %v1597
        %v1628 = vadd.f32 %v1421, %v1599
        %v1629 = vadd.f32 %v1422, %v1603
        %v1630 = vadd.f32 %v1423, %v1605
        %v1631 = vadd.f32 %v1424, %v1607
        %v1632 = vadd.f32 %v1425, %v1609
        %v1633 = vadd.f32 %v1426, %v1613
        %v1634 = vadd.f32 %v1427, %v1615
        %v1635 = vadd.f32 %v1428, %v1617
        %v1636 = vadd.f32 %v1429, %v1619
        %s1637 = sadd.s32 %s512, 6
        %s1638 = smul.u32 %s1637, 8
        %s1639 = smul.addr %s1638, 4
        %s1640 = scalar_lea.vmem %s3, %s1639
        %v1641 = vld [vmem:[%s1640] sm:$0xf]
        %v1642 = vld [vmem:[%s1640 + $0x4] sm:$0xf]
        %v1643 = vld [vmem:[%s1640 + $0x8] sm:$0xf]
        %v1644 = vld [vmem:[%s1640 + $0xc] sm:$0xf]
        %v1645 = vld [vmem:[%s1640 + $0x10] sm:$0xf]
        %v1646 = vld [vmem:[%s1640 + $0x14] sm:$0xf]
        %v1647 = vld [vmem:[%s1640 + $0x18] sm:$0xf]
        %v1648 = vld [vmem:[%s1640 + $0x1c] sm:$0xf]
        %1649 = vrot.lane.b32.xlu0 %v537, 32
        %v1650 = vpop.permute.xlu0 %1649
        %1651 = vrot.lane.b32.xlu0 %v541, 32
        %v1652 = vpop.permute.xlu0 %1651
        %vm1653 = vcmask 261120
        %v1654 = vsel %vm1653, %v1650, %v1652
        %vm1655 = vcmp.ne.s16.totalorder %v1650, 0
        %vm1656 = vcmp.ne.s16.totalorder %v1654, 0
        %vm1657 = vcmp.ne.s16.totalorder %v1652, 0
        %v1658 = vsel %vm1655, %v524, 0
        %v1659 = vsel %vm1656, %v525, 0
        %v1660 = vsel %vm1657, %v564, 0
        %v1661 = vsel %vm1655, %v526, 0
        %v1662 = vsel %vm1656, %v527, 0
        %v1663 = vsel %vm1657, %v565, 0
        %v1664 = vsel %vm1655, %v528, 0
        %v1665 = vsel %vm1656, %v529, 0
        %v1666 = vsel %vm1657, %v566, 0
        %v1667 = vsel %vm1655, %v530, 0
        %v1668 = vsel %vm1656, %v531, 0
        %v1669 = vsel %vm1657, %v567, 0
        %v1678 = vunpack.c.l.b16 %v1641
        %v1679 = vunpack.c.l.b16 %v1642
        %v1680 = vunpack.c.l.b16 %v1643
        %v1681 = vunpack.c.l.b16 %v1644
        %v1682 = vunpack.c.l.b16 %v1645
        %v1683 = vunpack.c.l.b16 %v1646
        %v1684 = vunpack.c.l.b16 %v1647
        %v1685 = vunpack.c.l.b16 %v1648
        %v1686 = vpack.c.b16 %v1679, %v1678
        %v1687 = vpack.c.b16 %v1681, %v1680
        %v1688 = vpack.c.b16 %v1683, %v1682
        %v1689 = vpack.c.b16 %v1685, %v1684
        %1702 = vrot.lane.b32.xlu0 %v1658, 96
        %v1703 = vpop.permute.xlu0 %1702
        %1704 = vrot.lane.b32.xlu0 %v1659, 96
        %v1705 = vpop.permute.xlu0 %1704
        %1706 = vrot.lane.b32.xlu0 %v1660, 96
        %v1707 = vpop.permute.xlu0 %1706
        %1708 = vrot.lane.b32.xlu0 %v1661, 96
        %v1709 = vpop.permute.xlu0 %1708
        %1710 = vrot.lane.b32.xlu0 %v1662, 96
        %v1711 = vpop.permute.xlu0 %1710
        %1712 = vrot.lane.b32.xlu0 %v1663, 96
        %v1713 = vpop.permute.xlu0 %1712
        %1714 = vrot.lane.b32.xlu0 %v1664, 96
        %v1715 = vpop.permute.xlu0 %1714
        %1716 = vrot.lane.b32.xlu0 %v1665, 96
        %v1717 = vpop.permute.xlu0 %1716
        %1718 = vrot.lane.b32.xlu0 %v1666, 96
        %v1719 = vpop.permute.xlu0 %1718
        %1720 = vrot.lane.b32.xlu0 %v1667, 96
        %v1721 = vpop.permute.xlu0 %1720
        %1722 = vrot.lane.b32.xlu0 %v1668, 96
        %v1723 = vpop.permute.xlu0 %1722
        %1724 = vrot.lane.b32.xlu0 %v1669, 96
        %v1725 = vpop.permute.xlu0 %1724
        %vm1726 = vcmask 785408
        %v1727 = vsel %vm1726, %v1703, %v1705
        %v1728 = vsel %vm1726, %v1705, %v1707
        %v1729 = vsel %vm1726, %v1709, %v1711
        %v1730 = vsel %vm1726, %v1711, %v1713
        %v1731 = vsel %vm1726, %v1715, %v1717
        %v1732 = vsel %vm1726, %v1717, %v1719
        %v1733 = vsel %vm1726, %v1721, %v1723
        %v1734 = vsel %vm1726, %v1723, %v1725
        %v1744 = vsel %vm641, %v1686, 0
        %v1747 = vsel %vm641, %v1687, 0
        %v1750 = vsel %vm641, %v1688, 0
        %v1753 = vsel %vm641, %v1689, 0
        %1755 = vmatprep.subr.bf16.mxu0 %v1728
        %1756 = vmatpush1.bf16.msra.mxu0 %v1727
        %1757 = vmatprep.subr.bf16.mxu0 %v1730
        %1758 = vmatpush1.bf16.msra.mxu0 %v1729
        %1759 = vmatprep.subr.bf16.mxu0 %v1732
        %1760 = vmatpush1.bf16.msra.mxu0 %v1731
        %1761 = vmatprep.subr.bf16.mxu0 %v1734
        %1762 = vmatpush1.bf16.msra.mxu0 %v1733
        %1763 = vmatprep.subr.bf16.mxu0 0
        %1764 = vmatpush1.bf16.msra.mxu0 0
        %1765 = vmatprep.subr.bf16.mxu0 0
        %1766 = vmatpush1.bf16.msra.mxu0 0
        %1767 = vmatprep.subr.bf16.mxu0 0
        %1768 = vmatpush1.bf16.msra.mxu0 0
        %1769 = vmatprep.subr.bf16.mxu0 0
        %1770 = vmatpush1.bf16.msra.mxu0 0
        %1771 = vmatprep.subr.bf16.mxu0 0
        %1772 = vmatpush1.bf16.msra.mxu0 0
        %1773 = vmatprep.subr.bf16.mxu0 0
        %1774 = vmatpush1.bf16.msra.mxu0 0
        %1775 = vmatprep.subr.bf16.mxu0 0
        %1776 = vmatpush1.bf16.msra.mxu0 0
        %1777 = vmatprep.subr.bf16.mxu0 0
        %1778 = vmatpush1.bf16.msra.mxu0 0
        %1779 = vmatprep.subr.bf16.mxu0 0
        %1780 = vmatpush1.bf16.msra.mxu0 0
        %1781 = vmatprep.subr.bf16.mxu0 0
        %1782 = vmatpush1.bf16.msra.mxu0 0
        %1783 = vmatprep.subr.bf16.mxu0 0
        %1784 = vmatpush1.bf16.msra.mxu0 0
        %1785 = vmatprep.subr.bf16.mxu0 0
        %1786 = vmatpush1.bf16.msra.mxu0 0
        %1787 = vmatprep.mubr.bf16.mxu0 0
        %1788 = vmatmul.mubr.bf16.gmra.mrb[0].mxu0 %v1744
        %v1789 = vpop.f32.mrb[0].mxu0
        %v1790 = vadd.f32 0.0, %v1789
        %v1791 = vpop.f32.mrb[0].mxu0
        %v1792 = vadd.f32 0.0, %v1791
        %v1793 = vpop.f32.mrb[0].mxu0
        %v1794 = vadd.f32 0.0, %v1793
        %v1795 = vpop.f32.mrb[0].mxu0
        %v1796 = vadd.f32 0.0, %v1795
        %1797 = vmatprep.mubr.bf16.mxu0 0
        %1798 = vmatmul.mubr.bf16.gmra.mrb[0].mxu0 %v1747
        %v1799 = vpop.f32.mrb[0].mxu0
        %v1800 = vadd.f32 0.0, %v1799
        %v1801 = vpop.f32.mrb[0].mxu0
        %v1802 = vadd.f32 0.0, %v1801
        %v1803 = vpop.f32.mrb[0].mxu0
        %v1804 = vadd.f32 0.0, %v1803
        %v1805 = vpop.f32.mrb[0].mxu0
        %v1806 = vadd.f32 0.0, %v1805
        %1807 = vmatprep.mubr.bf16.mxu0 0
        %1808 = vmatmul.mubr.bf16.gmra.mrb[0].mxu0 %v1750
        %v1809 = vpop.f32.mrb[0].mxu0
        %v1810 = vadd.f32 0.0, %v1809
        %v1811 = vpop.f32.mrb[0].mxu0
        %v1812 = vadd.f32 0.0, %v1811
        %v1813 = vpop.f32.mrb[0].mxu0
        %v1814 = vadd.f32 0.0, %v1813
        %v1815 = vpop.f32.mrb[0].mxu0
        %v1816 = vadd.f32 0.0, %v1815
        %1817 = vmatprep.mubr.bf16.mxu0 0
        %1818 = vmatmul.mubr.bf16.gmra.mrb[0].mxu0 %v1753
        %v1819 = vpop.f32.mrb[0].mxu0
        %v1820 = vadd.f32 0.0, %v1819
        %v1821 = vpop.f32.mrb[0].mxu0
        %v1822 = vadd.f32 0.0, %v1821
        %v1823 = vpop.f32.mrb[0].mxu0
        %v1824 = vadd.f32 0.0, %v1823
        %v1825 = vpop.f32.mrb[0].mxu0
        %v1826 = vadd.f32 0.0, %v1825
        %1827 = vdwg.mxu0
        %v1828 = vadd.f32 %v1621, %v1790
        %v1829 = vadd.f32 %v1622, %v1792
        %v1830 = vadd.f32 %v1623, %v1794
        %v1831 = vadd.f32 %v1624, %v1796
        %v1832 = vadd.f32 %v1625, %v1800
        %v1833 = vadd.f32 %v1626, %v1802
        %v1834 = vadd.f32 %v1627, %v1804
        %v1835 = vadd.f32 %v1628, %v1806
        %v1836 = vadd.f32 %v1629, %v1810
        %v1837 = vadd.f32 %v1630, %v1812
        %v1838 = vadd.f32 %v1631, %v1814
        %v1839 = vadd.f32 %v1632, %v1816
        %v1840 = vadd.f32 %v1633, %v1820
        %v1841 = vadd.f32 %v1634, %v1822
        %v1842 = vadd.f32 %v1635, %v1824
        %v1843 = vadd.f32 %v1636, %v1826
        %s1844 = sadd.s32 %s512, 7
        %s1845 = smul.u32 %s1844, 8
        %s1846 = smul.addr %s1845, 4
        %s1847 = scalar_lea.vmem %s3, %s1846
        %v1848 = vld [vmem:[%s1847] sm:$0xf]
        %v1849 = vld [vmem:[%s1847 + $0x4] sm:$0xf]
        %v1850 = vld [vmem:[%s1847 + $0x8] sm:$0xf]
        %v1851 = vld [vmem:[%s1847 + $0xc] sm:$0xf]
        %v1852 = vld [vmem:[%s1847 + $0x10] sm:$0xf]
        %v1853 = vld [vmem:[%s1847 + $0x14] sm:$0xf]
        %v1854 = vld [vmem:[%s1847 + $0x18] sm:$0xf]
        %v1855 = vld [vmem:[%s1847 + $0x1c] sm:$0xf]
        %v1864 = vunpack.c.l.b16 %v1848
        %v1865 = vunpack.c.l.b16 %v1849
        %v1866 = vunpack.c.l.b16 %v1850
        %v1867 = vunpack.c.l.b16 %v1851
        %v1868 = vunpack.c.l.b16 %v1852
        %v1869 = vunpack.c.l.b16 %v1853
        %v1870 = vunpack.c.l.b16 %v1854
        %v1871 = vunpack.c.l.b16 %v1855
        %v1872 = vpack.c.b16 %v1865, %v1864
        %v1873 = vpack.c.b16 %v1867, %v1866
        %v1874 = vpack.c.b16 %v1869, %v1868
        %v1875 = vpack.c.b16 %v1871, %v1870
        %1876 = vrot.lane.b32.xlu0 %v524, 95
        %v1877 = vpop.permute.xlu0 %1876
        %1878 = vrot.lane.b32.xlu0 %v525, 95
        %v1879 = vpop.permute.xlu0 %1878
        %1880 = vrot.lane.b32.xlu0 %v564, 95
        %v1881 = vpop.permute.xlu0 %1880
        %1882 = vrot.lane.b32.xlu0 %v526, 95
        %v1883 = vpop.permute.xlu0 %1882
        %1884 = vrot.lane.b32.xlu0 %v527, 95
        %v1885 = vpop.permute.xlu0 %1884
        %1886 = vrot.lane.b32.xlu0 %v565, 95
        %v1887 = vpop.permute.xlu0 %1886
        %1888 = vrot.lane.b32.xlu0 %v528, 95
        %v1889 = vpop.permute.xlu0 %1888
        %1890 = vrot.lane.b32.xlu0 %v529, 95
        %v1891 = vpop.permute.xlu0 %1890
        %1892 = vrot.lane.b32.xlu0 %v566, 95
        %v1893 = vpop.permute.xlu0 %1892
        %1894 = vrot.lane.b32.xlu0 %v530, 95
        %v1895 = vpop.permute.xlu0 %1894
        %1896 = vrot.lane.b32.xlu0 %v531, 95
        %v1897 = vpop.permute.xlu0 %1896
        %1898 = vrot.lane.b32.xlu0 %v567, 95
        %v1899 = vpop.permute.xlu0 %1898
        %vm1900 = vcmask 777216
        %v1901 = vsel %vm1900, %v1877, %v1879
        %v1902 = vsel %vm1900, %v1879, %v1881
        %v1903 = vsel %vm1900, %v1883, %v1885
        %v1904 = vsel %vm1900, %v1885, %v1887
        %v1905 = vsel %vm1900, %v1889, %v1891
        %v1906 = vsel %vm1900, %v1891, %v1893
        %v1907 = vsel %vm1900, %v1895, %v1897
        %v1908 = vsel %vm1900, %v1897, %v1899
        %v1918 = vsel %vm641, %v1872, 0
        %v1921 = vsel %vm641, %v1873, 0
        %v1924 = vsel %vm641, %v1874, 0
        %v1927 = vsel %vm641, %v1875, 0
        %1929 = vmatprep.subr.bf16.mxu0 %v1902
        %1930 = vmatpush1.bf16.msra.mxu0 %v1901
        %1931 = vmatprep.subr.bf16.mxu0 %v1904
        %1932 = vmatpush1.bf16.msra.mxu0 %v1903
        %1933 = vmatprep.subr.bf16.mxu0 %v1906
        %1934 = vmatpush1.bf16.msra.mxu0 %v1905
        %1935 = vmatprep.subr.bf16.mxu0 %v1908
        %1936 = vmatpush1.bf16.msra.mxu0 %v1907
        %1937 = vmatprep.subr.bf16.mxu0 0
        %1938 = vmatpush1.bf16.msra.mxu0 0
        %1939 = vmatprep.subr.bf16.mxu0 0
        %1940 = vmatpush1.bf16.msra.mxu0 0
        %1941 = vmatprep.subr.bf16.mxu0 0
        %1942 = vmatpush1.bf16.msra.mxu0 0
        %1943 = vmatprep.subr.bf16.mxu0 0
        %1944 = vmatpush1.bf16.msra.mxu0 0
        %1945 = vmatprep.subr.bf16.mxu0 0
        %1946 = vmatpush1.bf16.msra.mxu0 0
        %1947 = vmatprep.subr.bf16.mxu0 0
        %1948 = vmatpush1.bf16.msra.mxu0 0
        %1949 = vmatprep.subr.bf16.mxu0 0
        %1950 = vmatpush1.bf16.msra.mxu0 0
        %1951 = vmatprep.subr.bf16.mxu0 0
        %1952 = vmatpush1.bf16.msra.mxu0 0
        %1953 = vmatprep.subr.bf16.mxu0 0
        %1954 = vmatpush1.bf16.msra.mxu0 0
        %1955 = vmatprep.subr.bf16.mxu0 0
        %1956 = vmatpush1.bf16.msra.mxu0 0
        %1957 = vmatprep.subr.bf16.mxu0 0
        %1958 = vmatpush1.bf16.msra.mxu0 0
        %1959 = vmatprep.subr.bf16.mxu0 0
        %1960 = vmatpush1.bf16.msra.mxu0 0
        %1961 = vmatprep.mubr.bf16.mxu0 0
        %1962 = vmatmul.mubr.bf16.gmra.mrb[0].mxu0 %v1918
        %v1963 = vpop.f32.mrb[0].mxu0
        %v1964 = vadd.f32 0.0, %v1963
        %v1965 = vpop.f32.mrb[0].mxu0
        %v1966 = vadd.f32 0.0, %v1965
        %v1967 = vpop.f32.mrb[0].mxu0
        %v1968 = vadd.f32 0.0, %v1967
        %v1969 = vpop.f32.mrb[0].mxu0
        %v1970 = vadd.f32 0.0, %v1969
        %1971 = vmatprep.mubr.bf16.mxu0 0
        %1972 = vmatmul.mubr.bf16.gmra.mrb[0].mxu0 %v1921
        %v1973 = vpop.f32.mrb[0].mxu0
        %v1974 = vadd.f32 0.0, %v1973
        %v1975 = vpop.f32.mrb[0].mxu0
        %v1976 = vadd.f32 0.0, %v1975
        %v1977 = vpop.f32.mrb[0].mxu0
        %v1978 = vadd.f32 0.0, %v1977
        %v1979 = vpop.f32.mrb[0].mxu0
        %v1980 = vadd.f32 0.0, %v1979
        %1981 = vmatprep.mubr.bf16.mxu0 0
        %1982 = vmatmul.mubr.bf16.gmra.mrb[0].mxu0 %v1924
        %v1983 = vpop.f32.mrb[0].mxu0
        %v1984 = vadd.f32 0.0, %v1983
        %v1985 = vpop.f32.mrb[0].mxu0
        %v1986 = vadd.f32 0.0, %v1985
        %v1987 = vpop.f32.mrb[0].mxu0
        %v1988 = vadd.f32 0.0, %v1987
        %v1989 = vpop.f32.mrb[0].mxu0
        %v1990 = vadd.f32 0.0, %v1989
        %1991 = vmatprep.mubr.bf16.mxu0 0
        %1992 = vmatmul.mubr.bf16.gmra.mrb[0].mxu0 %v1927
        %v1993 = vpop.f32.mrb[0].mxu0
        %v1994 = vadd.f32 0.0, %v1993
        %v1995 = vpop.f32.mrb[0].mxu0
        %v1996 = vadd.f32 0.0, %v1995
        %v1997 = vpop.f32.mrb[0].mxu0
        %v1998 = vadd.f32 0.0, %v1997
        %v1999 = vpop.f32.mrb[0].mxu0
        %v2000 = vadd.f32 0.0, %v1999
        %2001 = vdwg.mxu0
        %v2002 = vadd.f32 %v1828, %v1964
        %v2003 = vadd.f32 %v1829, %v1966
        %v2004 = vadd.f32 %v1830, %v1968
        %v2005 = vadd.f32 %v1831, %v1970
        %v2006 = vadd.f32 %v1832, %v1974
        %v2007 = vadd.f32 %v1833, %v1976
        %v2008 = vadd.f32 %v1834, %v1978
        %v2009 = vadd.f32 %v1835, %v1980
        %v2010 = vadd.f32 %v1836, %v1984
        %v2011 = vadd.f32 %v1837, %v1986
        %v2012 = vadd.f32 %v1838, %v1988
        %v2013 = vadd.f32 %v1839, %v1990
        %v2014 = vadd.f32 %v1840, %v1994
        %v2015 = vadd.f32 %v1841, %v1996
        %v2016 = vadd.f32 %v1842, %v1998
        %v2017 = vadd.f32 %v1843, %v2000
        %s2018 = sadd.s32 %s512, 8
        %s2019 = smul.u32 %s2018, 8
        %s2020 = smul.addr %s2019, 4
        %s2021 = scalar_lea.vmem %s3, %s2020
        %v2022 = vld [vmem:[%s2021] sm:$0xf]
        %v2023 = vld [vmem:[%s2021 + $0x4] sm:$0xf]
        %v2024 = vld [vmem:[%s2021 + $0x8] sm:$0xf]
        %v2025 = vld [vmem:[%s2021 + $0xc] sm:$0xf]
        %v2026 = vld [vmem:[%s2021 + $0x10] sm:$0xf]
        %v2027 = vld [vmem:[%s2021 + $0x14] sm:$0xf]
        %v2028 = vld [vmem:[%s2021 + $0x18] sm:$0xf]
        %v2029 = vld [vmem:[%s2021 + $0x1c] sm:$0xf]
        %2030 = vrot.lane.b32.xlu0 %v849, 34
        %v2031 = vpop.permute.xlu0 %2030
        %2032 = vrot.lane.b32.xlu0 %v853, 34
        %v2033 = vpop.permute.xlu0 %2032
        %vm2034 = vcmask 277504
        %v2035 = vsel %vm2034, %v2031, %v2033
        %vm2036 = vcmp.ne.s16.totalorder %v2031, 0
        %vm2037 = vcmp.ne.s16.totalorder %v2035, 0
        %vm2038 = vcmp.ne.s16.totalorder %v2033, 0
        %v2039 = vsel %vm2036, %v524, 0
        %v2040 = vsel %vm2037, %v525, 0
        %v2041 = vsel %vm2038, %v564, 0
        %v2042 = vsel %vm2036, %v526, 0
        %v2043 = vsel %vm2037, %v527, 0
        %v2044 = vsel %vm2038, %v565, 0
        %v2045 = vsel %vm2036, %v528, 0
        %v2046 = vsel %vm2037, %v529, 0
        %v2047 = vsel %vm2038, %v566, 0
        %v2048 = vsel %vm2036, %v530, 0
        %v2049 = vsel %vm2037, %v531, 0
        %v2050 = vsel %vm2038, %v567, 0
        %v2059 = vunpack.c.l.b16 %v2022
        %v2060 = vunpack.c.l.b16 %v2023
        %v2061 = vunpack.c.l.b16 %v2024
        %v2062 = vunpack.c.l.b16 %v2025
        %v2063 = vunpack.c.l.b16 %v2026
        %v2064 = vunpack.c.l.b16 %v2027
        %v2065 = vunpack.c.l.b16 %v2028
        %v2066 = vunpack.c.l.b16 %v2029
        %v2067 = vpack.c.b16 %v2060, %v2059
        %v2068 = vpack.c.b16 %v2062, %v2061
        %v2069 = vpack.c.b16 %v2064, %v2063
        %v2070 = vpack.c.b16 %v2066, %v2065
        %2083 = vrot.lane.b32.xlu0 %v2039, 94
        %v2084 = vpop.permute.xlu0 %2083
        %2085 = vrot.lane.b32.xlu0 %v2040, 94
        %v2086 = vpop.permute.xlu0 %2085
        %2087 = vrot.lane.b32.xlu0 %v2041, 94
        %v2088 = vpop.permute.xlu0 %2087
        %2089 = vrot.lane.b32.xlu0 %v2042, 94
        %v2090 = vpop.permute.xlu0 %2089
        %2091 = vrot.lane.b32.xlu0 %v2043, 94
        %v2092 = vpop.permute.xlu0 %2091
        %2093 = vrot.lane.b32.xlu0 %v2044, 94
        %v2094 = vpop.permute.xlu0 %2093
        %2095 = vrot.lane.b32.xlu0 %v2045, 94
        %v2096 = vpop.permute.xlu0 %2095
        %2097 = vrot.lane.b32.xlu0 %v2046, 94
        %v2098 = vpop.permute.xlu0 %2097
        %2099 = vrot.lane.b32.xlu0 %v2047, 94
        %v2100 = vpop.permute.xlu0 %2099
        %2101 = vrot.lane.b32.xlu0 %v2048, 94
        %v2102 = vpop.permute.xlu0 %2101
        %2103 = vrot.lane.b32.xlu0 %v2049, 94
        %v2104 = vpop.permute.xlu0 %2103
        %2105 = vrot.lane.b32.xlu0 %v2050, 94
        %v2106 = vpop.permute.xlu0 %2105
        %vm2107 = vcmask 769024
        %v2108 = vsel %vm2107, %v2084, %v2086
        %v2109 = vsel %vm2107, %v2086, %v2088
        %v2110 = vsel %vm2107, %v2090, %v2092
        %v2111 = vsel %vm2107, %v2092, %v2094
        %v2112 = vsel %vm2107, %v2096, %v2098
        %v2113 = vsel %vm2107, %v2098, %v2100
        %v2114 = vsel %vm2107, %v2102, %v2104
        %v2115 = vsel %vm2107, %v2104, %v2106
        %v2125 = vsel %vm641, %v2067, 0
        %v2128 = vsel %vm641, %v2068, 0
        %v2131 = vsel %vm641, %v2069, 0
        %v2134 = vsel %vm641, %v2070, 0
        %2136 = vmatprep.subr.bf16.mxu0 %v2109
        %2137 = vmatpush1.bf16.msra.mxu0 %v2108
        %2138 = vmatprep.subr.bf16.mxu0 %v2111
        %2139 = vmatpush1.bf16.msra.mxu0 %v2110
        %2140 = vmatprep.subr.bf16.mxu0 %v2113
        %2141 = vmatpush1.bf16.msra.mxu0 %v2112
        %2142 = vmatprep.subr.bf16.mxu0 %v2115
        %2143 = vmatpush1.bf16.msra.mxu0 %v2114
        %2144 = vmatprep.subr.bf16.mxu0 0
        %2145 = vmatpush1.bf16.msra.mxu0 0
        %2146 = vmatprep.subr.bf16.mxu0 0
        %2147 = vmatpush1.bf16.msra.mxu0 0
        %2148 = vmatprep.subr.bf16.mxu0 0
        %2149 = vmatpush1.bf16.msra.mxu0 0
        %2150 = vmatprep.subr.bf16.mxu0 0
        %2151 = vmatpush1.bf16.msra.mxu0 0
        %2152 = vmatprep.subr.bf16.mxu0 0
        %2153 = vmatpush1.bf16.msra.mxu0 0
        %2154 = vmatprep.subr.bf16.mxu0 0
        %2155 = vmatpush1.bf16.msra.mxu0 0
        %2156 = vmatprep.subr.bf16.mxu0 0
        %2157 = vmatpush1.bf16.msra.mxu0 0
        %2158 = vmatprep.subr.bf16.mxu0 0
        %2159 = vmatpush1.bf16.msra.mxu0 0
        %2160 = vmatprep.subr.bf16.mxu0 0
        %2161 = vmatpush1.bf16.msra.mxu0 0
        %2162 = vmatprep.subr.bf16.mxu0 0
        %2163 = vmatpush1.bf16.msra.mxu0 0
        %2164 = vmatprep.subr.bf16.mxu0 0
        %2165 = vmatpush1.bf16.msra.mxu0 0
        %2166 = vmatprep.subr.bf16.mxu0 0
        %2167 = vmatpush1.bf16.msra.mxu0 0
        %2168 = vmatprep.mubr.bf16.mxu0 0
        %2169 = vmatmul.mubr.bf16.gmra.mrb[0].mxu0 %v2125
        %v2170 = vpop.f32.mrb[0].mxu0
        %v2171 = vadd.f32 0.0, %v2170
        %v2172 = vpop.f32.mrb[0].mxu0
        %v2173 = vadd.f32 0.0, %v2172
        %v2174 = vpop.f32.mrb[0].mxu0
        %v2175 = vadd.f32 0.0, %v2174
        %v2176 = vpop.f32.mrb[0].mxu0
        %v2177 = vadd.f32 0.0, %v2176
        %2178 = vmatprep.mubr.bf16.mxu0 0
        %2179 = vmatmul.mubr.bf16.gmra.mrb[0].mxu0 %v2128
        %v2180 = vpop.f32.mrb[0].mxu0
        %v2181 = vadd.f32 0.0, %v2180
        %v2182 = vpop.f32.mrb[0].mxu0
        %v2183 = vadd.f32 0.0, %v2182
        %v2184 = vpop.f32.mrb[0].mxu0
        %v2185 = vadd.f32 0.0, %v2184
        %v2186 = vpop.f32.mrb[0].mxu0
        %v2187 = vadd.f32 0.0, %v2186
        %2188 = vmatprep.mubr.bf16.mxu0 0
        %2189 = vmatmul.mubr.bf16.gmra.mrb[0].mxu0 %v2131
        %v2190 = vpop.f32.mrb[0].mxu0
        %v2191 = vadd.f32 0.0, %v2190
        %v2192 = vpop.f32.mrb[0].mxu0
        %v2193 = vadd.f32 0.0, %v2192
        %v2194 = vpop.f32.mrb[0].mxu0
        %v2195 = vadd.f32 0.0, %v2194
        %v2196 = vpop.f32.mrb[0].mxu0
        %v2197 = vadd.f32 0.0, %v2196
        %2198 = vmatprep.mubr.bf16.mxu0 0
        %2199 = vmatmul.mubr.bf16.gmra.mrb[0].mxu0 %v2134
        %v2200 = vpop.f32.mrb[0].mxu0
        %v2201 = vadd.f32 0.0, %v2200
        %v2202 = vpop.f32.mrb[0].mxu0
        %v2203 = vadd.f32 0.0, %v2202
        %v2204 = vpop.f32.mrb[0].mxu0
        %v2205 = vadd.f32 0.0, %v2204
        %v2206 = vpop.f32.mrb[0].mxu0
        %v2207 = vadd.f32 0.0, %v2206
        %2208 = vdwg.mxu0
        %v2209 = vadd.f32 %v2002, %v2171
        %v2210 = vadd.f32 %v2003, %v2173
        %v2211 = vadd.f32 %v2004, %v2175
        %v2212 = vadd.f32 %v2005, %v2177
        %v2213 = vadd.f32 %v2006, %v2181
        %v2214 = vadd.f32 %v2007, %v2183
        %v2215 = vadd.f32 %v2008, %v2185
        %v2216 = vadd.f32 %v2009, %v2187
        %v2217 = vadd.f32 %v2010, %v2191
        %v2218 = vadd.f32 %v2011, %v2193
        %v2219 = vadd.f32 %v2012, %v2195
        %v2220 = vadd.f32 %v2013, %v2197
        %v2221 = vadd.f32 %v2014, %v2201
        %v2222 = vadd.f32 %v2015, %v2203
        %v2223 = vadd.f32 %v2016, %v2205
        %v2224 = vadd.f32 %v2017, %v2207
        %v2225 = vmax.f32 %v2209, 0.0
        %v2226 = vmax.f32 %v2210, 0.0
        %v2227 = vmax.f32 %v2211, 0.0
        %v2228 = vmax.f32 %v2212, 0.0
        %v2229 = vmax.f32 %v2213, 0.0
        %v2230 = vmax.f32 %v2214, 0.0
        %v2231 = vmax.f32 %v2215, 0.0
        %v2232 = vmax.f32 %v2216, 0.0
        %v2233 = vmax.f32 %v2217, 0.0
        %v2234 = vmax.f32 %v2218, 0.0
        %v2235 = vmax.f32 %v2219, 0.0
        %v2236 = vmax.f32 %v2220, 0.0
        %v2237 = vmax.f32 %v2221, 0.0
        %v2238 = vmax.f32 %v2222, 0.0
        %v2239 = vmax.f32 %v2223, 0.0
        %v2240 = vmax.f32 %v2224, 0.0
        %v2241 = vpack.c.bf16 %v2227, %v2225
        %v2242 = vpack.c.bf16 %v2228, %v2226
        %v2243 = vpack.c.bf16 %v2231, %v2229
        %v2244 = vpack.c.bf16 %v2232, %v2230
        %v2245 = vpack.c.bf16 %v2235, %v2233
        %v2246 = vpack.c.bf16 %v2236, %v2234
        %v2247 = vpack.c.bf16 %v2239, %v2237
        %v2248 = vpack.c.bf16 %v2240, %v2238
        %2257 = vrot.lane.b32.xlu0 %v2241, 17
        %v2258 = vpop.permute.xlu0 %2257
        %2259 = vrot.lane.b32.xlu0 %v2242, 17
        %v2260 = vpop.permute.xlu0 %2259
        %2261 = vrot.lane.b32.xlu0 %v2243, 17
        %v2262 = vpop.permute.xlu0 %2261
        %2263 = vrot.lane.b32.xlu0 %v2244, 17
        %v2264 = vpop.permute.xlu0 %2263
        %2265 = vrot.lane.b32.xlu0 %v2245, 17
        %v2266 = vpop.permute.xlu0 %2265
        %2267 = vrot.lane.b32.xlu0 %v2246, 17
        %v2268 = vpop.permute.xlu0 %2267
        %2269 = vrot.lane.b32.xlu0 %v2247, 17
        %v2270 = vpop.permute.xlu0 %2269
        %2271 = vrot.lane.b32.xlu0 %v2248, 17
        %v2272 = vpop.permute.xlu0 %2271
        %v2273 = vsel %vm476, %v2258, %v2260
        %v2274 = vsel %vm476, %v2262, %v2264
        %v2275 = vsel %vm476, %v2266, %v2268
        %v2276 = vsel %vm476, %v2270, %v2272
        %2289 = vst.msk [vmem:[#allocation3] sm:$0xff] %vm493, %v2258
        %2290 = vst [vmem:[#allocation3 + $0x8] sm:$0xff] %v2273
        %2291 = vst.msk [vmem:[#allocation3 + $0x10] sm:$0xff] %vm253, %v2260
        %2292 = vst.msk [vmem:[#allocation3 + $0x18] sm:$0xff] %vm493, %v2262
        %2293 = vst [vmem:[#allocation3 + $0x20] sm:$0xff] %v2274
        %2294 = vst.msk [vmem:[#allocation3 + $0x28] sm:$0xff] %vm253, %v2264
        %2295 = vst.msk [vmem:[#allocation3 + $0x30] sm:$0xff] %vm493, %v2266
        %2296 = vst [vmem:[#allocation3 + $0x38] sm:$0xff] %v2275
        %2297 = vst.msk [vmem:[#allocation3 + $0x40] sm:$0xff] %vm253, %v2268
        %2298 = vst.msk [vmem:[#allocation3 + $0x48] sm:$0xff] %vm493, %v2270
        %2299 = vst [vmem:[#allocation3 + $0x50] sm:$0xff] %v2276
        %2300 = vst.msk [vmem:[#allocation3 + $0x58] sm:$0xff] %vm253, %v2272
        %s2301 = smul.u32 %s507, 2
        %s2302 = sadd.s32 %s2301, 1
        %s2303 = smul.u32 %s2302, 9
        %s2304 = smul.u32 %s2303, 8
        %s2305 = smul.addr %s2304, 4
        %s2306 = scalar_lea.vmem %s3, %s2305
        %v2307 = vld [vmem:[%s2306] sm:$0xf]
        %v2308 = vld [vmem:[%s2306 + $0x4] sm:$0xf]
        %v2309 = vld [vmem:[%s2306 + $0x8] sm:$0xf]
        %v2310 = vld [vmem:[%s2306 + $0xc] sm:$0xf]
        %v2311 = vld [vmem:[%s2306 + $0x10] sm:$0xf]
        %v2312 = vld [vmem:[%s2306 + $0x14] sm:$0xf]
        %v2313 = vld [vmem:[%s2306 + $0x18] sm:$0xf]
        %v2314 = vld [vmem:[%s2306 + $0x1c] sm:$0xf]
        %v2315 = vld [vmem:[#allocation3] sm:$0xff]
        %v2316 = vld [vmem:[#allocation3 + $0x8] sm:$0xff]
        %v2317 = vld [vmem:[#allocation3 + $0x18] sm:$0xff]
        %v2318 = vld [vmem:[#allocation3 + $0x20] sm:$0xff]
        %v2319 = vld [vmem:[#allocation3 + $0x30] sm:$0xff]
        %v2320 = vld [vmem:[#allocation3 + $0x38] sm:$0xff]
        %v2321 = vld [vmem:[#allocation3 + $0x48] sm:$0xff]
        %v2322 = vld [vmem:[#allocation3 + $0x50] sm:$0xff]
        %v2323 = vsel %vm542, %v2315, 0
        %v2324 = vsel %vm543, %v2316, 0
        %v2325 = vsel %vm542, %v2317, 0
        %v2326 = vsel %vm543, %v2318, 0
        %v2327 = vsel %vm542, %v2319, 0
        %v2328 = vsel %vm543, %v2320, 0
        %v2329 = vsel %vm542, %v2321, 0
        %v2330 = vsel %vm543, %v2322, 0
        %s2331 = sadd.s32 %s2303, 1
        %s2332 = smul.u32 %s2331, 8
        %s2333 = smul.addr %s2332, 4
        %s2334 = scalar_lea.vmem %s3, %s2333
        %v2335 = vld [vmem:[%s2334] sm:$0xf]
        %v2336 = vld [vmem:[%s2334 + $0x4] sm:$0xf]
        %v2337 = vld [vmem:[%s2334 + $0x8] sm:$0xf]
        %v2338 = vld [vmem:[%s2334 + $0xc] sm:$0xf]
        %v2339 = vld [vmem:[%s2334 + $0x10] sm:$0xf]
        %v2340 = vld [vmem:[%s2334 + $0x14] sm:$0xf]
        %v2341 = vld [vmem:[%s2334 + $0x18] sm:$0xf]
        %v2342 = vld [vmem:[%s2334 + $0x1c] sm:$0xf]
        %v2343 = vld [vmem:[#allocation3 + $0x10] sm:$0xff]
        %v2344 = vld [vmem:[#allocation3 + $0x28] sm:$0xff]
        %v2345 = vld [vmem:[#allocation3 + $0x40] sm:$0xff]
        %v2346 = vld [vmem:[#allocation3 + $0x58] sm:$0xff]
        %v2355 = vunpack.c.l.b16 %v2335
        %v2356 = vunpack.c.l.b16 %v2336
        %v2357 = vunpack.c.l.b16 %v2337
        %v2358 = vunpack.c.l.b16 %v2338
        %v2359 = vunpack.c.l.b16 %v2339
        %v2360 = vunpack.c.l.b16 %v2340
        %v2361 = vunpack.c.l.b16 %v2341
        %v2362 = vunpack.c.l.b16 %v2342
        %v2363 = vpack.c.b16 %v2356, %v2355
        %v2364 = vpack.c.b16 %v2358, %v2357
        %v2365 = vpack.c.b16 %v2360, %v2359
        %v2366 = vpack.c.b16 %v2362, %v2361
        %2379 = vrot.lane.b32.xlu0 %v2315, 127
        %v2380 = vpop.permute.xlu0 %2379
        %2381 = vrot.lane.b32.xlu0 %v2316, 127
        %v2382 = vpop.permute.xlu0 %2381
        %2383 = vrot.lane.b32.xlu0 %v2343, 127
        %v2384 = vpop.permute.xlu0 %2383
        %2385 = vrot.lane.b32.xlu0 %v2317, 127
        %v2386 = vpop.permute.xlu0 %2385
        %2387 = vrot.lane.b32.xlu0 %v2318, 127
        %v2388 = vpop.permute.xlu0 %2387
        %2389 = vrot.lane.b32.xlu0 %v2344, 127
        %v2390 = vpop.permute.xlu0 %2389
        %2391 = vrot.lane.b32.xlu0 %v2319, 127
        %v2392 = vpop.permute.xlu0 %2391
        %2393 = vrot.lane.b32.xlu0 %v2320, 127
        %v2394 = vpop.permute.xlu0 %2393
        %2395 = vrot.lane.b32.xlu0 %v2345, 127
        %v2396 = vpop.permute.xlu0 %2395
        %2397 = vrot.lane.b32.xlu0 %v2321, 127
        %v2398 = vpop.permute.xlu0 %2397
        %2399 = vrot.lane.b32.xlu0 %v2322, 127
        %v2400 = vpop.permute.xlu0 %2399
        %2401 = vrot.lane.b32.xlu0 %v2346, 127
        %v2402 = vpop.permute.xlu0 %2401
        %v2403 = vsel %vm624, %v2380, %v2382
        %v2404 = vsel %vm624, %v2382, %v2384
        %v2405 = vsel %vm624, %v2386, %v2388
        %v2406 = vsel %vm624, %v2388, %v2390
        %v2407 = vsel %vm624, %v2392, %v2394
        %v2408 = vsel %vm624, %v2394, %v2396
        %v2409 = vsel %vm624, %v2398, %v2400
        %v2410 = vsel %vm624, %v2400, %v2402
        %v2420 = vsel %vm641, %v2363, 0
        %v2423 = vsel %vm641, %v2364, 0
        %v2426 = vsel %vm641, %v2365, 0
        %v2429 = vsel %vm641, %v2366, 0
        %2431 = vmatprep.subr.bf16.mxu0 %v2404
        %2432 = vmatpush1.bf16.msra.mxu0 %v2403
        %2433 = vmatprep.subr.bf16.mxu0 %v2406
        %2434 = vmatpush1.bf16.msra.mxu0 %v2405
        %2435 = vmatprep.subr.bf16.mxu0 %v2408
        %2436 = vmatpush1.bf16.msra.mxu0 %v2407
        %2437 = vmatprep.subr.bf16.mxu0 %v2410
        %2438 = vmatpush1.bf16.msra.mxu0 %v2409
        %2439 = vmatprep.subr.bf16.mxu0 0
        %2440 = vmatpush1.bf16.msra.mxu0 0
        %2441 = vmatprep.subr.bf16.mxu0 0
        %2442 = vmatpush1.bf16.msra.mxu0 0
        %2443 = vmatprep.subr.bf16.mxu0 0
        %2444 = vmatpush1.bf16.msra.mxu0 0
        %2445 = vmatprep.subr.bf16.mxu0 0
        %2446 = vmatpush1.bf16.msra.mxu0 0
        %2447 = vmatprep.subr.bf16.mxu0 0
        %2448 = vmatpush1.bf16.msra.mxu0 0
        %2449 = vmatprep.subr.bf16.mxu0 0
        %2450 = vmatpush1.bf16.msra.mxu0 0
        %2451 = vmatprep.subr.bf16.mxu0 0
        %2452 = vmatpush1.bf16.msra.mxu0 0
        %2453 = vmatprep.subr.bf16.mxu0 0
        %2454 = vmatpush1.bf16.msra.mxu0 0
        %2455 = vmatprep.subr.bf16.mxu0 0
        %2456 = vmatpush1.bf16.msra.mxu0 0
        %2457 = vmatprep.subr.bf16.mxu0 0
        %2458 = vmatpush1.bf16.msra.mxu0 0
        %2459 = vmatprep.subr.bf16.mxu0 0
        %2460 = vmatpush1.bf16.msra.mxu0 0
        %2461 = vmatprep.subr.bf16.mxu0 0
        %2462 = vmatpush1.bf16.msra.mxu0 0
        %2463 = vmatprep.mubr.bf16.mxu0 0
        %2464 = vmatmul.mubr.bf16.gmra.mrb[0].mxu0 %v2420
        %v2465 = vpop.f32.mrb[0].mxu0
        %v2466 = vadd.f32 0.0, %v2465
        %v2467 = vpop.f32.mrb[0].mxu0
        %v2468 = vadd.f32 0.0, %v2467
        %v2469 = vpop.f32.mrb[0].mxu0
        %v2470 = vadd.f32 0.0, %v2469
        %v2471 = vpop.f32.mrb[0].mxu0
        %v2472 = vadd.f32 0.0, %v2471
        %2473 = vmatprep.mubr.bf16.mxu0 0
        %2474 = vmatmul.mubr.bf16.gmra.mrb[0].mxu0 %v2423
        %v2475 = vpop.f32.mrb[0].mxu0
        %v2476 = vadd.f32 0.0, %v2475
        %v2477 = vpop.f32.mrb[0].mxu0
        %v2478 = vadd.f32 0.0, %v2477
        %v2479 = vpop.f32.mrb[0].mxu0
        %v2480 = vadd.f32 0.0, %v2479
        %v2481 = vpop.f32.mrb[0].mxu0
        %v2482 = vadd.f32 0.0, %v2481
        %2483 = vmatprep.mubr.bf16.mxu0 0
        %2484 = vmatmul.mubr.bf16.gmra.mrb[0].mxu0 %v2426
        %v2485 = vpop.f32.mrb[0].mxu0
        %v2486 = vadd.f32 0.0, %v2485
        %v2487 = vpop.f32.mrb[0].mxu0
        %v2488 = vadd.f32 0.0, %v2487
        %v2489 = vpop.f32.mrb[0].mxu0
        %v2490 = vadd.f32 0.0, %v2489
        %v2491 = vpop.f32.mrb[0].mxu0
        %v2492 = vadd.f32 0.0, %v2491
        %2493 = vmatprep.mubr.bf16.mxu0 0
        %2494 = vmatmul.mubr.bf16.gmra.mrb[0].mxu0 %v2429
        %v2495 = vpop.f32.mrb[0].mxu0
        %v2496 = vadd.f32 0.0, %v2495
        %v2497 = vpop.f32.mrb[0].mxu0
        %v2498 = vadd.f32 0.0, %v2497
        %v2499 = vpop.f32.mrb[0].mxu0
        %v2500 = vadd.f32 0.0, %v2499
        %v2501 = vpop.f32.mrb[0].mxu0
        %v2502 = vadd.f32 0.0, %v2501
        %2503 = vdwg.mxu0
        %v2512 = vunpack.c.l.b16 %v2307
        %v2513 = vunpack.c.l.b16 %v2308
        %v2514 = vunpack.c.l.b16 %v2309
        %v2515 = vunpack.c.l.b16 %v2310
        %v2516 = vunpack.c.l.b16 %v2311
        %v2517 = vunpack.c.l.b16 %v2312
        %v2518 = vunpack.c.l.b16 %v2313
        %v2519 = vunpack.c.l.b16 %v2314
        %v2520 = vpack.c.b16 %v2513, %v2512
        %v2521 = vpack.c.b16 %v2515, %v2514
        %v2522 = vpack.c.b16 %v2517, %v2516
        %v2523 = vpack.c.b16 %v2519, %v2518
        %v2525 = vsel %vm641, %v2520, 0
        %v2528 = vsel %vm641, %v2521, 0
        %v2531 = vsel %vm641, %v2522, 0
        %v2534 = vsel %vm641, %v2523, 0
        %2536 = vmatprep.subr.bf16.mxu0 %v2324
        %2537 = vmatpush1.bf16.msra.mxu0 %v2323
        %2538 = vmatprep.subr.bf16.mxu0 %v2326
        %2539 = vmatpush1.bf16.msra.mxu0 %v2325
        %2540 = vmatprep.subr.bf16.mxu0 %v2328
        %2541 = vmatpush1.bf16.msra.mxu0 %v2327
        %2542 = vmatprep.subr.bf16.mxu0 %v2330
        %2543 = vmatpush1.bf16.msra.mxu0 %v2329
        %2544 = vmatprep.subr.bf16.mxu0 0
        %2545 = vmatpush1.bf16.msra.mxu0 0
        %2546 = vmatprep.subr.bf16.mxu0 0
        %2547 = vmatpush1.bf16.msra.mxu0 0
        %2548 = vmatprep.subr.bf16.mxu0 0
        %2549 = vmatpush1.bf16.msra.mxu0 0
        %2550 = vmatprep.subr.bf16.mxu0 0
        %2551 = vmatpush1.bf16.msra.mxu0 0
        %2552 = vmatprep.subr.bf16.mxu0 0
        %2553 = vmatpush1.bf16.msra.mxu0 0
        %2554 = vmatprep.subr.bf16.mxu0 0
        %2555 = vmatpush1.bf16.msra.mxu0 0
        %2556 = vmatprep.subr.bf16.mxu0 0
        %2557 = vmatpush1.bf16.msra.mxu0 0
        %2558 = vmatprep.subr.bf16.mxu0 0
        %2559 = vmatpush1.bf16.msra.mxu0 0
        %2560 = vmatprep.subr.bf16.mxu0 0
        %2561 = vmatpush1.bf16.msra.mxu0 0
        %2562 = vmatprep.subr.bf16.mxu0 0
        %2563 = vmatpush1.bf16.msra.mxu0 0
        %2564 = vmatprep.subr.bf16.mxu0 0
        %2565 = vmatpush1.bf16.msra.mxu0 0
        %2566 = vmatprep.subr.bf16.mxu0 0
        %2567 = vmatpush1.bf16.msra.mxu0 0
        %2568 = vmatprep.mubr.bf16.mxu0 0
        %2569 = vmatmul.mubr.bf16.gmra.mrb[0].mxu0 %v2525
        %v2570 = vpop.f32.mrb[0].mxu0
        %v2571 = vadd.f32 %v2466, %v2570
        %v2572 = vpop.f32.mrb[0].mxu0
        %v2573 = vadd.f32 %v2468, %v2572
        %v2574 = vpop.f32.mrb[0].mxu0
        %v2575 = vadd.f32 %v2470, %v2574
        %v2576 = vpop.f32.mrb[0].mxu0
        %v2577 = vadd.f32 %v2472, %v2576
        %2578 = vmatprep.mubr.bf16.mxu0 0
        %2579 = vmatmul.mubr.bf16.gmra.mrb[0].mxu0 %v2528
        %v2580 = vpop.f32.mrb[0].mxu0
        %v2581 = vadd.f32 %v2476, %v2580
        %v2582 = vpop.f32.mrb[0].mxu0
        %v2583 = vadd.f32 %v2478, %v2582
        %v2584 = vpop.f32.mrb[0].mxu0
        %v2585 = vadd.f32 %v2480, %v2584
        %v2586 = vpop.f32.mrb[0].mxu0
        %v2587 = vadd.f32 %v2482, %v2586
        %2588 = vmatprep.mubr.bf16.mxu0 0
        %2589 = vmatmul.mubr.bf16.gmra.mrb[0].mxu0 %v2531
        %v2590 = vpop.f32.mrb[0].mxu0
        %v2591 = vadd.f32 %v2486, %v2590
        %v2592 = vpop.f32.mrb[0].mxu0
        %v2593 = vadd.f32 %v2488, %v2592
        %v2594 = vpop.f32.mrb[0].mxu0
        %v2595 = vadd.f32 %v2490, %v2594
        %v2596 = vpop.f32.mrb[0].mxu0
        %v2597 = vadd.f32 %v2492, %v2596
        %2598 = vmatprep.mubr.bf16.mxu0 0
        %2599 = vmatmul.mubr.bf16.gmra.mrb[0].mxu0 %v2534
        %v2600 = vpop.f32.mrb[0].mxu0
        %v2601 = vadd.f32 %v2496, %v2600
        %v2602 = vpop.f32.mrb[0].mxu0
        %v2603 = vadd.f32 %v2498, %v2602
        %v2604 = vpop.f32.mrb[0].mxu0
        %v2605 = vadd.f32 %v2500, %v2604
        %v2606 = vpop.f32.mrb[0].mxu0
        %v2607 = vadd.f32 %v2502, %v2606
        %2608 = vdwg.mxu0
        %s2609 = sadd.s32 %s2303, 2
        %s2610 = smul.u32 %s2609, 8
        %s2611 = smul.addr %s2610, 4
        %s2612 = scalar_lea.vmem %s3, %s2611
        %v2613 = vld [vmem:[%s2612] sm:$0xf]
        %v2614 = vld [vmem:[%s2612 + $0x4] sm:$0xf]
        %v2615 = vld [vmem:[%s2612 + $0x8] sm:$0xf]
        %v2616 = vld [vmem:[%s2612 + $0xc] sm:$0xf]
        %v2617 = vld [vmem:[%s2612 + $0x10] sm:$0xf]
        %v2618 = vld [vmem:[%s2612 + $0x14] sm:$0xf]
        %v2619 = vld [vmem:[%s2612 + $0x18] sm:$0xf]
        %v2620 = vld [vmem:[%s2612 + $0x1c] sm:$0xf]
        %v2621 = vsel %vm860, %v2315, 0
        %v2622 = vsel %vm861, %v2316, 0
        %v2623 = vsel %vm862, %v2343, 0
        %v2624 = vsel %vm860, %v2317, 0
        %v2625 = vsel %vm861, %v2318, 0
        %v2626 = vsel %vm862, %v2344, 0
        %v2627 = vsel %vm860, %v2319, 0
        %v2628 = vsel %vm861, %v2320, 0
        %v2629 = vsel %vm862, %v2345, 0
        %v2630 = vsel %vm860, %v2321, 0
        %v2631 = vsel %vm861, %v2322, 0
        %v2632 = vsel %vm862, %v2346, 0
        %v2641 = vunpack.c.l.b16 %v2613
        %v2642 = vunpack.c.l.b16 %v2614
        %v2643 = vunpack.c.l.b16 %v2615
        %v2644 = vunpack.c.l.b16 %v2616
        %v2645 = vunpack.c.l.b16 %v2617
        %v2646 = vunpack.c.l.b16 %v2618
        %v2647 = vunpack.c.l.b16 %v2619
        %v2648 = vunpack.c.l.b16 %v2620
        %v2649 = vpack.c.b16 %v2642, %v2641
        %v2650 = vpack.c.b16 %v2644, %v2643
        %v2651 = vpack.c.b16 %v2646, %v2645
        %v2652 = vpack.c.b16 %v2648, %v2647
        %2665 = vrot.lane.b32.xlu0 %v2621, 126
        %v2666 = vpop.permute.xlu0 %2665
        %2667 = vrot.lane.b32.xlu0 %v2622, 126
        %v2668 = vpop.permute.xlu0 %2667
        %2669 = vrot.lane.b32.xlu0 %v2623, 126
        %v2670 = vpop.permute.xlu0 %2669
        %2671 = vrot.lane.b32.xlu0 %v2624, 126
        %v2672 = vpop.permute.xlu0 %2671
        %2673 = vrot.lane.b32.xlu0 %v2625, 126
        %v2674 = vpop.permute.xlu0 %2673
        %2675 = vrot.lane.b32.xlu0 %v2626, 126
        %v2676 = vpop.permute.xlu0 %2675
        %2677 = vrot.lane.b32.xlu0 %v2627, 126
        %v2678 = vpop.permute.xlu0 %2677
        %2679 = vrot.lane.b32.xlu0 %v2628, 126
        %v2680 = vpop.permute.xlu0 %2679
        %2681 = vrot.lane.b32.xlu0 %v2629, 126
        %v2682 = vpop.permute.xlu0 %2681
        %2683 = vrot.lane.b32.xlu0 %v2630, 126
        %v2684 = vpop.permute.xlu0 %2683
        %2685 = vrot.lane.b32.xlu0 %v2631, 126
        %v2686 = vpop.permute.xlu0 %2685
        %2687 = vrot.lane.b32.xlu0 %v2632, 126
        %v2688 = vpop.permute.xlu0 %2687
        %v2689 = vsel %vm931, %v2666, %v2668
        %v2690 = vsel %vm931, %v2668, %v2670
        %v2691 = vsel %vm931, %v2672, %v2674
        %v2692 = vsel %vm931, %v2674, %v2676
        %v2693 = vsel %vm931, %v2678, %v2680
        %v2694 = vsel %vm931, %v2680, %v2682
        %v2695 = vsel %vm931, %v2684, %v2686
        %v2696 = vsel %vm931, %v2686, %v2688
        %v2706 = vsel %vm641, %v2649, 0
        %v2709 = vsel %vm641, %v2650, 0
        %v2712 = vsel %vm641, %v2651, 0
        %v2715 = vsel %vm641, %v2652, 0
        %2717 = vmatprep.subr.bf16.mxu0 %v2690
        %2718 = vmatpush1.bf16.msra.mxu0 %v2689
        %2719 = vmatprep.subr.bf16.mxu0 %v2692
        %2720 = vmatpush1.bf16.msra.mxu0 %v2691
        %2721 = vmatprep.subr.bf16.mxu0 %v2694
        %2722 = vmatpush1.bf16.msra.mxu0 %v2693
        %2723 = vmatprep.subr.bf16.mxu0 %v2696
        %2724 = vmatpush1.bf16.msra.mxu0 %v2695
        %2725 = vmatprep.subr.bf16.mxu0 0
        %2726 = vmatpush1.bf16.msra.mxu0 0
        %2727 = vmatprep.subr.bf16.mxu0 0
        %2728 = vmatpush1.bf16.msra.mxu0 0
        %2729 = vmatprep.subr.bf16.mxu0 0
        %2730 = vmatpush1.bf16.msra.mxu0 0
        %2731 = vmatprep.subr.bf16.mxu0 0
        %2732 = vmatpush1.bf16.msra.mxu0 0
        %2733 = vmatprep.subr.bf16.mxu0 0
        %2734 = vmatpush1.bf16.msra.mxu0 0
        %2735 = vmatprep.subr.bf16.mxu0 0
        %2736 = vmatpush1.bf16.msra.mxu0 0
        %2737 = vmatprep.subr.bf16.mxu0 0
        %2738 = vmatpush1.bf16.msra.mxu0 0
        %2739 = vmatprep.subr.bf16.mxu0 0
        %2740 = vmatpush1.bf16.msra.mxu0 0
        %2741 = vmatprep.subr.bf16.mxu0 0
        %2742 = vmatpush1.bf16.msra.mxu0 0
        %2743 = vmatprep.subr.bf16.mxu0 0
        %2744 = vmatpush1.bf16.msra.mxu0 0
        %2745 = vmatprep.subr.bf16.mxu0 0
        %2746 = vmatpush1.bf16.msra.mxu0 0
        %2747 = vmatprep.subr.bf16.mxu0 0
        %2748 = vmatpush1.bf16.msra.mxu0 0
        %2749 = vmatprep.mubr.bf16.mxu0 0
        %2750 = vmatmul.mubr.bf16.gmra.mrb[0].mxu0 %v2706
        %v2751 = vpop.f32.mrb[0].mxu0
        %v2752 = vadd.f32 0.0, %v2751
        %v2753 = vpop.f32.mrb[0].mxu0
        %v2754 = vadd.f32 0.0, %v2753
        %v2755 = vpop.f32.mrb[0].mxu0
        %v2756 = vadd.f32 0.0, %v2755
        %v2757 = vpop.f32.mrb[0].mxu0
        %v2758 = vadd.f32 0.0, %v2757
        %2759 = vmatprep.mubr.bf16.mxu0 0
        %2760 = vmatmul.mubr.bf16.gmra.mrb[0].mxu0 %v2709
        %v2761 = vpop.f32.mrb[0].mxu0
        %v2762 = vadd.f32 0.0, %v2761
        %v2763 = vpop.f32.mrb[0].mxu0
        %v2764 = vadd.f32 0.0, %v2763
        %v2765 = vpop.f32.mrb[0].mxu0
        %v2766 = vadd.f32 0.0, %v2765
        %v2767 = vpop.f32.mrb[0].mxu0
        %v2768 = vadd.f32 0.0, %v2767
        %2769 = vmatprep.mubr.bf16.mxu0 0
        %2770 = vmatmul.mubr.bf16.gmra.mrb[0].mxu0 %v2712
        %v2771 = vpop.f32.mrb[0].mxu0
        %v2772 = vadd.f32 0.0, %v2771
        %v2773 = vpop.f32.mrb[0].mxu0
        %v2774 = vadd.f32 0.0, %v2773
        %v2775 = vpop.f32.mrb[0].mxu0
        %v2776 = vadd.f32 0.0, %v2775
        %v2777 = vpop.f32.mrb[0].mxu0
        %v2778 = vadd.f32 0.0, %v2777
        %2779 = vmatprep.mubr.bf16.mxu0 0
        %2780 = vmatmul.mubr.bf16.gmra.mrb[0].mxu0 %v2715
        %v2781 = vpop.f32.mrb[0].mxu0
        %v2782 = vadd.f32 0.0, %v2781
        %v2783 = vpop.f32.mrb[0].mxu0
        %v2784 = vadd.f32 0.0, %v2783
        %v2785 = vpop.f32.mrb[0].mxu0
        %v2786 = vadd.f32 0.0, %v2785
        %v2787 = vpop.f32.mrb[0].mxu0
        %v2788 = vadd.f32 0.0, %v2787
        %2789 = vdwg.mxu0
        %v2790 = vadd.f32 %v2571, %v2752
        %v2791 = vadd.f32 %v2573, %v2754
        %v2792 = vadd.f32 %v2575, %v2756
        %v2793 = vadd.f32 %v2577, %v2758
        %v2794 = vadd.f32 %v2581, %v2762
        %v2795 = vadd.f32 %v2583, %v2764
        %v2796 = vadd.f32 %v2585, %v2766
        %v2797 = vadd.f32 %v2587, %v2768
        %v2798 = vadd.f32 %v2591, %v2772
        %v2799 = vadd.f32 %v2593, %v2774
        %v2800 = vadd.f32 %v2595, %v2776
        %v2801 = vadd.f32 %v2597, %v2778
        %v2802 = vadd.f32 %v2601, %v2782
        %v2803 = vadd.f32 %v2603, %v2784
        %v2804 = vadd.f32 %v2605, %v2786
        %v2805 = vadd.f32 %v2607, %v2788
        %s2806 = sadd.s32 %s2303, 3
        %s2807 = smul.u32 %s2806, 8
        %s2808 = smul.addr %s2807, 4
        %s2809 = scalar_lea.vmem %s3, %s2808
        %v2810 = vld [vmem:[%s2809] sm:$0xf]
        %v2811 = vld [vmem:[%s2809 + $0x4] sm:$0xf]
        %v2812 = vld [vmem:[%s2809 + $0x8] sm:$0xf]
        %v2813 = vld [vmem:[%s2809 + $0xc] sm:$0xf]
        %v2814 = vld [vmem:[%s2809 + $0x10] sm:$0xf]
        %v2815 = vld [vmem:[%s2809 + $0x14] sm:$0xf]
        %v2816 = vld [vmem:[%s2809 + $0x18] sm:$0xf]
        %v2817 = vld [vmem:[%s2809 + $0x1c] sm:$0xf]
        %v2818 = vsel %vm1067, %v2315, 0
        %v2819 = vsel %vm1068, %v2316, 0
        %v2820 = vsel %vm1069, %v2343, 0
        %v2821 = vsel %vm1067, %v2317, 0
        %v2822 = vsel %vm1068, %v2318, 0
        %v2823 = vsel %vm1069, %v2344, 0
        %v2824 = vsel %vm1067, %v2319, 0
        %v2825 = vsel %vm1068, %v2320, 0
        %v2826 = vsel %vm1069, %v2345, 0
        %v2827 = vsel %vm1067, %v2321, 0
        %v2828 = vsel %vm1068, %v2322, 0
        %v2829 = vsel %vm1069, %v2346, 0
        %v2838 = vunpack.c.l.b16 %v2810
        %v2839 = vunpack.c.l.b16 %v2811
        %v2840 = vunpack.c.l.b16 %v2812
        %v2841 = vunpack.c.l.b16 %v2813
        %v2842 = vunpack.c.l.b16 %v2814
        %v2843 = vunpack.c.l.b16 %v2815
        %v2844 = vunpack.c.l.b16 %v2816
        %v2845 = vunpack.c.l.b16 %v2817
        %v2846 = vpack.c.b16 %v2839, %v2838
        %v2847 = vpack.c.b16 %v2841, %v2840
        %v2848 = vpack.c.b16 %v2843, %v2842
        %v2849 = vpack.c.b16 %v2845, %v2844
        %2862 = vrot.lane.b32.xlu0 %v2818, 112
        %v2863 = vpop.permute.xlu0 %2862
        %2864 = vrot.lane.b32.xlu0 %v2819, 112
        %v2865 = vpop.permute.xlu0 %2864
        %2866 = vrot.lane.b32.xlu0 %v2820, 112
        %v2867 = vpop.permute.xlu0 %2866
        %2868 = vrot.lane.b32.xlu0 %v2821, 112
        %v2869 = vpop.permute.xlu0 %2868
        %2870 = vrot.lane.b32.xlu0 %v2822, 112
        %v2871 = vpop.permute.xlu0 %2870
        %2872 = vrot.lane.b32.xlu0 %v2823, 112
        %v2873 = vpop.permute.xlu0 %2872
        %2874 = vrot.lane.b32.xlu0 %v2824, 112
        %v2875 = vpop.permute.xlu0 %2874
        %2876 = vrot.lane.b32.xlu0 %v2825, 112
        %v2877 = vpop.permute.xlu0 %2876
        %2878 = vrot.lane.b32.xlu0 %v2826, 112
        %v2879 = vpop.permute.xlu0 %2878
        %2880 = vrot.lane.b32.xlu0 %v2827, 112
        %v2881 = vpop.permute.xlu0 %2880
        %2882 = vrot.lane.b32.xlu0 %v2828, 112
        %v2883 = vpop.permute.xlu0 %2882
        %2884 = vrot.lane.b32.xlu0 %v2829, 112
        %v2885 = vpop.permute.xlu0 %2884
        %v2886 = vsel %vm1138, %v2863, %v2865
        %v2887 = vsel %vm1138, %v2865, %v2867
        %v2888 = vsel %vm1138, %v2869, %v2871
        %v2889 = vsel %vm1138, %v2871, %v2873
        %v2890 = vsel %vm1138, %v2875, %v2877
        %v2891 = vsel %vm1138, %v2877, %v2879
        %v2892 = vsel %vm1138, %v2881, %v2883
        %v2893 = vsel %vm1138, %v2883, %v2885
        %v2903 = vsel %vm641, %v2846, 0
        %v2906 = vsel %vm641, %v2847, 0
        %v2909 = vsel %vm641, %v2848, 0
        %v2912 = vsel %vm641, %v2849, 0
        %2914 = vmatprep.subr.bf16.mxu0 %v2887
        %2915 = vmatpush1.bf16.msra.mxu0 %v2886
        %2916 = vmatprep.subr.bf16.mxu0 %v2889
        %2917 = vmatpush1.bf16.msra.mxu0 %v2888
        %2918 = vmatprep.subr.bf16.mxu0 %v2891
        %2919 = vmatpush1.bf16.msra.mxu0 %v2890
        %2920 = vmatprep.subr.bf16.mxu0 %v2893
        %2921 = vmatpush1.bf16.msra.mxu0 %v2892
        %2922 = vmatprep.subr.bf16.mxu0 0
        %2923 = vmatpush1.bf16.msra.mxu0 0
        %2924 = vmatprep.subr.bf16.mxu0 0
        %2925 = vmatpush1.bf16.msra.mxu0 0
        %2926 = vmatprep.subr.bf16.mxu0 0
        %2927 = vmatpush1.bf16.msra.mxu0 0
        %2928 = vmatprep.subr.bf16.mxu0 0
        %2929 = vmatpush1.bf16.msra.mxu0 0
        %2930 = vmatprep.subr.bf16.mxu0 0
        %2931 = vmatpush1.bf16.msra.mxu0 0
        %2932 = vmatprep.subr.bf16.mxu0 0
        %2933 = vmatpush1.bf16.msra.mxu0 0
        %2934 = vmatprep.subr.bf16.mxu0 0
        %2935 = vmatpush1.bf16.msra.mxu0 0
        %2936 = vmatprep.subr.bf16.mxu0 0
        %2937 = vmatpush1.bf16.msra.mxu0 0
        %2938 = vmatprep.subr.bf16.mxu0 0
        %2939 = vmatpush1.bf16.msra.mxu0 0
        %2940 = vmatprep.subr.bf16.mxu0 0
        %2941 = vmatpush1.bf16.msra.mxu0 0
        %2942 = vmatprep.subr.bf16.mxu0 0
        %2943 = vmatpush1.bf16.msra.mxu0 0
        %2944 = vmatprep.subr.bf16.mxu0 0
        %2945 = vmatpush1.bf16.msra.mxu0 0
        %2946 = vmatprep.mubr.bf16.mxu0 0
        %2947 = vmatmul.mubr.bf16.gmra.mrb[0].mxu0 %v2903
        %v2948 = vpop.f32.mrb[0].mxu0
        %v2949 = vadd.f32 0.0, %v2948
        %v2950 = vpop.f32.mrb[0].mxu0
        %v2951 = vadd.f32 0.0, %v2950
        %v2952 = vpop.f32.mrb[0].mxu0
        %v2953 = vadd.f32 0.0, %v2952
        %v2954 = vpop.f32.mrb[0].mxu0
        %v2955 = vadd.f32 0.0, %v2954
        %2956 = vmatprep.mubr.bf16.mxu0 0
        %2957 = vmatmul.mubr.bf16.gmra.mrb[0].mxu0 %v2906
        %v2958 = vpop.f32.mrb[0].mxu0
        %v2959 = vadd.f32 0.0, %v2958
        %v2960 = vpop.f32.mrb[0].mxu0
        %v2961 = vadd.f32 0.0, %v2960
        %v2962 = vpop.f32.mrb[0].mxu0
        %v2963 = vadd.f32 0.0, %v2962
        %v2964 = vpop.f32.mrb[0].mxu0
        %v2965 = vadd.f32 0.0, %v2964
        %2966 = vmatprep.mubr.bf16.mxu0 0
        %2967 = vmatmul.mubr.bf16.gmra.mrb[0].mxu0 %v2909
        %v2968 = vpop.f32.mrb[0].mxu0
        %v2969 = vadd.f32 0.0, %v2968
        %v2970 = vpop.f32.mrb[0].mxu0
        %v2971 = vadd.f32 0.0, %v2970
        %v2972 = vpop.f32.mrb[0].mxu0
        %v2973 = vadd.f32 0.0, %v2972
        %v2974 = vpop.f32.mrb[0].mxu0
        %v2975 = vadd.f32 0.0, %v2974
        %2976 = vmatprep.mubr.bf16.mxu0 0
        %2977 = vmatmul.mubr.bf16.gmra.mrb[0].mxu0 %v2912
        %v2978 = vpop.f32.mrb[0].mxu0
        %v2979 = vadd.f32 0.0, %v2978
        %v2980 = vpop.f32.mrb[0].mxu0
        %v2981 = vadd.f32 0.0, %v2980
        %v2982 = vpop.f32.mrb[0].mxu0
        %v2983 = vadd.f32 0.0, %v2982
        %v2984 = vpop.f32.mrb[0].mxu0
        %v2985 = vadd.f32 0.0, %v2984
        %2986 = vdwg.mxu0
        %v2987 = vadd.f32 %v2790, %v2949
        %v2988 = vadd.f32 %v2791, %v2951
        %v2989 = vadd.f32 %v2792, %v2953
        %v2990 = vadd.f32 %v2793, %v2955
        %v2991 = vadd.f32 %v2794, %v2959
        %v2992 = vadd.f32 %v2795, %v2961
        %v2993 = vadd.f32 %v2796, %v2963
        %v2994 = vadd.f32 %v2797, %v2965
        %v2995 = vadd.f32 %v2798, %v2969
        %v2996 = vadd.f32 %v2799, %v2971
        %v2997 = vadd.f32 %v2800, %v2973
        %v2998 = vadd.f32 %v2801, %v2975
        %v2999 = vadd.f32 %v2802, %v2979
        %v3000 = vadd.f32 %v2803, %v2981
        %v3001 = vadd.f32 %v2804, %v2983
        %v3002 = vadd.f32 %v2805, %v2985
        %s3003 = sadd.s32 %s2303, 4
        %s3004 = smul.u32 %s3003, 8
        %s3005 = smul.addr %s3004, 4
        %s3006 = scalar_lea.vmem %s3, %s3005
        %v3007 = vld [vmem:[%s3006] sm:$0xf]
        %v3008 = vld [vmem:[%s3006 + $0x4] sm:$0xf]
        %v3009 = vld [vmem:[%s3006 + $0x8] sm:$0xf]
        %v3010 = vld [vmem:[%s3006 + $0xc] sm:$0xf]
        %v3011 = vld [vmem:[%s3006 + $0x10] sm:$0xf]
        %v3012 = vld [vmem:[%s3006 + $0x14] sm:$0xf]
        %v3013 = vld [vmem:[%s3006 + $0x18] sm:$0xf]
        %v3014 = vld [vmem:[%s3006 + $0x1c] sm:$0xf]
        %v3023 = vunpack.c.l.b16 %v3007
        %v3024 = vunpack.c.l.b16 %v3008
        %v3025 = vunpack.c.l.b16 %v3009
        %v3026 = vunpack.c.l.b16 %v3010
        %v3027 = vunpack.c.l.b16 %v3011
        %v3028 = vunpack.c.l.b16 %v3012
        %v3029 = vunpack.c.l.b16 %v3013
        %v3030 = vunpack.c.l.b16 %v3014
        %v3031 = vpack.c.b16 %v3024, %v3023
        %v3032 = vpack.c.b16 %v3026, %v3025
        %v3033 = vpack.c.b16 %v3028, %v3027
        %v3034 = vpack.c.b16 %v3030, %v3029
        %3035 = vrot.lane.b32.xlu0 %v2315, 111
        %v3036 = vpop.permute.xlu0 %3035
        %3037 = vrot.lane.b32.xlu0 %v2316, 111
        %v3038 = vpop.permute.xlu0 %3037
        %3039 = vrot.lane.b32.xlu0 %v2343, 111
        %v3040 = vpop.permute.xlu0 %3039
        %3041 = vrot.lane.b32.xlu0 %v2317, 111
        %v3042 = vpop.permute.xlu0 %3041
        %3043 = vrot.lane.b32.xlu0 %v2318, 111
        %v3044 = vpop.permute.xlu0 %3043
        %3045 = vrot.lane.b32.xlu0 %v2344, 111
        %v3046 = vpop.permute.xlu0 %3045
        %3047 = vrot.lane.b32.xlu0 %v2319, 111
        %v3048 = vpop.permute.xlu0 %3047
        %3049 = vrot.lane.b32.xlu0 %v2320, 111
        %v3050 = vpop.permute.xlu0 %3049
        %3051 = vrot.lane.b32.xlu0 %v2345, 111
        %v3052 = vpop.permute.xlu0 %3051
        %3053 = vrot.lane.b32.xlu0 %v2321, 111
        %v3054 = vpop.permute.xlu0 %3053
        %3055 = vrot.lane.b32.xlu0 %v2322, 111
        %v3056 = vpop.permute.xlu0 %3055
        %3057 = vrot.lane.b32.xlu0 %v2346, 111
        %v3058 = vpop.permute.xlu0 %3057
        %v3059 = vsel %vm1312, %v3036, %v3038
        %v3060 = vsel %vm1312, %v3038, %v3040
        %v3061 = vsel %vm1312, %v3042, %v3044
        %v3062 = vsel %vm1312, %v3044, %v3046
        %v3063 = vsel %vm1312, %v3048, %v3050
        %v3064 = vsel %vm1312, %v3050, %v3052
        %v3065 = vsel %vm1312, %v3054, %v3056
        %v3066 = vsel %vm1312, %v3056, %v3058
        %v3076 = vsel %vm641, %v3031, 0
        %v3079 = vsel %vm641, %v3032, 0
        %v3082 = vsel %vm641, %v3033, 0
        %v3085 = vsel %vm641, %v3034, 0
        %3087 = vmatprep.subr.bf16.mxu0 %v3060
        %3088 = vmatpush1.bf16.msra.mxu0 %v3059
        %3089 = vmatprep.subr.bf16.mxu0 %v3062
        %3090 = vmatpush1.bf16.msra.mxu0 %v3061
        %3091 = vmatprep.subr.bf16.mxu0 %v3064
        %3092 = vmatpush1.bf16.msra.mxu0 %v3063
        %3093 = vmatprep.subr.bf16.mxu0 %v3066
        %3094 = vmatpush1.bf16.msra.mxu0 %v3065
        %3095 = vmatprep.subr.bf16.mxu0 0
        %3096 = vmatpush1.bf16.msra.mxu0 0
        %3097 = vmatprep.subr.bf16.mxu0 0
        %3098 = vmatpush1.bf16.msra.mxu0 0
        %3099 = vmatprep.subr.bf16.mxu0 0
        %3100 = vmatpush1.bf16.msra.mxu0 0
        %3101 = vmatprep.subr.bf16.mxu0 0
        %3102 = vmatpush1.bf16.msra.mxu0 0
        %3103 = vmatprep.subr.bf16.mxu0 0
        %3104 = vmatpush1.bf16.msra.mxu0 0
        %3105 = vmatprep.subr.bf16.mxu0 0
        %3106 = vmatpush1.bf16.msra.mxu0 0
        %3107 = vmatprep.subr.bf16.mxu0 0
        %3108 = vmatpush1.bf16.msra.mxu0 0
        %3109 = vmatprep.subr.bf16.mxu0 0
        %3110 = vmatpush1.bf16.msra.mxu0 0
        %3111 = vmatprep.subr.bf16.mxu0 0
        %3112 = vmatpush1.bf16.msra.mxu0 0
        %3113 = vmatprep.subr.bf16.mxu0 0
        %3114 = vmatpush1.bf16.msra.mxu0 0
        %3115 = vmatprep.subr.bf16.mxu0 0
        %3116 = vmatpush1.bf16.msra.mxu0 0
        %3117 = vmatprep.subr.bf16.mxu0 0
        %3118 = vmatpush1.bf16.msra.mxu0 0
        %3119 = vmatprep.mubr.bf16.mxu0 0
        %3120 = vmatmul.mubr.bf16.gmra.mrb[0].mxu0 %v3076
        %v3121 = vpop.f32.mrb[0].mxu0
        %v3122 = vadd.f32 0.0, %v3121
        %v3123 = vpop.f32.mrb[0].mxu0
        %v3124 = vadd.f32 0.0, %v3123
        %v3125 = vpop.f32.mrb[0].mxu0
        %v3126 = vadd.f32 0.0, %v3125
        %v3127 = vpop.f32.mrb[0].mxu0
        %v3128 = vadd.f32 0.0, %v3127
        %3129 = vmatprep.mubr.bf16.mxu0 0
        %3130 = vmatmul.mubr.bf16.gmra.mrb[0].mxu0 %v3079
        %v3131 = vpop.f32.mrb[0].mxu0
        %v3132 = vadd.f32 0.0, %v3131
        %v3133 = vpop.f32.mrb[0].mxu0
        %v3134 = vadd.f32 0.0, %v3133
        %v3135 = vpop.f32.mrb[0].mxu0
        %v3136 = vadd.f32 0.0, %v3135
        %v3137 = vpop.f32.mrb[0].mxu0
        %v3138 = vadd.f32 0.0, %v3137
        %3139 = vmatprep.mubr.bf16.mxu0 0
        %3140 = vmatmul.mubr.bf16.gmra.mrb[0].mxu0 %v3082
        %v3141 = vpop.f32.mrb[0].mxu0
        %v3142 = vadd.f32 0.0, %v3141
        %v3143 = vpop.f32.mrb[0].mxu0
        %v3144 = vadd.f32 0.0, %v3143
        %v3145 = vpop.f32.mrb[0].mxu0
        %v3146 = vadd.f32 0.0, %v3145
        %v3147 = vpop.f32.mrb[0].mxu0
        %v3148 = vadd.f32 0.0, %v3147
        %3149 = vmatprep.mubr.bf16.mxu0 0
        %3150 = vmatmul.mubr.bf16.gmra.mrb[0].mxu0 %v3085
        %v3151 = vpop.f32.mrb[0].mxu0
        %v3152 = vadd.f32 0.0, %v3151
        %v3153 = vpop.f32.mrb[0].mxu0
        %v3154 = vadd.f32 0.0, %v3153
        %v3155 = vpop.f32.mrb[0].mxu0
        %v3156 = vadd.f32 0.0, %v3155
        %v3157 = vpop.f32.mrb[0].mxu0
        %v3158 = vadd.f32 0.0, %v3157
        %3159 = vdwg.mxu0
        %v3160 = vadd.f32 %v2987, %v3122
        %v3161 = vadd.f32 %v2988, %v3124
        %v3162 = vadd.f32 %v2989, %v3126
        %v3163 = vadd.f32 %v2990, %v3128
        %v3164 = vadd.f32 %v2991, %v3132
        %v3165 = vadd.f32 %v2992, %v3134
        %v3166 = vadd.f32 %v2993, %v3136
        %v3167 = vadd.f32 %v2994, %v3138
        %v3168 = vadd.f32 %v2995, %v3142
        %v3169 = vadd.f32 %v2996, %v3144
        %v3170 = vadd.f32 %v2997, %v3146
        %v3171 = vadd.f32 %v2998, %v3148
        %v3172 = vadd.f32 %v2999, %v3152
        %v3173 = vadd.f32 %v3000, %v3154
        %v3174 = vadd.f32 %v3001, %v3156
        %v3175 = vadd.f32 %v3002, %v3158
        %s3176 = sadd.s32 %s2303, 5
        %s3177 = smul.u32 %s3176, 8
        %s3178 = smul.addr %s3177, 4
        %s3179 = scalar_lea.vmem %s3, %s3178
        %v3180 = vld [vmem:[%s3179] sm:$0xf]
        %v3181 = vld [vmem:[%s3179 + $0x4] sm:$0xf]
        %v3182 = vld [vmem:[%s3179 + $0x8] sm:$0xf]
        %v3183 = vld [vmem:[%s3179 + $0xc] sm:$0xf]
        %v3184 = vld [vmem:[%s3179 + $0x10] sm:$0xf]
        %v3185 = vld [vmem:[%s3179 + $0x14] sm:$0xf]
        %v3186 = vld [vmem:[%s3179 + $0x18] sm:$0xf]
        %v3187 = vld [vmem:[%s3179 + $0x1c] sm:$0xf]
        %v3188 = vsel %vm1448, %v2315, 0
        %v3189 = vsel %vm1449, %v2316, 0
        %v3190 = vsel %vm1450, %v2343, 0
        %v3191 = vsel %vm1448, %v2317, 0
        %v3192 = vsel %vm1449, %v2318, 0
        %v3193 = vsel %vm1450, %v2344, 0
        %v3194 = vsel %vm1448, %v2319, 0
        %v3195 = vsel %vm1449, %v2320, 0
        %v3196 = vsel %vm1450, %v2345, 0
        %v3197 = vsel %vm1448, %v2321, 0
        %v3198 = vsel %vm1449, %v2322, 0
        %v3199 = vsel %vm1450, %v2346, 0
        %v3208 = vunpack.c.l.b16 %v3180
        %v3209 = vunpack.c.l.b16 %v3181
        %v3210 = vunpack.c.l.b16 %v3182
        %v3211 = vunpack.c.l.b16 %v3183
        %v3212 = vunpack.c.l.b16 %v3184
        %v3213 = vunpack.c.l.b16 %v3185
        %v3214 = vunpack.c.l.b16 %v3186
        %v3215 = vunpack.c.l.b16 %v3187
        %v3216 = vpack.c.b16 %v3209, %v3208
        %v3217 = vpack.c.b16 %v3211, %v3210
        %v3218 = vpack.c.b16 %v3213, %v3212
        %v3219 = vpack.c.b16 %v3215, %v3214
        %3232 = vrot.lane.b32.xlu0 %v3188, 110
        %v3233 = vpop.permute.xlu0 %3232
        %3234 = vrot.lane.b32.xlu0 %v3189, 110
        %v3235 = vpop.permute.xlu0 %3234
        %3236 = vrot.lane.b32.xlu0 %v3190, 110
        %v3237 = vpop.permute.xlu0 %3236
        %3238 = vrot.lane.b32.xlu0 %v3191, 110
        %v3239 = vpop.permute.xlu0 %3238
        %3240 = vrot.lane.b32.xlu0 %v3192, 110
        %v3241 = vpop.permute.xlu0 %3240
        %3242 = vrot.lane.b32.xlu0 %v3193, 110
        %v3243 = vpop.permute.xlu0 %3242
        %3244 = vrot.lane.b32.xlu0 %v3194, 110
        %v3245 = vpop.permute.xlu0 %3244
        %3246 = vrot.lane.b32.xlu0 %v3195, 110
        %v3247 = vpop.permute.xlu0 %3246
        %3248 = vrot.lane.b32.xlu0 %v3196, 110
        %v3249 = vpop.permute.xlu0 %3248
        %3250 = vrot.lane.b32.xlu0 %v3197, 110
        %v3251 = vpop.permute.xlu0 %3250
        %3252 = vrot.lane.b32.xlu0 %v3198, 110
        %v3253 = vpop.permute.xlu0 %3252
        %3254 = vrot.lane.b32.xlu0 %v3199, 110
        %v3255 = vpop.permute.xlu0 %3254
        %v3256 = vsel %vm1519, %v3233, %v3235
        %v3257 = vsel %vm1519, %v3235, %v3237
        %v3258 = vsel %vm1519, %v3239, %v3241
        %v3259 = vsel %vm1519, %v3241, %v3243
        %v3260 = vsel %vm1519, %v3245, %v3247
        %v3261 = vsel %vm1519, %v3247, %v3249
        %v3262 = vsel %vm1519, %v3251, %v3253
        %v3263 = vsel %vm1519, %v3253, %v3255
        %v3273 = vsel %vm641, %v3216, 0
        %v3276 = vsel %vm641, %v3217, 0
        %v3279 = vsel %vm641, %v3218, 0
        %v3282 = vsel %vm641, %v3219, 0
        %3284 = vmatprep.subr.bf16.mxu0 %v3257
        %3285 = vmatpush1.bf16.msra.mxu0 %v3256
        %3286 = vmatprep.subr.bf16.mxu0 %v3259
        %3287 = vmatpush1.bf16.msra.mxu0 %v3258
        %3288 = vmatprep.subr.bf16.mxu0 %v3261
        %3289 = vmatpush1.bf16.msra.mxu0 %v3260
        %3290 = vmatprep.subr.bf16.mxu0 %v3263
        %3291 = vmatpush1.bf16.msra.mxu0 %v3262
        %3292 = vmatprep.subr.bf16.mxu0 0
        %3293 = vmatpush1.bf16.msra.mxu0 0
        %3294 = vmatprep.subr.bf16.mxu0 0
        %3295 = vmatpush1.bf16.msra.mxu0 0
        %3296 = vmatprep.subr.bf16.mxu0 0
        %3297 = vmatpush1.bf16.msra.mxu0 0
        %3298 = vmatprep.subr.bf16.mxu0 0
        %3299 = vmatpush1.bf16.msra.mxu0 0
        %3300 = vmatprep.subr.bf16.mxu0 0
        %3301 = vmatpush1.bf16.msra.mxu0 0
        %3302 = vmatprep.subr.bf16.mxu0 0
        %3303 = vmatpush1.bf16.msra.mxu0 0
        %3304 = vmatprep.subr.bf16.mxu0 0
        %3305 = vmatpush1.bf16.msra.mxu0 0
        %3306 = vmatprep.subr.bf16.mxu0 0
        %3307 = vmatpush1.bf16.msra.mxu0 0
        %3308 = vmatprep.subr.bf16.mxu0 0
        %3309 = vmatpush1.bf16.msra.mxu0 0
        %3310 = vmatprep.subr.bf16.mxu0 0
        %3311 = vmatpush1.bf16.msra.mxu0 0
        %3312 = vmatprep.subr.bf16.mxu0 0
        %3313 = vmatpush1.bf16.msra.mxu0 0
        %3314 = vmatprep.subr.bf16.mxu0 0
        %3315 = vmatpush1.bf16.msra.mxu0 0
        %3316 = vmatprep.mubr.bf16.mxu0 0
        %3317 = vmatmul.mubr.bf16.gmra.mrb[0].mxu0 %v3273
        %v3318 = vpop.f32.mrb[0].mxu0
        %v3319 = vadd.f32 0.0, %v3318
        %v3320 = vpop.f32.mrb[0].mxu0
        %v3321 = vadd.f32 0.0, %v3320
        %v3322 = vpop.f32.mrb[0].mxu0
        %v3323 = vadd.f32 0.0, %v3322
        %v3324 = vpop.f32.mrb[0].mxu0
        %v3325 = vadd.f32 0.0, %v3324
        %3326 = vmatprep.mubr.bf16.mxu0 0
        %3327 = vmatmul.mubr.bf16.gmra.mrb[0].mxu0 %v3276
        %v3328 = vpop.f32.mrb[0].mxu0
        %v3329 = vadd.f32 0.0, %v3328
        %v3330 = vpop.f32.mrb[0].mxu0
        %v3331 = vadd.f32 0.0, %v3330
        %v3332 = vpop.f32.mrb[0].mxu0
        %v3333 = vadd.f32 0.0, %v3332
        %v3334 = vpop.f32.mrb[0].mxu0
        %v3335 = vadd.f32 0.0, %v3334
        %3336 = vmatprep.mubr.bf16.mxu0 0
        %3337 = vmatmul.mubr.bf16.gmra.mrb[0].mxu0 %v3279
        %v3338 = vpop.f32.mrb[0].mxu0
        %v3339 = vadd.f32 0.0, %v3338
        %v3340 = vpop.f32.mrb[0].mxu0
        %v3341 = vadd.f32 0.0, %v3340
        %v3342 = vpop.f32.mrb[0].mxu0
        %v3343 = vadd.f32 0.0, %v3342
        %v3344 = vpop.f32.mrb[0].mxu0
        %v3345 = vadd.f32 0.0, %v3344
        %3346 = vmatprep.mubr.bf16.mxu0 0
        %3347 = vmatmul.mubr.bf16.gmra.mrb[0].mxu0 %v3282
        %v3348 = vpop.f32.mrb[0].mxu0
        %v3349 = vadd.f32 0.0, %v3348
        %v3350 = vpop.f32.mrb[0].mxu0
        %v3351 = vadd.f32 0.0, %v3350
        %v3352 = vpop.f32.mrb[0].mxu0
        %v3353 = vadd.f32 0.0, %v3352
        %v3354 = vpop.f32.mrb[0].mxu0
        %v3355 = vadd.f32 0.0, %v3354
        %3356 = vdwg.mxu0
        %v3357 = vadd.f32 %v3160, %v3319
        %v3358 = vadd.f32 %v3161, %v3321
        %v3359 = vadd.f32 %v3162, %v3323
        %v3360 = vadd.f32 %v3163, %v3325
        %v3361 = vadd.f32 %v3164, %v3329
        %v3362 = vadd.f32 %v3165, %v3331
        %v3363 = vadd.f32 %v3166, %v3333
        %v3364 = vadd.f32 %v3167, %v3335
        %v3365 = vadd.f32 %v3168, %v3339
        %v3366 = vadd.f32 %v3169, %v3341
        %v3367 = vadd.f32 %v3170, %v3343
        %v3368 = vadd.f32 %v3171, %v3345
        %v3369 = vadd.f32 %v3172, %v3349
        %v3370 = vadd.f32 %v3173, %v3351
        %v3371 = vadd.f32 %v3174, %v3353
        %v3372 = vadd.f32 %v3175, %v3355
        %s3373 = sadd.s32 %s2303, 6
        %s3374 = smul.u32 %s3373, 8
        %s3375 = smul.addr %s3374, 4
        %s3376 = scalar_lea.vmem %s3, %s3375
        %v3377 = vld [vmem:[%s3376] sm:$0xf]
        %v3378 = vld [vmem:[%s3376 + $0x4] sm:$0xf]
        %v3379 = vld [vmem:[%s3376 + $0x8] sm:$0xf]
        %v3380 = vld [vmem:[%s3376 + $0xc] sm:$0xf]
        %v3381 = vld [vmem:[%s3376 + $0x10] sm:$0xf]
        %v3382 = vld [vmem:[%s3376 + $0x14] sm:$0xf]
        %v3383 = vld [vmem:[%s3376 + $0x18] sm:$0xf]
        %v3384 = vld [vmem:[%s3376 + $0x1c] sm:$0xf]
        %v3385 = vsel %vm1655, %v2315, 0
        %v3386 = vsel %vm1656, %v2316, 0
        %v3387 = vsel %vm1657, %v2343, 0
        %v3388 = vsel %vm1655, %v2317, 0
        %v3389 = vsel %vm1656, %v2318, 0
        %v3390 = vsel %vm1657, %v2344, 0
        %v3391 = vsel %vm1655, %v2319, 0
        %v3392 = vsel %vm1656, %v2320, 0
        %v3393 = vsel %vm1657, %v2345, 0
        %v3394 = vsel %vm1655, %v2321, 0
        %v3395 = vsel %vm1656, %v2322, 0
        %v3396 = vsel %vm1657, %v2346, 0
        %v3405 = vunpack.c.l.b16 %v3377
        %v3406 = vunpack.c.l.b16 %v3378
        %v3407 = vunpack.c.l.b16 %v3379
        %v3408 = vunpack.c.l.b16 %v3380
        %v3409 = vunpack.c.l.b16 %v3381
        %v3410 = vunpack.c.l.b16 %v3382
        %v3411 = vunpack.c.l.b16 %v3383
        %v3412 = vunpack.c.l.b16 %v3384
        %v3413 = vpack.c.b16 %v3406, %v3405
        %v3414 = vpack.c.b16 %v3408, %v3407
        %v3415 = vpack.c.b16 %v3410, %v3409
        %v3416 = vpack.c.b16 %v3412, %v3411
        %3429 = vrot.lane.b32.xlu0 %v3385, 96
        %v3430 = vpop.permute.xlu0 %3429
        %3431 = vrot.lane.b32.xlu0 %v3386, 96
        %v3432 = vpop.permute.xlu0 %3431
        %3433 = vrot.lane.b32.xlu0 %v3387, 96
        %v3434 = vpop.permute.xlu0 %3433
        %3435 = vrot.lane.b32.xlu0 %v3388, 96
        %v3436 = vpop.permute.xlu0 %3435
        %3437 = vrot.lane.b32.xlu0 %v3389, 96
        %v3438 = vpop.permute.xlu0 %3437
        %3439 = vrot.lane.b32.xlu0 %v3390, 96
        %v3440 = vpop.permute.xlu0 %3439
        %3441 = vrot.lane.b32.xlu0 %v3391, 96
        %v3442 = vpop.permute.xlu0 %3441
        %3443 = vrot.lane.b32.xlu0 %v3392, 96
        %v3444 = vpop.permute.xlu0 %3443
        %3445 = vrot.lane.b32.xlu0 %v3393, 96
        %v3446 = vpop.permute.xlu0 %3445
        %3447 = vrot.lane.b32.xlu0 %v3394, 96
        %v3448 = vpop.permute.xlu0 %3447
        %3449 = vrot.lane.b32.xlu0 %v3395, 96
        %v3450 = vpop.permute.xlu0 %3449
        %3451 = vrot.lane.b32.xlu0 %v3396, 96
        %v3452 = vpop.permute.xlu0 %3451
        %v3453 = vsel %vm1726, %v3430, %v3432
        %v3454 = vsel %vm1726, %v3432, %v3434
        %v3455 = vsel %vm1726, %v3436, %v3438
        %v3456 = vsel %vm1726, %v3438, %v3440
        %v3457 = vsel %vm1726, %v3442, %v3444
        %v3458 = vsel %vm1726, %v3444, %v3446
        %v3459 = vsel %vm1726, %v3448, %v3450
        %v3460 = vsel %vm1726, %v3450, %v3452
        %v3470 = vsel %vm641, %v3413, 0
        %v3473 = vsel %vm641, %v3414, 0
        %v3476 = vsel %vm641, %v3415, 0
        %v3479 = vsel %vm641, %v3416, 0
        %3481 = vmatprep.subr.bf16.mxu0 %v3454
        %3482 = vmatpush1.bf16.msra.mxu0 %v3453
        %3483 = vmatprep.subr.bf16.mxu0 %v3456
        %3484 = vmatpush1.bf16.msra.mxu0 %v3455
        %3485 = vmatprep.subr.bf16.mxu0 %v3458
        %3486 = vmatpush1.bf16.msra.mxu0 %v3457
        %3487 = vmatprep.subr.bf16.mxu0 %v3460
        %3488 = vmatpush1.bf16.msra.mxu0 %v3459
        %3489 = vmatprep.subr.bf16.mxu0 0
        %3490 = vmatpush1.bf16.msra.mxu0 0
        %3491 = vmatprep.subr.bf16.mxu0 0
        %3492 = vmatpush1.bf16.msra.mxu0 0
        %3493 = vmatprep.subr.bf16.mxu0 0
        %3494 = vmatpush1.bf16.msra.mxu0 0
        %3495 = vmatprep.subr.bf16.mxu0 0
        %3496 = vmatpush1.bf16.msra.mxu0 0
        %3497 = vmatprep.subr.bf16.mxu0 0
        %3498 = vmatpush1.bf16.msra.mxu0 0
        %3499 = vmatprep.subr.bf16.mxu0 0
        %3500 = vmatpush1.bf16.msra.mxu0 0
        %3501 = vmatprep.subr.bf16.mxu0 0
        %3502 = vmatpush1.bf16.msra.mxu0 0
        %3503 = vmatprep.subr.bf16.mxu0 0
        %3504 = vmatpush1.bf16.msra.mxu0 0
        %3505 = vmatprep.subr.bf16.mxu0 0
        %3506 = vmatpush1.bf16.msra.mxu0 0
        %3507 = vmatprep.subr.bf16.mxu0 0
        %3508 = vmatpush1.bf16.msra.mxu0 0
        %3509 = vmatprep.subr.bf16.mxu0 0
        %3510 = vmatpush1.bf16.msra.mxu0 0
        %3511 = vmatprep.subr.bf16.mxu0 0
        %3512 = vmatpush1.bf16.msra.mxu0 0
        %3513 = vmatprep.mubr.bf16.mxu0 0
        %3514 = vmatmul.mubr.bf16.gmra.mrb[0].mxu0 %v3470
        %v3515 = vpop.f32.mrb[0].mxu0
        %v3516 = vadd.f32 0.0, %v3515
        %v3517 = vpop.f32.mrb[0].mxu0
        %v3518 = vadd.f32 0.0, %v3517
        %v3519 = vpop.f32.mrb[0].mxu0
        %v3520 = vadd.f32 0.0, %v3519
        %v3521 = vpop.f32.mrb[0].mxu0
        %v3522 = vadd.f32 0.0, %v3521
        %3523 = vmatprep.mubr.bf16.mxu0 0
        %3524 = vmatmul.mubr.bf16.gmra.mrb[0].mxu0 %v3473
        %v3525 = vpop.f32.mrb[0].mxu0
        %v3526 = vadd.f32 0.0, %v3525
        %v3527 = vpop.f32.mrb[0].mxu0
        %v3528 = vadd.f32 0.0, %v3527
        %v3529 = vpop.f32.mrb[0].mxu0
        %v3530 = vadd.f32 0.0, %v3529
        %v3531 = vpop.f32.mrb[0].mxu0
        %v3532 = vadd.f32 0.0, %v3531
        %3533 = vmatprep.mubr.bf16.mxu0 0
        %3534 = vmatmul.mubr.bf16.gmra.mrb[0].mxu0 %v3476
        %v3535 = vpop.f32.mrb[0].mxu0
        %v3536 = vadd.f32 0.0, %v3535
        %v3537 = vpop.f32.mrb[0].mxu0
        %v3538 = vadd.f32 0.0, %v3537
        %v3539 = vpop.f32.mrb[0].mxu0
        %v3540 = vadd.f32 0.0, %v3539
        %v3541 = vpop.f32.mrb[0].mxu0
        %v3542 = vadd.f32 0.0, %v3541
        %3543 = vmatprep.mubr.bf16.mxu0 0
        %3544 = vmatmul.mubr.bf16.gmra.mrb[0].mxu0 %v3479
        %v3545 = vpop.f32.mrb[0].mxu0
        %v3546 = vadd.f32 0.0, %v3545
        %v3547 = vpop.f32.mrb[0].mxu0
        %v3548 = vadd.f32 0.0, %v3547
        %v3549 = vpop.f32.mrb[0].mxu0
        %v3550 = vadd.f32 0.0, %v3549
        %v3551 = vpop.f32.mrb[0].mxu0
        %v3552 = vadd.f32 0.0, %v3551
        %3553 = vdwg.mxu0
        %v3554 = vadd.f32 %v3357, %v3516
        %v3555 = vadd.f32 %v3358, %v3518
        %v3556 = vadd.f32 %v3359, %v3520
        %v3557 = vadd.f32 %v3360, %v3522
        %v3558 = vadd.f32 %v3361, %v3526
        %v3559 = vadd.f32 %v3362, %v3528
        %v3560 = vadd.f32 %v3363, %v3530
        %v3561 = vadd.f32 %v3364, %v3532
        %v3562 = vadd.f32 %v3365, %v3536
        %v3563 = vadd.f32 %v3366, %v3538
        %v3564 = vadd.f32 %v3367, %v3540
        %v3565 = vadd.f32 %v3368, %v3542
        %v3566 = vadd.f32 %v3369, %v3546
        %v3567 = vadd.f32 %v3370, %v3548
        %v3568 = vadd.f32 %v3371, %v3550
        %v3569 = vadd.f32 %v3372, %v3552
        %s3570 = sadd.s32 %s2303, 7
        %s3571 = smul.u32 %s3570, 8
        %s3572 = smul.addr %s3571, 4
        %s3573 = scalar_lea.vmem %s3, %s3572
        %v3574 = vld [vmem:[%s3573] sm:$0xf]
        %v3575 = vld [vmem:[%s3573 + $0x4] sm:$0xf]
        %v3576 = vld [vmem:[%s3573 + $0x8] sm:$0xf]
        %v3577 = vld [vmem:[%s3573 + $0xc] sm:$0xf]
        %v3578 = vld [vmem:[%s3573 + $0x10] sm:$0xf]
        %v3579 = vld [vmem:[%s3573 + $0x14] sm:$0xf]
        %v3580 = vld [vmem:[%s3573 + $0x18] sm:$0xf]
        %v3581 = vld [vmem:[%s3573 + $0x1c] sm:$0xf]
        %v3590 = vunpack.c.l.b16 %v3574
        %v3591 = vunpack.c.l.b16 %v3575
        %v3592 = vunpack.c.l.b16 %v3576
        %v3593 = vunpack.c.l.b16 %v3577
        %v3594 = vunpack.c.l.b16 %v3578
        %v3595 = vunpack.c.l.b16 %v3579
        %v3596 = vunpack.c.l.b16 %v3580
        %v3597 = vunpack.c.l.b16 %v3581
        %v3598 = vpack.c.b16 %v3591, %v3590
        %v3599 = vpack.c.b16 %v3593, %v3592
        %v3600 = vpack.c.b16 %v3595, %v3594
        %v3601 = vpack.c.b16 %v3597, %v3596
        %3602 = vrot.lane.b32.xlu0 %v2315, 95
        %v3603 = vpop.permute.xlu0 %3602
        %3604 = vrot.lane.b32.xlu0 %v2316, 95
        %v3605 = vpop.permute.xlu0 %3604
        %3606 = vrot.lane.b32.xlu0 %v2343, 95
        %v3607 = vpop.permute.xlu0 %3606
        %3608 = vrot.lane.b32.xlu0 %v2317, 95
        %v3609 = vpop.permute.xlu0 %3608
        %3610 = vrot.lane.b32.xlu0 %v2318, 95
        %v3611 = vpop.permute.xlu0 %3610
        %3612 = vrot.lane.b32.xlu0 %v2344, 95
        %v3613 = vpop.permute.xlu0 %3612
        %3614 = vrot.lane.b32.xlu0 %v2319, 95
        %v3615 = vpop.permute.xlu0 %3614
        %3616 = vrot.lane.b32.xlu0 %v2320, 95
        %v3617 = vpop.permute.xlu0 %3616
        %3618 = vrot.lane.b32.xlu0 %v2345, 95
        %v3619 = vpop.permute.xlu0 %3618
        %3620 = vrot.lane.b32.xlu0 %v2321, 95
        %v3621 = vpop.permute.xlu0 %3620
        %3622 = vrot.lane.b32.xlu0 %v2322, 95
        %v3623 = vpop.permute.xlu0 %3622
        %3624 = vrot.lane.b32.xlu0 %v2346, 95
        %v3625 = vpop.permute.xlu0 %3624
        %v3626 = vsel %vm1900, %v3603, %v3605
        %v3627 = vsel %vm1900, %v3605, %v3607
        %v3628 = vsel %vm1900, %v3609, %v3611
        %v3629 = vsel %vm1900, %v3611, %v3613
        %v3630 = vsel %vm1900, %v3615, %v3617
        %v3631 = vsel %vm1900, %v3617, %v3619
        %v3632 = vsel %vm1900, %v3621, %v3623
        %v3633 = vsel %vm1900, %v3623, %v3625
        %v3643 = vsel %vm641, %v3598, 0
        %v3646 = vsel %vm641, %v3599, 0
        %v3649 = vsel %vm641, %v3600, 0
        %v3652 = vsel %vm641, %v3601, 0
        %3654 = vmatprep.subr.bf16.mxu0 %v3627
        %3655 = vmatpush1.bf16.msra.mxu0 %v3626
        %3656 = vmatprep.subr.bf16.mxu0 %v3629
        %3657 = vmatpush1.bf16.msra.mxu0 %v3628
        %3658 = vmatprep.subr.bf16.mxu0 %v3631
        %3659 = vmatpush1.bf16.msra.mxu0 %v3630
        %3660 = vmatprep.subr.bf16.mxu0 %v3633
        %3661 = vmatpush1.bf16.msra.mxu0 %v3632
        %3662 = vmatprep.subr.bf16.mxu0 0
        %3663 = vmatpush1.bf16.msra.mxu0 0
        %3664 = vmatprep.subr.bf16.mxu0 0
        %3665 = vmatpush1.bf16.msra.mxu0 0
        %3666 = vmatprep.subr.bf16.mxu0 0
        %3667 = vmatpush1.bf16.msra.mxu0 0
        %3668 = vmatprep.subr.bf16.mxu0 0
        %3669 = vmatpush1.bf16.msra.mxu0 0
        %3670 = vmatprep.subr.bf16.mxu0 0
        %3671 = vmatpush1.bf16.msra.mxu0 0
        %3672 = vmatprep.subr.bf16.mxu0 0
        %3673 = vmatpush1.bf16.msra.mxu0 0
        %3674 = vmatprep.subr.bf16.mxu0 0
        %3675 = vmatpush1.bf16.msra.mxu0 0
        %3676 = vmatprep.subr.bf16.mxu0 0
        %3677 = vmatpush1.bf16.msra.mxu0 0
        %3678 = vmatprep.subr.bf16.mxu0 0
        %3679 = vmatpush1.bf16.msra.mxu0 0
        %3680 = vmatprep.subr.bf16.mxu0 0
        %3681 = vmatpush1.bf16.msra.mxu0 0
        %3682 = vmatprep.subr.bf16.mxu0 0
        %3683 = vmatpush1.bf16.msra.mxu0 0
        %3684 = vmatprep.subr.bf16.mxu0 0
        %3685 = vmatpush1.bf16.msra.mxu0 0
        %3686 = vmatprep.mubr.bf16.mxu0 0
        %3687 = vmatmul.mubr.bf16.gmra.mrb[0].mxu0 %v3643
        %v3688 = vpop.f32.mrb[0].mxu0
        %v3689 = vadd.f32 0.0, %v3688
        %v3690 = vpop.f32.mrb[0].mxu0
        %v3691 = vadd.f32 0.0, %v3690
        %v3692 = vpop.f32.mrb[0].mxu0
        %v3693 = vadd.f32 0.0, %v3692
        %v3694 = vpop.f32.mrb[0].mxu0
        %v3695 = vadd.f32 0.0, %v3694
        %3696 = vmatprep.mubr.bf16.mxu0 0
        %3697 = vmatmul.mubr.bf16.gmra.mrb[0].mxu0 %v3646
        %v3698 = vpop.f32.mrb[0].mxu0
        %v3699 = vadd.f32 0.0, %v3698
        %v3700 = vpop.f32.mrb[0].mxu0
        %v3701 = vadd.f32 0.0, %v3700
        %v3702 = vpop.f32.mrb[0].mxu0
        %v3703 = vadd.f32 0.0, %v3702
        %v3704 = vpop.f32.mrb[0].mxu0
        %v3705 = vadd.f32 0.0, %v3704
        %3706 = vmatprep.mubr.bf16.mxu0 0
        %3707 = vmatmul.mubr.bf16.gmra.mrb[0].mxu0 %v3649
        %v3708 = vpop.f32.mrb[0].mxu0
        %v3709 = vadd.f32 0.0, %v3708
        %v3710 = vpop.f32.mrb[0].mxu0
        %v3711 = vadd.f32 0.0, %v3710
        %v3712 = vpop.f32.mrb[0].mxu0
        %v3713 = vadd.f32 0.0, %v3712
        %v3714 = vpop.f32.mrb[0].mxu0
        %v3715 = vadd.f32 0.0, %v3714
        %3716 = vmatprep.mubr.bf16.mxu0 0
        %3717 = vmatmul.mubr.bf16.gmra.mrb[0].mxu0 %v3652
        %v3718 = vpop.f32.mrb[0].mxu0
        %v3719 = vadd.f32 0.0, %v3718
        %v3720 = vpop.f32.mrb[0].mxu0
        %v3721 = vadd.f32 0.0, %v3720
        %v3722 = vpop.f32.mrb[0].mxu0
        %v3723 = vadd.f32 0.0, %v3722
        %v3724 = vpop.f32.mrb[0].mxu0
        %v3725 = vadd.f32 0.0, %v3724
        %3726 = vdwg.mxu0
        %v3727 = vadd.f32 %v3554, %v3689
        %v3728 = vadd.f32 %v3555, %v3691
        %v3729 = vadd.f32 %v3556, %v3693
        %v3730 = vadd.f32 %v3557, %v3695
        %v3731 = vadd.f32 %v3558, %v3699
        %v3732 = vadd.f32 %v3559, %v3701
        %v3733 = vadd.f32 %v3560, %v3703
        %v3734 = vadd.f32 %v3561, %v3705
        %v3735 = vadd.f32 %v3562, %v3709
        %v3736 = vadd.f32 %v3563, %v3711
        %v3737 = vadd.f32 %v3564, %v3713
        %v3738 = vadd.f32 %v3565, %v3715
        %v3739 = vadd.f32 %v3566, %v3719
        %v3740 = vadd.f32 %v3567, %v3721
        %v3741 = vadd.f32 %v3568, %v3723
        %v3742 = vadd.f32 %v3569, %v3725
        %s3743 = sadd.s32 %s2303, 8
        %s3744 = smul.u32 %s3743, 8
        %s3745 = smul.addr %s3744, 4
        %s3746 = scalar_lea.vmem %s3, %s3745
        %v3747 = vld [vmem:[%s3746] sm:$0xf]
        %v3748 = vld [vmem:[%s3746 + $0x4] sm:$0xf]
        %v3749 = vld [vmem:[%s3746 + $0x8] sm:$0xf]
        %v3750 = vld [vmem:[%s3746 + $0xc] sm:$0xf]
        %v3751 = vld [vmem:[%s3746 + $0x10] sm:$0xf]
        %v3752 = vld [vmem:[%s3746 + $0x14] sm:$0xf]
        %v3753 = vld [vmem:[%s3746 + $0x18] sm:$0xf]
        %v3754 = vld [vmem:[%s3746 + $0x1c] sm:$0xf]
        %v3755 = vsel %vm2036, %v2315, 0
        %v3756 = vsel %vm2037, %v2316, 0
        %v3757 = vsel %vm2038, %v2343, 0
        %v3758 = vsel %vm2036, %v2317, 0
        %v3759 = vsel %vm2037, %v2318, 0
        %v3760 = vsel %vm2038, %v2344, 0
        %v3761 = vsel %vm2036, %v2319, 0
        %v3762 = vsel %vm2037, %v2320, 0
        %v3763 = vsel %vm2038, %v2345, 0
        %v3764 = vsel %vm2036, %v2321, 0
        %v3765 = vsel %vm2037, %v2322, 0
        %v3766 = vsel %vm2038, %v2346, 0
        %v3775 = vunpack.c.l.b16 %v3747
        %v3776 = vunpack.c.l.b16 %v3748
        %v3777 = vunpack.c.l.b16 %v3749
        %v3778 = vunpack.c.l.b16 %v3750
        %v3779 = vunpack.c.l.b16 %v3751
        %v3780 = vunpack.c.l.b16 %v3752
        %v3781 = vunpack.c.l.b16 %v3753
        %v3782 = vunpack.c.l.b16 %v3754
        %v3783 = vpack.c.b16 %v3776, %v3775
        %v3784 = vpack.c.b16 %v3778, %v3777
        %v3785 = vpack.c.b16 %v3780, %v3779
        %v3786 = vpack.c.b16 %v3782, %v3781
        %3799 = vrot.lane.b32.xlu0 %v3755, 94
        %v3800 = vpop.permute.xlu0 %3799
        %3801 = vrot.lane.b32.xlu0 %v3756, 94
        %v3802 = vpop.permute.xlu0 %3801
        %3803 = vrot.lane.b32.xlu0 %v3757, 94
        %v3804 = vpop.permute.xlu0 %3803
        %3805 = vrot.lane.b32.xlu0 %v3758, 94
        %v3806 = vpop.permute.xlu0 %3805
        %3807 = vrot.lane.b32.xlu0 %v3759, 94
        %v3808 = vpop.permute.xlu0 %3807
        %3809 = vrot.lane.b32.xlu0 %v3760, 94
        %v3810 = vpop.permute.xlu0 %3809
        %3811 = vrot.lane.b32.xlu0 %v3761, 94
        %v3812 = vpop.permute.xlu0 %3811
        %3813 = vrot.lane.b32.xlu0 %v3762, 94
        %v3814 = vpop.permute.xlu0 %3813
        %3815 = vrot.lane.b32.xlu0 %v3763, 94
        %v3816 = vpop.permute.xlu0 %3815
        %3817 = vrot.lane.b32.xlu0 %v3764, 94
        %v3818 = vpop.permute.xlu0 %3817
        %3819 = vrot.lane.b32.xlu0 %v3765, 94
        %v3820 = vpop.permute.xlu0 %3819
        %3821 = vrot.lane.b32.xlu0 %v3766, 94
        %v3822 = vpop.permute.xlu0 %3821
        %v3823 = vsel %vm2107, %v3800, %v3802
        %v3824 = vsel %vm2107, %v3802, %v3804
        %v3825 = vsel %vm2107, %v3806, %v3808
        %v3826 = vsel %vm2107, %v3808, %v3810
        %v3827 = vsel %vm2107, %v3812, %v3814
        %v3828 = vsel %vm2107, %v3814, %v3816
        %v3829 = vsel %vm2107, %v3818, %v3820
        %v3830 = vsel %vm2107, %v3820, %v3822
        %v3840 = vsel %vm641, %v3783, 0
        %v3843 = vsel %vm641, %v3784, 0
        %v3846 = vsel %vm641, %v3785, 0
        %v3849 = vsel %vm641, %v3786, 0
        %3851 = vmatprep.subr.bf16.mxu0 %v3824
        %3852 = vmatpush1.bf16.msra.mxu0 %v3823
        %3853 = vmatprep.subr.bf16.mxu0 %v3826
        %3854 = vmatpush1.bf16.msra.mxu0 %v3825
        %3855 = vmatprep.subr.bf16.mxu0 %v3828
        %3856 = vmatpush1.bf16.msra.mxu0 %v3827
        %3857 = vmatprep.subr.bf16.mxu0 %v3830
        %3858 = vmatpush1.bf16.msra.mxu0 %v3829
        %3859 = vmatprep.subr.bf16.mxu0 0
        %3860 = vmatpush1.bf16.msra.mxu0 0
        %3861 = vmatprep.subr.bf16.mxu0 0
        %3862 = vmatpush1.bf16.msra.mxu0 0
        %3863 = vmatprep.subr.bf16.mxu0 0
        %3864 = vmatpush1.bf16.msra.mxu0 0
        %3865 = vmatprep.subr.bf16.mxu0 0
        %3866 = vmatpush1.bf16.msra.mxu0 0
        %3867 = vmatprep.subr.bf16.mxu0 0
        %3868 = vmatpush1.bf16.msra.mxu0 0
        %3869 = vmatprep.subr.bf16.mxu0 0
        %3870 = vmatpush1.bf16.msra.mxu0 0
        %3871 = vmatprep.subr.bf16.mxu0 0
        %3872 = vmatpush1.bf16.msra.mxu0 0
        %3873 = vmatprep.subr.bf16.mxu0 0
        %3874 = vmatpush1.bf16.msra.mxu0 0
        %3875 = vmatprep.subr.bf16.mxu0 0
        %3876 = vmatpush1.bf16.msra.mxu0 0
        %3877 = vmatprep.subr.bf16.mxu0 0
        %3878 = vmatpush1.bf16.msra.mxu0 0
        %3879 = vmatprep.subr.bf16.mxu0 0
        %3880 = vmatpush1.bf16.msra.mxu0 0
        %3881 = vmatprep.subr.bf16.mxu0 0
        %3882 = vmatpush1.bf16.msra.mxu0 0
        %3883 = vmatprep.mubr.bf16.mxu0 0
        %3884 = vmatmul.mubr.bf16.gmra.mrb[0].mxu0 %v3840
        %v3885 = vpop.f32.mrb[0].mxu0
        %v3886 = vadd.f32 0.0, %v3885
        %v3887 = vpop.f32.mrb[0].mxu0
        %v3888 = vadd.f32 0.0, %v3887
        %v3889 = vpop.f32.mrb[0].mxu0
        %v3890 = vadd.f32 0.0, %v3889
        %v3891 = vpop.f32.mrb[0].mxu0
        %v3892 = vadd.f32 0.0, %v3891
        %3893 = vmatprep.mubr.bf16.mxu0 0
        %3894 = vmatmul.mubr.bf16.gmra.mrb[0].mxu0 %v3843
        %v3895 = vpop.f32.mrb[0].mxu0
        %v3896 = vadd.f32 0.0, %v3895
        %v3897 = vpop.f32.mrb[0].mxu0
        %v3898 = vadd.f32 0.0, %v3897
        %v3899 = vpop.f32.mrb[0].mxu0
        %v3900 = vadd.f32 0.0, %v3899
        %v3901 = vpop.f32.mrb[0].mxu0
        %v3902 = vadd.f32 0.0, %v3901
        %3903 = vmatprep.mubr.bf16.mxu0 0
        %3904 = vmatmul.mubr.bf16.gmra.mrb[0].mxu0 %v3846
        %v3905 = vpop.f32.mrb[0].mxu0
        %v3906 = vadd.f32 0.0, %v3905
        %v3907 = vpop.f32.mrb[0].mxu0
        %v3908 = vadd.f32 0.0, %v3907
        %v3909 = vpop.f32.mrb[0].mxu0
        %v3910 = vadd.f32 0.0, %v3909
        %v3911 = vpop.f32.mrb[0].mxu0
        %v3912 = vadd.f32 0.0, %v3911
        %3913 = vmatprep.mubr.bf16.mxu0 0
        %3914 = vmatmul.mubr.bf16.gmra.mrb[0].mxu0 %v3849
        %v3915 = vpop.f32.mrb[0].mxu0
        %v3916 = vadd.f32 0.0, %v3915
        %v3917 = vpop.f32.mrb[0].mxu0
        %v3918 = vadd.f32 0.0, %v3917
        %v3919 = vpop.f32.mrb[0].mxu0
        %v3920 = vadd.f32 0.0, %v3919
        %v3921 = vpop.f32.mrb[0].mxu0
        %v3922 = vadd.f32 0.0, %v3921
        %3923 = vdwg.mxu0
        %v3924 = vadd.f32 %v3727, %v3886
        %v3925 = vadd.f32 %v3728, %v3888
        %v3926 = vadd.f32 %v3729, %v3890
        %v3927 = vadd.f32 %v3730, %v3892
        %v3928 = vadd.f32 %v3731, %v3896
        %v3929 = vadd.f32 %v3732, %v3898
        %v3930 = vadd.f32 %v3733, %v3900
        %v3931 = vadd.f32 %v3734, %v3902
        %v3932 = vadd.f32 %v3735, %v3906
        %v3933 = vadd.f32 %v3736, %v3908
        %v3934 = vadd.f32 %v3737, %v3910
        %v3935 = vadd.f32 %v3738, %v3912
        %v3936 = vadd.f32 %v3739, %v3916
        %v3937 = vadd.f32 %v3740, %v3918
        %v3938 = vadd.f32 %v3741, %v3920
        %v3939 = vadd.f32 %v3742, %v3922
        %v3940 = vmax.f32 %v3924, 0.0
        %v3941 = vmax.f32 %v3925, 0.0
        %v3942 = vmax.f32 %v3926, 0.0
        %v3943 = vmax.f32 %v3927, 0.0
        %v3944 = vmax.f32 %v3928, 0.0
        %v3945 = vmax.f32 %v3929, 0.0
        %v3946 = vmax.f32 %v3930, 0.0
        %v3947 = vmax.f32 %v3931, 0.0
        %v3948 = vmax.f32 %v3932, 0.0
        %v3949 = vmax.f32 %v3933, 0.0
        %v3950 = vmax.f32 %v3934, 0.0
        %v3951 = vmax.f32 %v3935, 0.0
        %v3952 = vmax.f32 %v3936, 0.0
        %v3953 = vmax.f32 %v3937, 0.0
        %v3954 = vmax.f32 %v3938, 0.0
        %v3955 = vmax.f32 %v3939, 0.0
        %v3956 = vpack.c.bf16 %v3942, %v3940
        %v3957 = vpack.c.bf16 %v3943, %v3941
        %v3958 = vpack.c.bf16 %v3946, %v3944
        %v3959 = vpack.c.bf16 %v3947, %v3945
        %v3960 = vpack.c.bf16 %v3950, %v3948
        %v3961 = vpack.c.bf16 %v3951, %v3949
        %v3962 = vpack.c.bf16 %v3954, %v3952
        %v3963 = vpack.c.bf16 %v3955, %v3953
        %3972 = vrot.lane.b32.xlu0 %v3956, 17
        %v3973 = vpop.permute.xlu0 %3972
        %3974 = vrot.lane.b32.xlu0 %v3957, 17
        %v3975 = vpop.permute.xlu0 %3974
        %3976 = vrot.lane.b32.xlu0 %v3958, 17
        %v3977 = vpop.permute.xlu0 %3976
        %3978 = vrot.lane.b32.xlu0 %v3959, 17
        %v3979 = vpop.permute.xlu0 %3978
        %3980 = vrot.lane.b32.xlu0 %v3960, 17
        %v3981 = vpop.permute.xlu0 %3980
        %3982 = vrot.lane.b32.xlu0 %v3961, 17
        %v3983 = vpop.permute.xlu0 %3982
        %3984 = vrot.lane.b32.xlu0 %v3962, 17
        %v3985 = vpop.permute.xlu0 %3984
        %3986 = vrot.lane.b32.xlu0 %v3963, 17
        %v3987 = vpop.permute.xlu0 %3986
        %v3988 = vsel %vm476, %v3973, %v3975
        %v3989 = vsel %vm476, %v3977, %v3979
        %v3990 = vsel %vm476, %v3981, %v3983
        %v3991 = vsel %vm476, %v3985, %v3987
        %4004 = vst.msk [vmem:[#allocation2] sm:$0xff] %vm493, %v3973
        %4005 = vst [vmem:[#allocation2 + $0x8] sm:$0xff] %v3988
        %4006 = vst.msk [vmem:[#allocation2 + $0x10] sm:$0xff] %vm253, %v3975
        %4007 = vst.msk [vmem:[#allocation2 + $0x18] sm:$0xff] %vm493, %v3977
        %4008 = vst [vmem:[#allocation2 + $0x20] sm:$0xff] %v3989
        %4009 = vst.msk [vmem:[#allocation2 + $0x28] sm:$0xff] %vm253, %v3979
        %4010 = vst.msk [vmem:[#allocation2 + $0x30] sm:$0xff] %vm493, %v3981
        %4011 = vst [vmem:[#allocation2 + $0x38] sm:$0xff] %v3990
        %4012 = vst.msk [vmem:[#allocation2 + $0x40] sm:$0xff] %vm253, %v3983
        %4013 = vst.msk [vmem:[#allocation2 + $0x48] sm:$0xff] %vm493, %v3985
        %4014 = vst [vmem:[#allocation2 + $0x50] sm:$0xff] %v3991
        %4015 = vst.msk [vmem:[#allocation2 + $0x58] sm:$0xff] %vm253, %v3987
      $region45: #{cfsr_forward.1} parent=39 // loop_footer
        %s511 = sadd.s32 1, %s507
      $region46: #{cfsr_forward.1} parent=39 // loop_footer_branch
        %506 = sbr.rel target = $region42
      $region47: #{cfsr_forward.1} parent=39 // loop_exit
        _
      %v4016 = vld [vmem:[%s4] sm:$0x1]
      %v4017 = vld [vmem:[#allocation2] sm:$0xff]
      %v4018 = vld [vmem:[#allocation2 + $0x8] sm:$0xff]
      %v4019 = vld [vmem:[#allocation2 + $0x18] sm:$0xff]
      %v4020 = vld [vmem:[#allocation2 + $0x20] sm:$0xff]
      %v4021 = vld [vmem:[#allocation2 + $0x30] sm:$0xff]
      %v4022 = vld [vmem:[#allocation2 + $0x38] sm:$0xff]
      %v4023 = vld [vmem:[#allocation2 + $0x48] sm:$0xff]
      %v4024 = vld [vmem:[#allocation2 + $0x50] sm:$0xff]
      %vm4025 = vmpackc.low %vm238, %vm237
      %v4026 = vsel %vm4025, 65537, 0
      %v4027 = vlaneseq
      %v4028 = vshrl.u32 %v4027, 7
      %v4029 = vsub.s32 0, %v4028
      %v4030 = vrot.slane %v4026, %v4029
      %v4031 = vlaneseq
      %v4032 = vshrl.u32 %v4031, 7
      %v4033 = vsub.s32 4, %v4032
      %v4034 = vrot.slane %v4026, %v4033
      %vm4035 = vcmp.ne.s16.totalorder %v4030, 0
      %vm4036 = vcmp.ne.s16.totalorder %v4034, 0
      %v4037 = vsel %vm4035, %v4017, 0
      %v4038 = vsel %vm4036, %v4018, 0
      %v4039 = vsel %vm4035, %v4019, 0
      %v4040 = vsel %vm4036, %v4020, 0
      %v4041 = vsel %vm4035, %v4021, 0
      %v4042 = vsel %vm4036, %v4022, 0
      %v4043 = vsel %vm4035, %v4023, 0
      %v4044 = vsel %vm4036, %v4024, 0
      %v4045 = vld [vmem:[#allocation2 + $0x10] sm:$0xff]
      %v4046 = vld [vmem:[#allocation2 + $0x28] sm:$0xff]
      %v4047 = vld [vmem:[#allocation2 + $0x40] sm:$0xff]
      %v4048 = vld [vmem:[#allocation2 + $0x58] sm:$0xff]
      %v4050 = vunpack.c.l.b16 %v4016
      %v4051 = vpack.c.b16 %v4050, %v4050
      %v4053 = vshrl.u32 %v4051, 16
      %4067 = vrot.lane.b32.xlu0 %v4017, 127
      %v4068 = vpop.permute.xlu0 %4067
      %4069 = vrot.lane.b32.xlu0 %v4018, 127
      %v4070 = vpop.permute.xlu0 %4069
      %4071 = vrot.lane.b32.xlu0 %v4045, 127
      %v4072 = vpop.permute.xlu0 %4071
      %4073 = vrot.lane.b32.xlu0 %v4019, 127
      %v4074 = vpop.permute.xlu0 %4073
      %4075 = vrot.lane.b32.xlu0 %v4020, 127
      %v4076 = vpop.permute.xlu0 %4075
      %4077 = vrot.lane.b32.xlu0 %v4046, 127
      %v4078 = vpop.permute.xlu0 %4077
      %4079 = vrot.lane.b32.xlu0 %v4021, 127
      %v4080 = vpop.permute.xlu0 %4079
      %4081 = vrot.lane.b32.xlu0 %v4022, 127
      %v4082 = vpop.permute.xlu0 %4081
      %4083 = vrot.lane.b32.xlu0 %v4047, 127
      %v4084 = vpop.permute.xlu0 %4083
      %4085 = vrot.lane.b32.xlu0 %v4023, 127
      %v4086 = vpop.permute.xlu0 %4085
      %4087 = vrot.lane.b32.xlu0 %v4024, 127
      %v4088 = vpop.permute.xlu0 %4087
      %4089 = vrot.lane.b32.xlu0 %v4048, 127
      %v4090 = vpop.permute.xlu0 %4089
      %vm4091 = vcmask 1039360
      %v4092 = vsel %vm4091, %v4068, %v4070
      %v4093 = vsel %vm4091, %v4070, %v4072
      %v4094 = vsel %vm4091, %v4074, %v4076
      %v4095 = vsel %vm4091, %v4076, %v4078
      %v4096 = vsel %vm4091, %v4080, %v4082
      %v4097 = vsel %vm4091, %v4082, %v4084
      %v4098 = vsel %vm4091, %v4086, %v4088
      %v4099 = vsel %vm4091, %v4088, %v4090
      %vm4108 = vcmask 523264
      %v4110 = vsel %vm4108, %v4053, 0
      %4112 = vmatprep.subr.bf16.mxu0 %v4093
      %4113 = vmatpush1.bf16.msra.mxu0 %v4092
      %4114 = vmatprep.subr.bf16.mxu0 %v4095
      %4115 = vmatpush1.bf16.msra.mxu0 %v4094
      %4116 = vmatprep.subr.bf16.mxu0 %v4097
      %4117 = vmatpush1.bf16.msra.mxu0 %v4096
      %4118 = vmatprep.subr.bf16.mxu0 %v4099
      %4119 = vmatpush1.bf16.msra.mxu0 %v4098
      %4120 = vmatprep.subr.bf16.mxu0 0
      %4121 = vmatpush1.bf16.msra.mxu0 0
      %4122 = vmatprep.subr.bf16.mxu0 0
      %4123 = vmatpush1.bf16.msra.mxu0 0
      %4124 = vmatprep.subr.bf16.mxu0 0
      %4125 = vmatpush1.bf16.msra.mxu0 0
      %4126 = vmatprep.subr.bf16.mxu0 0
      %4127 = vmatpush1.bf16.msra.mxu0 0
      %4128 = vmatprep.subr.bf16.mxu0 0
      %4129 = vmatpush1.bf16.msra.mxu0 0
      %4130 = vmatprep.subr.bf16.mxu0 0
      %4131 = vmatpush1.bf16.msra.mxu0 0
      %4132 = vmatprep.subr.bf16.mxu0 0
      %4133 = vmatpush1.bf16.msra.mxu0 0
      %4134 = vmatprep.subr.bf16.mxu0 0
      %4135 = vmatpush1.bf16.msra.mxu0 0
      %4136 = vmatprep.subr.bf16.mxu0 0
      %4137 = vmatpush1.bf16.msra.mxu0 0
      %4138 = vmatprep.subr.bf16.mxu0 0
      %4139 = vmatpush1.bf16.msra.mxu0 0
      %4140 = vmatprep.subr.bf16.mxu0 0
      %4141 = vmatpush1.bf16.msra.mxu0 0
      %4142 = vmatprep.subr.bf16.mxu0 0
      %4143 = vmatpush1.bf16.msra.mxu0 0
      %4144 = vmatprep.mubr.bf16.mxu0 0
      %4145 = vmatmul.mubr.bf16.gmra.mrb[0].mxu0 %v4110
      %v4146 = vpop.f32.mrb[0].mxu0
      %v4147 = vadd.f32 0.0, %v4146
      %v4148 = vpop.f32.mrb[0].mxu0
      %v4149 = vadd.f32 0.0, %v4148
      %v4150 = vpop.f32.mrb[0].mxu0
      %v4151 = vpop.f32.mrb[0].mxu0
      %4152 = vdwg.mxu0
      %v4154 = vsel %vm4108, %v4016, 0
      %4156 = vmatprep.subr.bf16.mxu0 %v4038
      %4157 = vmatpush1.bf16.msra.mxu0 %v4037
      %4158 = vmatprep.subr.bf16.mxu0 %v4040
      %4159 = vmatpush1.bf16.msra.mxu0 %v4039
      %4160 = vmatprep.subr.bf16.mxu0 %v4042
      %4161 = vmatpush1.bf16.msra.mxu0 %v4041
      %4162 = vmatprep.subr.bf16.mxu0 %v4044
      %4163 = vmatpush1.bf16.msra.mxu0 %v4043
      %4164 = vmatprep.subr.bf16.mxu0 0
      %4165 = vmatpush1.bf16.msra.mxu0 0
      %4166 = vmatprep.subr.bf16.mxu0 0
      %4167 = vmatpush1.bf16.msra.mxu0 0
      %4168 = vmatprep.subr.bf16.mxu0 0
      %4169 = vmatpush1.bf16.msra.mxu0 0
      %4170 = vmatprep.subr.bf16.mxu0 0
      %4171 = vmatpush1.bf16.msra.mxu0 0
      %4172 = vmatprep.subr.bf16.mxu0 0
      %4173 = vmatpush1.bf16.msra.mxu0 0
      %4174 = vmatprep.subr.bf16.mxu0 0
      %4175 = vmatpush1.bf16.msra.mxu0 0
      %4176 = vmatprep.subr.bf16.mxu0 0
      %4177 = vmatpush1.bf16.msra.mxu0 0
      %4178 = vmatprep.subr.bf16.mxu0 0
      %4179 = vmatpush1.bf16.msra.mxu0 0
      %4180 = vmatprep.subr.bf16.mxu0 0
      %4181 = vmatpush1.bf16.msra.mxu0 0
      %4182 = vmatprep.subr.bf16.mxu0 0
      %4183 = vmatpush1.bf16.msra.mxu0 0
      %4184 = vmatprep.subr.bf16.mxu0 0
      %4185 = vmatpush1.bf16.msra.mxu0 0
      %4186 = vmatprep.subr.bf16.mxu0 0
      %4187 = vmatpush1.bf16.msra.mxu0 0
      %4188 = vmatprep.mubr.bf16.mxu0 0
      %4189 = vmatmul.mubr.bf16.gmra.mrb[0].mxu0 %v4154
      %v4190 = vpop.f32.mrb[0].mxu0
      %v4191 = vadd.f32 %v4147, %v4190
      %v4192 = vpop.f32.mrb[0].mxu0
      %v4193 = vadd.f32 %v4149, %v4192
      %v4194 = vpop.f32.mrb[0].mxu0
      %v4195 = vpop.f32.mrb[0].mxu0
      %4196 = vdwg.mxu0
      %v4197 = vld [vmem:[%s4] sm:$0x2]
      %vm4198 = vmpackc.low %vm252, %vm251
      %v4199 = vsel %vm4198, 65537, 0
      %v4200 = vlaneseq
      %v4201 = vshrl.u32 %v4200, 7
      %v4202 = vsub.s32 0, %v4201
      %v4203 = vrot.slane %v4199, %v4202
      %v4204 = vlaneseq
      %v4205 = vshrl.u32 %v4204, 7
      %v4206 = vsub.s32 4, %v4205
      %v4207 = vrot.slane %v4199, %v4206
      %4208 = vrot.lane.b32.xlu0 %v4203, 2
      %v4209 = vpop.permute.xlu0 %4208
      %4210 = vrot.lane.b32.xlu0 %v4207, 2
      %v4211 = vpop.permute.xlu0 %4210
      %vm4212 = vcmask 15360
      %v4213 = vsel %vm4212, %v4209, %v4211
      %vm4214 = vcmp.ne.s16.totalorder %v4209, 0
      %vm4215 = vcmp.ne.s16.totalorder %v4213, 0
      %vm4216 = vcmp.ne.s16.totalorder %v4211, 0
      %v4217 = vsel %vm4214, %v4017, 0
      %v4218 = vsel %vm4215, %v4018, 0
      %v4219 = vsel %vm4216, %v4045, 0
      %v4220 = vsel %vm4214, %v4019, 0
      %v4221 = vsel %vm4215, %v4020, 0
      %v4222 = vsel %vm4216, %v4046, 0
      %v4223 = vsel %vm4214, %v4021, 0
      %v4224 = vsel %vm4215, %v4022, 0
      %v4225 = vsel %vm4216, %v4047, 0
      %v4226 = vsel %vm4214, %v4023, 0
      %v4227 = vsel %vm4215, %v4024, 0
      %v4228 = vsel %vm4216, %v4048, 0
      %v4230 = vunpack.c.l.b16 %v4197
      %v4231 = vpack.c.b16 %v4230, %v4230
      %v4232 = vrot.slane %v4231, 1
      %4245 = vrot.lane.b32.xlu0 %v4217, 126
      %v4246 = vpop.permute.xlu0 %4245
      %4247 = vrot.lane.b32.xlu0 %v4218, 126
      %v4248 = vpop.permute.xlu0 %4247
      %4249 = vrot.lane.b32.xlu0 %v4219, 126
      %v4250 = vpop.permute.xlu0 %4249
      %4251 = vrot.lane.b32.xlu0 %v4220, 126
      %v4252 = vpop.permute.xlu0 %4251
      %4253 = vrot.lane.b32.xlu0 %v4221, 126
      %v4254 = vpop.permute.xlu0 %4253
      %4255 = vrot.lane.b32.xlu0 %v4222, 126
      %v4256 = vpop.permute.xlu0 %4255
      %4257 = vrot.lane.b32.xlu0 %v4223, 126
      %v4258 = vpop.permute.xlu0 %4257
      %4259 = vrot.lane.b32.xlu0 %v4224, 126
      %v4260 = vpop.permute.xlu0 %4259
      %4261 = vrot.lane.b32.xlu0 %v4225, 126
      %v4262 = vpop.permute.xlu0 %4261
      %4263 = vrot.lane.b32.xlu0 %v4226, 126
      %v4264 = vpop.permute.xlu0 %4263
      %4265 = vrot.lane.b32.xlu0 %v4227, 126
      %v4266 = vpop.permute.xlu0 %4265
      %4267 = vrot.lane.b32.xlu0 %v4228, 126
      %v4268 = vpop.permute.xlu0 %4267
      %vm4269 = vcmask 1031168
      %v4270 = vsel %vm4269, %v4246, %v4248
      %v4271 = vsel %vm4269, %v4248, %v4250
      %v4272 = vsel %vm4269, %v4252, %v4254
      %v4273 = vsel %vm4269, %v4254, %v4256
      %v4274 = vsel %vm4269, %v4258, %v4260
      %v4275 = vsel %vm4269, %v4260, %v4262
      %v4276 = vsel %vm4269, %v4264, %v4266
      %v4277 = vsel %vm4269, %v4266, %v4268
      %v4287 = vsel %vm4108, %v4232, 0
      %4289 = vmatprep.subr.bf16.mxu0 %v4271
      %4290 = vmatpush1.bf16.msra.mxu0 %v4270
      %4291 = vmatprep.subr.bf16.mxu0 %v4273
      %4292 = vmatpush1.bf16.msra.mxu0 %v4272
      %4293 = vmatprep.subr.bf16.mxu0 %v4275
      %4294 = vmatpush1.bf16.msra.mxu0 %v4274
      %4295 = vmatprep.subr.bf16.mxu0 %v4277
      %4296 = vmatpush1.bf16.msra.mxu0 %v4276
      %4297 = vmatprep.subr.bf16.mxu0 0
      %4298 = vmatpush1.bf16.msra.mxu0 0
      %4299 = vmatprep.subr.bf16.mxu0 0
      %4300 = vmatpush1.bf16.msra.mxu0 0
      %4301 = vmatprep.subr.bf16.mxu0 0
      %4302 = vmatpush1.bf16.msra.mxu0 0
      %4303 = vmatprep.subr.bf16.mxu0 0
      %4304 = vmatpush1.bf16.msra.mxu0 0
      %4305 = vmatprep.subr.bf16.mxu0 0
      %4306 = vmatpush1.bf16.msra.mxu0 0
      %4307 = vmatprep.subr.bf16.mxu0 0
      %4308 = vmatpush1.bf16.msra.mxu0 0
      %4309 = vmatprep.subr.bf16.mxu0 0
      %4310 = vmatpush1.bf16.msra.mxu0 0
      %4311 = vmatprep.subr.bf16.mxu0 0
      %4312 = vmatpush1.bf16.msra.mxu0 0
      %4313 = vmatprep.subr.bf16.mxu0 0
      %4314 = vmatpush1.bf16.msra.mxu0 0
      %4315 = vmatprep.subr.bf16.mxu0 0
      %4316 = vmatpush1.bf16.msra.mxu0 0
      %4317 = vmatprep.subr.bf16.mxu0 0
      %4318 = vmatpush1.bf16.msra.mxu0 0
      %4319 = vmatprep.subr.bf16.mxu0 0
      %4320 = vmatpush1.bf16.msra.mxu0 0
      %4321 = vmatprep.mubr.bf16.mxu0 0
      %4322 = vmatmul.mubr.bf16.gmra.mrb[0].mxu0 %v4287
      %v4323 = vpop.f32.mrb[0].mxu0
      %v4324 = vadd.f32 0.0, %v4323
      %v4325 = vpop.f32.mrb[0].mxu0
      %v4326 = vadd.f32 0.0, %v4325
      %v4327 = vpop.f32.mrb[0].mxu0
      %v4328 = vpop.f32.mrb[0].mxu0
      %4329 = vdwg.mxu0
      %v4330 = vadd.f32 %v4191, %v4324
      %v4331 = vadd.f32 %v4193, %v4326
      %4332 = vrot.lane.b32.xlu0 %v4030, 16
      %v4333 = vpop.permute.xlu0 %4332
      %4334 = vrot.lane.b32.xlu0 %v4034, 16
      %v4335 = vpop.permute.xlu0 %4334
      %vm4336 = vcmask 130048
      %v4337 = vsel %vm4336, %v4333, %v4335
      %vm4338 = vcmp.ne.s16.totalorder %v4333, 0
      %vm4339 = vcmp.ne.s16.totalorder %v4337, 0
      %vm4340 = vcmp.ne.s16.totalorder %v4335, 0
      %v4341 = vsel %vm4338, %v4017, 0
      %v4342 = vsel %vm4339, %v4018, 0
      %v4343 = vsel %vm4340, %v4045, 0
      %v4344 = vsel %vm4338, %v4019, 0
      %v4345 = vsel %vm4339, %v4020, 0
      %v4346 = vsel %vm4340, %v4046, 0
      %v4347 = vsel %vm4338, %v4021, 0
      %v4348 = vsel %vm4339, %v4022, 0
      %v4349 = vsel %vm4340, %v4047, 0
      %v4350 = vsel %vm4338, %v4023, 0
      %v4351 = vsel %vm4339, %v4024, 0
      %v4352 = vsel %vm4340, %v4048, 0
      %v4354 = vshrl.u32 %v4231, 16
      %v4356 = vrot.slane %v4354, 1
      %4369 = vrot.lane.b32.xlu0 %v4341, 112
      %v4370 = vpop.permute.xlu0 %4369
      %4371 = vrot.lane.b32.xlu0 %v4342, 112
      %v4372 = vpop.permute.xlu0 %4371
      %4373 = vrot.lane.b32.xlu0 %v4343, 112
      %v4374 = vpop.permute.xlu0 %4373
      %4375 = vrot.lane.b32.xlu0 %v4344, 112
      %v4376 = vpop.permute.xlu0 %4375
      %4377 = vrot.lane.b32.xlu0 %v4345, 112
      %v4378 = vpop.permute.xlu0 %4377
      %4379 = vrot.lane.b32.xlu0 %v4346, 112
      %v4380 = vpop.permute.xlu0 %4379
      %4381 = vrot.lane.b32.xlu0 %v4347, 112
      %v4382 = vpop.permute.xlu0 %4381
      %4383 = vrot.lane.b32.xlu0 %v4348, 112
      %v4384 = vpop.permute.xlu0 %4383
      %4385 = vrot.lane.b32.xlu0 %v4349, 112
      %v4386 = vpop.permute.xlu0 %4385
      %4387 = vrot.lane.b32.xlu0 %v4350, 112
      %v4388 = vpop.permute.xlu0 %4387
      %4389 = vrot.lane.b32.xlu0 %v4351, 112
      %v4390 = vpop.permute.xlu0 %4389
      %4391 = vrot.lane.b32.xlu0 %v4352, 112
      %v4392 = vpop.permute.xlu0 %4391
      %vm4393 = vcmask 916480
      %v4394 = vsel %vm4393, %v4370, %v4372
      %v4395 = vsel %vm4393, %v4372, %v4374
      %v4396 = vsel %vm4393, %v4376, %v4378
      %v4397 = vsel %vm4393, %v4378, %v4380
      %v4398 = vsel %vm4393, %v4382, %v4384
      %v4399 = vsel %vm4393, %v4384, %v4386
      %v4400 = vsel %vm4393, %v4388, %v4390
      %v4401 = vsel %vm4393, %v4390, %v4392
      %v4411 = vsel %vm4108, %v4356, 0
      %4413 = vmatprep.subr.bf16.mxu0 %v4395
      %4414 = vmatpush1.bf16.msra.mxu0 %v4394
      %4415 = vmatprep.subr.bf16.mxu0 %v4397
      %4416 = vmatpush1.bf16.msra.mxu0 %v4396
      %4417 = vmatprep.subr.bf16.mxu0 %v4399
      %4418 = vmatpush1.bf16.msra.mxu0 %v4398
      %4419 = vmatprep.subr.bf16.mxu0 %v4401
      %4420 = vmatpush1.bf16.msra.mxu0 %v4400
      %4421 = vmatprep.subr.bf16.mxu0 0
      %4422 = vmatpush1.bf16.msra.mxu0 0
      %4423 = vmatprep.subr.bf16.mxu0 0
      %4424 = vmatpush1.bf16.msra.mxu0 0
      %4425 = vmatprep.subr.bf16.mxu0 0
      %4426 = vmatpush1.bf16.msra.mxu0 0
      %4427 = vmatprep.subr.bf16.mxu0 0
      %4428 = vmatpush1.bf16.msra.mxu0 0
      %4429 = vmatprep.subr.bf16.mxu0 0
      %4430 = vmatpush1.bf16.msra.mxu0 0
      %4431 = vmatprep.subr.bf16.mxu0 0
      %4432 = vmatpush1.bf16.msra.mxu0 0
      %4433 = vmatprep.subr.bf16.mxu0 0
      %4434 = vmatpush1.bf16.msra.mxu0 0
      %4435 = vmatprep.subr.bf16.mxu0 0
      %4436 = vmatpush1.bf16.msra.mxu0 0
      %4437 = vmatprep.subr.bf16.mxu0 0
      %4438 = vmatpush1.bf16.msra.mxu0 0
      %4439 = vmatprep.subr.bf16.mxu0 0
      %4440 = vmatpush1.bf16.msra.mxu0 0
      %4441 = vmatprep.subr.bf16.mxu0 0
      %4442 = vmatpush1.bf16.msra.mxu0 0
      %4443 = vmatprep.subr.bf16.mxu0 0
      %4444 = vmatpush1.bf16.msra.mxu0 0
      %4445 = vmatprep.mubr.bf16.mxu0 0
      %4446 = vmatmul.mubr.bf16.gmra.mrb[0].mxu0 %v4411
      %v4447 = vpop.f32.mrb[0].mxu0
      %v4448 = vadd.f32 0.0, %v4447
      %v4449 = vpop.f32.mrb[0].mxu0
      %v4450 = vadd.f32 0.0, %v4449
      %v4451 = vpop.f32.mrb[0].mxu0
      %v4452 = vpop.f32.mrb[0].mxu0
      %4453 = vdwg.mxu0
      %v4454 = vadd.f32 %v4330, %v4448
      %v4455 = vadd.f32 %v4331, %v4450
      %v4456 = vld [vmem:[%s4] sm:$0x4]
      %v4458 = vunpack.c.l.b16 %v4456
      %v4459 = vpack.c.b16 %v4458, %v4458
      %v4460 = vrot.slane %v4459, 2
      %4461 = vrot.lane.b32.xlu0 %v4017, 111
      %v4462 = vpop.permute.xlu0 %4461
      %4463 = vrot.lane.b32.xlu0 %v4018, 111
      %v4464 = vpop.permute.xlu0 %4463
      %4465 = vrot.lane.b32.xlu0 %v4045, 111
      %v4466 = vpop.permute.xlu0 %4465
      %4467 = vrot.lane.b32.xlu0 %v4019, 111
      %v4468 = vpop.permute.xlu0 %4467
      %4469 = vrot.lane.b32.xlu0 %v4020, 111
      %v4470 = vpop.permute.xlu0 %4469
      %4471 = vrot.lane.b32.xlu0 %v4046, 111
      %v4472 = vpop.permute.xlu0 %4471
      %4473 = vrot.lane.b32.xlu0 %v4021, 111
      %v4474 = vpop.permute.xlu0 %4473
      %4475 = vrot.lane.b32.xlu0 %v4022, 111
      %v4476 = vpop.permute.xlu0 %4475
      %4477 = vrot.lane.b32.xlu0 %v4047, 111
      %v4478 = vpop.permute.xlu0 %4477
      %4479 = vrot.lane.b32.xlu0 %v4023, 111
      %v4480 = vpop.permute.xlu0 %4479
      %4481 = vrot.lane.b32.xlu0 %v4024, 111
      %v4482 = vpop.permute.xlu0 %4481
      %4483 = vrot.lane.b32.xlu0 %v4048, 111
      %v4484 = vpop.permute.xlu0 %4483
      %vm4485 = vcmask 908288
      %v4486 = vsel %vm4485, %v4462, %v4464
      %v4487 = vsel %vm4485, %v4464, %v4466
      %v4488 = vsel %vm4485, %v4468, %v4470
      %v4489 = vsel %vm4485, %v4470, %v4472
      %v4490 = vsel %vm4485, %v4474, %v4476
      %v4491 = vsel %vm4485, %v4476, %v4478
      %v4492 = vsel %vm4485, %v4480, %v4482
      %v4493 = vsel %vm4485, %v4482, %v4484
      %v4503 = vsel %vm4108, %v4460, 0
      %4505 = vmatprep.subr.bf16.mxu0 %v4487
      %4506 = vmatpush1.bf16.msra.mxu0 %v4486
      %4507 = vmatprep.subr.bf16.mxu0 %v4489
      %4508 = vmatpush1.bf16.msra.mxu0 %v4488
      %4509 = vmatprep.subr.bf16.mxu0 %v4491
      %4510 = vmatpush1.bf16.msra.mxu0 %v4490
      %4511 = vmatprep.subr.bf16.mxu0 %v4493
      %4512 = vmatpush1.bf16.msra.mxu0 %v4492
      %4513 = vmatprep.subr.bf16.mxu0 0
      %4514 = vmatpush1.bf16.msra.mxu0 0
      %4515 = vmatprep.subr.bf16.mxu0 0
      %4516 = vmatpush1.bf16.msra.mxu0 0
      %4517 = vmatprep.subr.bf16.mxu0 0
      %4518 = vmatpush1.bf16.msra.mxu0 0
      %4519 = vmatprep.subr.bf16.mxu0 0
      %4520 = vmatpush1.bf16.msra.mxu0 0
      %4521 = vmatprep.subr.bf16.mxu0 0
      %4522 = vmatpush1.bf16.msra.mxu0 0
      %4523 = vmatprep.subr.bf16.mxu0 0
      %4524 = vmatpush1.bf16.msra.mxu0 0
      %4525 = vmatprep.subr.bf16.mxu0 0
      %4526 = vmatpush1.bf16.msra.mxu0 0
      %4527 = vmatprep.subr.bf16.mxu0 0
      %4528 = vmatpush1.bf16.msra.mxu0 0
      %4529 = vmatprep.subr.bf16.mxu0 0
      %4530 = vmatpush1.bf16.msra.mxu0 0
      %4531 = vmatprep.subr.bf16.mxu0 0
      %4532 = vmatpush1.bf16.msra.mxu0 0
      %4533 = vmatprep.subr.bf16.mxu0 0
      %4534 = vmatpush1.bf16.msra.mxu0 0
      %4535 = vmatprep.subr.bf16.mxu0 0
      %4536 = vmatpush1.bf16.msra.mxu0 0
      %4537 = vmatprep.mubr.bf16.mxu0 0
      %4538 = vmatmul.mubr.bf16.gmra.mrb[0].mxu0 %v4503
      %v4539 = vpop.f32.mrb[0].mxu0
      %v4540 = vadd.f32 0.0, %v4539
      %v4541 = vpop.f32.mrb[0].mxu0
      %v4542 = vadd.f32 0.0, %v4541
      %v4543 = vpop.f32.mrb[0].mxu0
      %v4544 = vpop.f32.mrb[0].mxu0
      %4545 = vdwg.mxu0
      %v4546 = vadd.f32 %v4454, %v4540
      %v4547 = vadd.f32 %v4455, %v4542
      %4548 = vrot.lane.b32.xlu0 %v4203, 18
      %v4549 = vpop.permute.xlu0 %4548
      %4550 = vrot.lane.b32.xlu0 %v4207, 18
      %v4551 = vpop.permute.xlu0 %4550
      %vm4552 = vcmask 146432
      %v4553 = vsel %vm4552, %v4549, %v4551
      %vm4554 = vcmp.ne.s16.totalorder %v4549, 0
      %vm4555 = vcmp.ne.s16.totalorder %v4553, 0
      %vm4556 = vcmp.ne.s16.totalorder %v4551, 0
      %v4557 = vsel %vm4554, %v4017, 0
      %v4558 = vsel %vm4555, %v4018, 0
      %v4559 = vsel %vm4556, %v4045, 0
      %v4560 = vsel %vm4554, %v4019, 0
      %v4561 = vsel %vm4555, %v4020, 0
      %v4562 = vsel %vm4556, %v4046, 0
      %v4563 = vsel %vm4554, %v4021, 0
      %v4564 = vsel %vm4555, %v4022, 0
      %v4565 = vsel %vm4556, %v4047, 0
      %v4566 = vsel %vm4554, %v4023, 0
      %v4567 = vsel %vm4555, %v4024, 0
      %v4568 = vsel %vm4556, %v4048, 0
      %v4570 = vshrl.u32 %v4459, 16
      %v4572 = vrot.slane %v4570, 2
      %4585 = vrot.lane.b32.xlu0 %v4557, 110
      %v4586 = vpop.permute.xlu0 %4585
      %4587 = vrot.lane.b32.xlu0 %v4558, 110
      %v4588 = vpop.permute.xlu0 %4587
      %4589 = vrot.lane.b32.xlu0 %v4559, 110
      %v4590 = vpop.permute.xlu0 %4589
      %4591 = vrot.lane.b32.xlu0 %v4560, 110
      %v4592 = vpop.permute.xlu0 %4591
      %4593 = vrot.lane.b32.xlu0 %v4561, 110
      %v4594 = vpop.permute.xlu0 %4593
      %4595 = vrot.lane.b32.xlu0 %v4562, 110
      %v4596 = vpop.permute.xlu0 %4595
      %4597 = vrot.lane.b32.xlu0 %v4563, 110
      %v4598 = vpop.permute.xlu0 %4597
      %4599 = vrot.lane.b32.xlu0 %v4564, 110
      %v4600 = vpop.permute.xlu0 %4599
      %4601 = vrot.lane.b32.xlu0 %v4565, 110
      %v4602 = vpop.permute.xlu0 %4601
      %4603 = vrot.lane.b32.xlu0 %v4566, 110
      %v4604 = vpop.permute.xlu0 %4603
      %4605 = vrot.lane.b32.xlu0 %v4567, 110
      %v4606 = vpop.permute.xlu0 %4605
      %4607 = vrot.lane.b32.xlu0 %v4568, 110
      %v4608 = vpop.permute.xlu0 %4607
      %vm4609 = vcmask 900096
      %v4610 = vsel %vm4609, %v4586, %v4588
      %v4611 = vsel %vm4609, %v4588, %v4590
      %v4612 = vsel %vm4609, %v4592, %v4594
      %v4613 = vsel %vm4609, %v4594, %v4596
      %v4614 = vsel %vm4609, %v4598, %v4600
      %v4615 = vsel %vm4609, %v4600, %v4602
      %v4616 = vsel %vm4609, %v4604, %v4606
      %v4617 = vsel %vm4609, %v4606, %v4608
      %v4627 = vsel %vm4108, %v4572, 0
      %4629 = vmatprep.subr.bf16.mxu0 %v4611
      %4630 = vmatpush1.bf16.msra.mxu0 %v4610
      %4631 = vmatprep.subr.bf16.mxu0 %v4613
      %4632 = vmatpush1.bf16.msra.mxu0 %v4612
      %4633 = vmatprep.subr.bf16.mxu0 %v4615
      %4634 = vmatpush1.bf16.msra.mxu0 %v4614
      %4635 = vmatprep.subr.bf16.mxu0 %v4617
      %4636 = vmatpush1.bf16.msra.mxu0 %v4616
      %4637 = vmatprep.subr.bf16.mxu0 0
      %4638 = vmatpush1.bf16.msra.mxu0 0
      %4639 = vmatprep.subr.bf16.mxu0 0
      %4640 = vmatpush1.bf16.msra.mxu0 0
      %4641 = vmatprep.subr.bf16.mxu0 0
      %4642 = vmatpush1.bf16.msra.mxu0 0
      %4643 = vmatprep.subr.bf16.mxu0 0
      %4644 = vmatpush1.bf16.msra.mxu0 0
      %4645 = vmatprep.subr.bf16.mxu0 0
      %4646 = vmatpush1.bf16.msra.mxu0 0
      %4647 = vmatprep.subr.bf16.mxu0 0
      %4648 = vmatpush1.bf16.msra.mxu0 0
      %4649 = vmatprep.subr.bf16.mxu0 0
      %4650 = vmatpush1.bf16.msra.mxu0 0
      %4651 = vmatprep.subr.bf16.mxu0 0
      %4652 = vmatpush1.bf16.msra.mxu0 0
      %4653 = vmatprep.subr.bf16.mxu0 0
      %4654 = vmatpush1.bf16.msra.mxu0 0
      %4655 = vmatprep.subr.bf16.mxu0 0
      %4656 = vmatpush1.bf16.msra.mxu0 0
      %4657 = vmatprep.subr.bf16.mxu0 0
      %4658 = vmatpush1.bf16.msra.mxu0 0
      %4659 = vmatprep.subr.bf16.mxu0 0
      %4660 = vmatpush1.bf16.msra.mxu0 0
      %4661 = vmatprep.mubr.bf16.mxu0 0
      %4662 = vmatmul.mubr.bf16.gmra.mrb[0].mxu0 %v4627
      %v4663 = vpop.f32.mrb[0].mxu0
      %v4664 = vadd.f32 0.0, %v4663
      %v4665 = vpop.f32.mrb[0].mxu0
      %v4666 = vadd.f32 0.0, %v4665
      %v4667 = vpop.f32.mrb[0].mxu0
      %v4668 = vpop.f32.mrb[0].mxu0
      %4669 = vdwg.mxu0
      %v4670 = vadd.f32 %v4546, %v4664
      %v4671 = vadd.f32 %v4547, %v4666
      %v4672 = vld [vmem:[%s4] sm:$0x8]
      %4673 = vrot.lane.b32.xlu0 %v4030, 32
      %v4674 = vpop.permute.xlu0 %4673
      %4675 = vrot.lane.b32.xlu0 %v4034, 32
      %v4676 = vpop.permute.xlu0 %4675
      %vm4677 = vcmask 261120
      %v4678 = vsel %vm4677, %v4674, %v4676
      %vm4679 = vcmp.ne.s16.totalorder %v4674, 0
      %vm4680 = vcmp.ne.s16.totalorder %v4678, 0
      %vm4681 = vcmp.ne.s16.totalorder %v4676, 0
      %v4682 = vsel %vm4679, %v4017, 0
      %v4683 = vsel %vm4680, %v4018, 0
      %v4684 = vsel %vm4681, %v4045, 0
      %v4685 = vsel %vm4679, %v4019, 0
      %v4686 = vsel %vm4680, %v4020, 0
      %v4687 = vsel %vm4681, %v4046, 0
      %v4688 = vsel %vm4679, %v4021, 0
      %v4689 = vsel %vm4680, %v4022, 0
      %v4690 = vsel %vm4681, %v4047, 0
      %v4691 = vsel %vm4679, %v4023, 0
      %v4692 = vsel %vm4680, %v4024, 0
      %v4693 = vsel %vm4681, %v4048, 0
      %v4695 = vunpack.c.l.b16 %v4672
      %v4696 = vpack.c.b16 %v4695, %v4695
      %v4697 = vrot.slane %v4696, 3
      %4710 = vrot.lane.b32.xlu0 %v4682, 96
      %v4711 = vpop.permute.xlu0 %4710
      %4712 = vrot.lane.b32.xlu0 %v4683, 96
      %v4713 = vpop.permute.xlu0 %4712
      %4714 = vrot.lane.b32.xlu0 %v4684, 96
      %v4715 = vpop.permute.xlu0 %4714
      %4716 = vrot.lane.b32.xlu0 %v4685, 96
      %v4717 = vpop.permute.xlu0 %4716
      %4718 = vrot.lane.b32.xlu0 %v4686, 96
      %v4719 = vpop.permute.xlu0 %4718
      %4720 = vrot.lane.b32.xlu0 %v4687, 96
      %v4721 = vpop.permute.xlu0 %4720
      %4722 = vrot.lane.b32.xlu0 %v4688, 96
      %v4723 = vpop.permute.xlu0 %4722
      %4724 = vrot.lane.b32.xlu0 %v4689, 96
      %v4725 = vpop.permute.xlu0 %4724
      %4726 = vrot.lane.b32.xlu0 %v4690, 96
      %v4727 = vpop.permute.xlu0 %4726
      %4728 = vrot.lane.b32.xlu0 %v4691, 96
      %v4729 = vpop.permute.xlu0 %4728
      %4730 = vrot.lane.b32.xlu0 %v4692, 96
      %v4731 = vpop.permute.xlu0 %4730
      %4732 = vrot.lane.b32.xlu0 %v4693, 96
      %v4733 = vpop.permute.xlu0 %4732
      %vm4734 = vcmask 785408
      %v4735 = vsel %vm4734, %v4711, %v4713
      %v4736 = vsel %vm4734, %v4713, %v4715
      %v4737 = vsel %vm4734, %v4717, %v4719
      %v4738 = vsel %vm4734, %v4719, %v4721
      %v4739 = vsel %vm4734, %v4723, %v4725
      %v4740 = vsel %vm4734, %v4725, %v4727
      %v4741 = vsel %vm4734, %v4729, %v4731
      %v4742 = vsel %vm4734, %v4731, %v4733
      %v4752 = vsel %vm4108, %v4697, 0
      %4754 = vmatprep.subr.bf16.mxu0 %v4736
      %4755 = vmatpush1.bf16.msra.mxu0 %v4735
      %4756 = vmatprep.subr.bf16.mxu0 %v4738
      %4757 = vmatpush1.bf16.msra.mxu0 %v4737
      %4758 = vmatprep.subr.bf16.mxu0 %v4740
      %4759 = vmatpush1.bf16.msra.mxu0 %v4739
      %4760 = vmatprep.subr.bf16.mxu0 %v4742
      %4761 = vmatpush1.bf16.msra.mxu0 %v4741
      %4762 = vmatprep.subr.bf16.mxu0 0
      %4763 = vmatpush1.bf16.msra.mxu0 0
      %4764 = vmatprep.subr.bf16.mxu0 0
      %4765 = vmatpush1.bf16.msra.mxu0 0
      %4766 = vmatprep.subr.bf16.mxu0 0
      %4767 = vmatpush1.bf16.msra.mxu0 0
      %4768 = vmatprep.subr.bf16.mxu0 0
      %4769 = vmatpush1.bf16.msra.mxu0 0
      %4770 = vmatprep.subr.bf16.mxu0 0
      %4771 = vmatpush1.bf16.msra.mxu0 0
      %4772 = vmatprep.subr.bf16.mxu0 0
      %4773 = vmatpush1.bf16.msra.mxu0 0
      %4774 = vmatprep.subr.bf16.mxu0 0
      %4775 = vmatpush1.bf16.msra.mxu0 0
      %4776 = vmatprep.subr.bf16.mxu0 0
      %4777 = vmatpush1.bf16.msra.mxu0 0
      %4778 = vmatprep.subr.bf16.mxu0 0
      %4779 = vmatpush1.bf16.msra.mxu0 0
      %4780 = vmatprep.subr.bf16.mxu0 0
      %4781 = vmatpush1.bf16.msra.mxu0 0
      %4782 = vmatprep.subr.bf16.mxu0 0
      %4783 = vmatpush1.bf16.msra.mxu0 0
      %4784 = vmatprep.subr.bf16.mxu0 0
      %4785 = vmatpush1.bf16.msra.mxu0 0
      %4786 = vmatprep.mubr.bf16.mxu0 0
      %4787 = vmatmul.mubr.bf16.gmra.mrb[0].mxu0 %v4752
      %v4788 = vpop.f32.mrb[0].mxu0
      %v4789 = vadd.f32 0.0, %v4788
      %v4790 = vpop.f32.mrb[0].mxu0
      %v4791 = vadd.f32 0.0, %v4790
      %v4792 = vpop.f32.mrb[0].mxu0
      %v4793 = vpop.f32.mrb[0].mxu0
      %4794 = vdwg.mxu0
      %v4795 = vadd.f32 %v4670, %v4789
      %v4796 = vadd.f32 %v4671, %v4791
      %v4798 = vshrl.u32 %v4696, 16
      %v4800 = vrot.slane %v4798, 3
      %4801 = vrot.lane.b32.xlu0 %v4017, 95
      %v4802 = vpop.permute.xlu0 %4801
      %4803 = vrot.lane.b32.xlu0 %v4018, 95
      %v4804 = vpop.permute.xlu0 %4803
      %4805 = vrot.lane.b32.xlu0 %v4045, 95
      %v4806 = vpop.permute.xlu0 %4805
      %4807 = vrot.lane.b32.xlu0 %v4019, 95
      %v4808 = vpop.permute.xlu0 %4807
      %4809 = vrot.lane.b32.xlu0 %v4020, 95
      %v4810 = vpop.permute.xlu0 %4809
      %4811 = vrot.lane.b32.xlu0 %v4046, 95
      %v4812 = vpop.permute.xlu0 %4811
      %4813 = vrot.lane.b32.xlu0 %v4021, 95
      %v4814 = vpop.permute.xlu0 %4813
      %4815 = vrot.lane.b32.xlu0 %v4022, 95
      %v4816 = vpop.permute.xlu0 %4815
      %4817 = vrot.lane.b32.xlu0 %v4047, 95
      %v4818 = vpop.permute.xlu0 %4817
      %4819 = vrot.lane.b32.xlu0 %v4023, 95
      %v4820 = vpop.permute.xlu0 %4819
      %4821 = vrot.lane.b32.xlu0 %v4024, 95
      %v4822 = vpop.permute.xlu0 %4821
      %4823 = vrot.lane.b32.xlu0 %v4048, 95
      %v4824 = vpop.permute.xlu0 %4823
      %vm4825 = vcmask 777216
      %v4826 = vsel %vm4825, %v4802, %v4804
      %v4827 = vsel %vm4825, %v4804, %v4806
      %v4828 = vsel %vm4825, %v4808, %v4810
      %v4829 = vsel %vm4825, %v4810, %v4812
      %v4830 = vsel %vm4825, %v4814, %v4816
      %v4831 = vsel %vm4825, %v4816, %v4818
      %v4832 = vsel %vm4825, %v4820, %v4822
      %v4833 = vsel %vm4825, %v4822, %v4824
      %v4843 = vsel %vm4108, %v4800, 0
      %4845 = vmatprep.subr.bf16.mxu0 %v4827
      %4846 = vmatpush1.bf16.msra.mxu0 %v4826
      %4847 = vmatprep.subr.bf16.mxu0 %v4829
      %4848 = vmatpush1.bf16.msra.mxu0 %v4828
      %4849 = vmatprep.subr.bf16.mxu0 %v4831
      %4850 = vmatpush1.bf16.msra.mxu0 %v4830
      %4851 = vmatprep.subr.bf16.mxu0 %v4833
      %4852 = vmatpush1.bf16.msra.mxu0 %v4832
      %4853 = vmatprep.subr.bf16.mxu0 0
      %4854 = vmatpush1.bf16.msra.mxu0 0
      %4855 = vmatprep.subr.bf16.mxu0 0
      %4856 = vmatpush1.bf16.msra.mxu0 0
      %4857 = vmatprep.subr.bf16.mxu0 0
      %4858 = vmatpush1.bf16.msra.mxu0 0
      %4859 = vmatprep.subr.bf16.mxu0 0
      %4860 = vmatpush1.bf16.msra.mxu0 0
      %4861 = vmatprep.subr.bf16.mxu0 0
      %4862 = vmatpush1.bf16.msra.mxu0 0
      %4863 = vmatprep.subr.bf16.mxu0 0
      %4864 = vmatpush1.bf16.msra.mxu0 0
      %4865 = vmatprep.subr.bf16.mxu0 0
      %4866 = vmatpush1.bf16.msra.mxu0 0
      %4867 = vmatprep.subr.bf16.mxu0 0
      %4868 = vmatpush1.bf16.msra.mxu0 0
      %4869 = vmatprep.subr.bf16.mxu0 0
      %4870 = vmatpush1.bf16.msra.mxu0 0
      %4871 = vmatprep.subr.bf16.mxu0 0
      %4872 = vmatpush1.bf16.msra.mxu0 0
      %4873 = vmatprep.subr.bf16.mxu0 0
      %4874 = vmatpush1.bf16.msra.mxu0 0
      %4875 = vmatprep.subr.bf16.mxu0 0
      %4876 = vmatpush1.bf16.msra.mxu0 0
      %4877 = vmatprep.mubr.bf16.mxu0 0
      %4878 = vmatmul.mubr.bf16.gmra.mrb[0].mxu0 %v4843
      %v4879 = vpop.f32.mrb[0].mxu0
      %v4880 = vadd.f32 0.0, %v4879
      %v4881 = vpop.f32.mrb[0].mxu0
      %v4882 = vadd.f32 0.0, %v4881
      %v4883 = vpop.f32.mrb[0].mxu0
      %v4884 = vpop.f32.mrb[0].mxu0
      %4885 = vdwg.mxu0
      %v4886 = vadd.f32 %v4795, %v4880
      %v4887 = vadd.f32 %v4796, %v4882
      %v4888 = vld [vmem:[%s4 + $0x4] sm:$0x1]
      %4889 = vrot.lane.b32.xlu0 %v4203, 34
      %v4890 = vpop.permute.xlu0 %4889
      %4891 = vrot.lane.b32.xlu0 %v4207, 34
      %v4892 = vpop.permute.xlu0 %4891
      %vm4893 = vcmask 277504
      %v4894 = vsel %vm4893, %v4890, %v4892
      %vm4895 = vcmp.ne.s16.totalorder %v4890, 0
      %vm4896 = vcmp.ne.s16.totalorder %v4894, 0
      %vm4897 = vcmp.ne.s16.totalorder %v4892, 0
      %v4898 = vsel %vm4895, %v4017, 0
      %v4899 = vsel %vm4896, %v4018, 0
      %v4900 = vsel %vm4897, %v4045, 0
      %v4901 = vsel %vm4895, %v4019, 0
      %v4902 = vsel %vm4896, %v4020, 0
      %v4903 = vsel %vm4897, %v4046, 0
      %v4904 = vsel %vm4895, %v4021, 0
      %v4905 = vsel %vm4896, %v4022, 0
      %v4906 = vsel %vm4897, %v4047, 0
      %v4907 = vsel %vm4895, %v4023, 0
      %v4908 = vsel %vm4896, %v4024, 0
      %v4909 = vsel %vm4897, %v4048, 0
      %4922 = vrot.lane.b32.xlu0 %v4898, 94
      %v4923 = vpop.permute.xlu0 %4922
      %4924 = vrot.lane.b32.xlu0 %v4899, 94
      %v4925 = vpop.permute.xlu0 %4924
      %4926 = vrot.lane.b32.xlu0 %v4900, 94
      %v4927 = vpop.permute.xlu0 %4926
      %4928 = vrot.lane.b32.xlu0 %v4901, 94
      %v4929 = vpop.permute.xlu0 %4928
      %4930 = vrot.lane.b32.xlu0 %v4902, 94
      %v4931 = vpop.permute.xlu0 %4930
      %4932 = vrot.lane.b32.xlu0 %v4903, 94
      %v4933 = vpop.permute.xlu0 %4932
      %4934 = vrot.lane.b32.xlu0 %v4904, 94
      %v4935 = vpop.permute.xlu0 %4934
      %4936 = vrot.lane.b32.xlu0 %v4905, 94
      %v4937 = vpop.permute.xlu0 %4936
      %4938 = vrot.lane.b32.xlu0 %v4906, 94
      %v4939 = vpop.permute.xlu0 %4938
      %4940 = vrot.lane.b32.xlu0 %v4907, 94
      %v4941 = vpop.permute.xlu0 %4940
      %4942 = vrot.lane.b32.xlu0 %v4908, 94
      %v4943 = vpop.permute.xlu0 %4942
      %4944 = vrot.lane.b32.xlu0 %v4909, 94
      %v4945 = vpop.permute.xlu0 %4944
      %vm4946 = vcmask 769024
      %v4947 = vsel %vm4946, %v4923, %v4925
      %v4948 = vsel %vm4946, %v4925, %v4927
      %v4949 = vsel %vm4946, %v4929, %v4931
      %v4950 = vsel %vm4946, %v4931, %v4933
      %v4951 = vsel %vm4946, %v4935, %v4937
      %v4952 = vsel %vm4946, %v4937, %v4939
      %v4953 = vsel %vm4946, %v4941, %v4943
      %v4954 = vsel %vm4946, %v4943, %v4945
      %v4964 = vsel %vm4108, %v4888, 0
      %4966 = vmatprep.subr.bf16.mxu0 %v4948
      %4967 = vmatpush1.bf16.msra.mxu0 %v4947
      %4968 = vmatprep.subr.bf16.mxu0 %v4950
      %4969 = vmatpush1.bf16.msra.mxu0 %v4949
      %4970 = vmatprep.subr.bf16.mxu0 %v4952
      %4971 = vmatpush1.bf16.msra.mxu0 %v4951
      %4972 = vmatprep.subr.bf16.mxu0 %v4954
      %4973 = vmatpush1.bf16.msra.mxu0 %v4953
      %4974 = vmatprep.subr.bf16.mxu0 0
      %4975 = vmatpush1.bf16.msra.mxu0 0
      %4976 = vmatprep.subr.bf16.mxu0 0
      %4977 = vmatpush1.bf16.msra.mxu0 0
      %4978 = vmatprep.subr.bf16.mxu0 0
      %4979 = vmatpush1.bf16.msra.mxu0 0
      %4980 = vmatprep.subr.bf16.mxu0 0
      %4981 = vmatpush1.bf16.msra.mxu0 0
      %4982 = vmatprep.subr.bf16.mxu0 0
      %4983 = vmatpush1.bf16.msra.mxu0 0
      %4984 = vmatprep.subr.bf16.mxu0 0
      %4985 = vmatpush1.bf16.msra.mxu0 0
      %4986 = vmatprep.subr.bf16.mxu0 0
      %4987 = vmatpush1.bf16.msra.mxu0 0
      %4988 = vmatprep.subr.bf16.mxu0 0
      %4989 = vmatpush1.bf16.msra.mxu0 0
      %4990 = vmatprep.subr.bf16.mxu0 0
      %4991 = vmatpush1.bf16.msra.mxu0 0
      %4992 = vmatprep.subr.bf16.mxu0 0
      %4993 = vmatpush1.bf16.msra.mxu0 0
      %4994 = vmatprep.subr.bf16.mxu0 0
      %4995 = vmatpush1.bf16.msra.mxu0 0
      %4996 = vmatprep.subr.bf16.mxu0 0
      %4997 = vmatpush1.bf16.msra.mxu0 0
      %4998 = vmatprep.mubr.bf16.mxu0 0
      %4999 = vmatmul.mubr.bf16.gmra.mrb[0].mxu0 %v4964
      %v5000 = vpop.f32.mrb[0].mxu0
      %v5001 = vadd.f32 0.0, %v5000
      %v5002 = vpop.f32.mrb[0].mxu0
      %v5003 = vadd.f32 0.0, %v5002
      %v5004 = vpop.f32.mrb[0].mxu0
      %v5005 = vpop.f32.mrb[0].mxu0
      %5006 = vdwg.mxu0
      %v5007 = vadd.f32 %v4886, %v5001
      %v5008 = vadd.f32 %v4887, %v5003
      %s5009 = scalar_lea.vmem %s218, 4
      %v5010 = vld [vmem:[%s5009] ss:$8 sm:$0x3]
      %v5012 = vlaneseq
      %v5013 = vshrl.u32 %v5012, 7
      %v5014 = vsub.s32 0, %v5013
      %v5015 = vrot.slane %v5010, %v5014
      %v5016 = vlaneseq
      %v5017 = vshrl.u32 %v5016, 7
      %v5018 = vsub.s32 1, %v5017
      %v5019 = vrot.slane %v5010, %v5018
      %v5022 = vadd.f32 %v5007, %v5015
      %v5023 = vadd.f32 %v5008, %v5019
      %v5026 = vcombine.low %v5022, %v5023
      %v5028 = vunpack.c.l.s4 1966171168
      %v5029 = vunpack.c.0.s8 %v5028
      %v5030 = vlaneseq
      %v5031 = vshrl.u32 %v5030, 7
      %v5032 = vsub.s32 %v5029, %v5031
      %v5033 = vrot.slane %v5026, %v5032
      %v5035 = vunpack.c.l.s4 1966171168
      %v5036 = vunpack.c.0.s8 %v5035
      %v5037 = vlaneseq
      %v5038 = vshrl.u32 %v5037, 7
      %v5039 = vsub.s32 %v5036, %v5038
      %v5040 = vrot.slane %v5033, %v5039
      %v5042 = vlaneseq
      %vm5043 = vcmp.ge.s32.totalorder %v5042, 0
      %vm5044 = vcmp.lt.s32.totalorder %v5042, 256
      %vm5045 = vmand %vm5043, %vm5044
      %5046 = vst.msk [vmem:[%s222] sm:$0x3] %vm5045, %v5040
      %p5047 = scmp.lt.s32.totalorder %s16, 1
      %s5048 = scalar_select %p5047, %s16, 1
      %s5049 = smul.addr %s5048, 2
      %s5050 = scalar_lea.vmem %s5, %s5049
      // Predicated region
      $region48: #{cfsr_forward.1} parent=39 // pred_check
        %p5051 = pneg %p144
      $region49: #{cfsr_forward.1} parent=39 // pred_check_branch
        %5053 = sbr.rel (%p5051) target = $region51
      $region50: #{cfsr_forward.1} parent=39 // pred_region
        _
      $region51: #{cfsr_forward.1} parent=39 // pred_fallthru
        _
    $region40: #{cfsr_forward.1} parent=5 // pred_fallthru
      _
    %p5054 = scmp.le.s32.totalorder 2, %s11
    // Predicated region
    $region52: #{cfsr_forward.1} parent=5 // pred_check
      %p5055 = pneg %p5054
    $region53: #{cfsr_forward.1} parent=5 // pred_check_branch
      %5057 = sbr.rel (%p5055) target = $region55
    $region54: #{cfsr_forward.1} parent=5 // pred_region
      %s5058 = ssub.s32 %s11, 2
      // Predicated region
      $region56: #{cfsr_forward.1} parent=54 // pred_check
        %p5059 = pneg %p150
      $region57: #{cfsr_forward.1} parent=54 // pred_check_branch
        %5061 = sbr.rel (%p5059) target = $region59
      $region58: #{cfsr_forward.1} parent=54 // pred_region
        %p5062 = scmp.lt.s32.totalorder %s17, 1
        %s5063 = scalar_select %p5062, %s17, 1
        %s5064 = smul.addr %s5063, 2
        %s5065 = scalar_lea.vmem %s5, %s5064
      $region59: #{cfsr_forward.1} parent=54 // pred_fallthru
        _
    $region55: #{cfsr_forward.1} parent=5 // pred_fallthru
      _
  $region6: #{cfsr_forward.1} parent=0 // loop_footer
    %s15 = sadd.s32 1, %s11
  $region7: #{cfsr_forward.1} parent=0 // loop_footer_branch
    %10 = sbr.rel target = $region3
  $region8: #{cfsr_forward.1} parent=0 // loop_exit
    _

</llo_original>
